<compile_context>
chip_gen: v7x
topology: tpu7x:2x2x1
jax: 0.10.0
libtpu: 0.0.40
codegen_flags: <defaults>
</compile_context>

<pallas_src>
import numpy as np

import jax
import jax.numpy as jnp
from jax.experimental import pallas as pl
from jax.experimental.pallas import tpu as pltpu


MAX_ALPHA = (0.0, 0.0)  # from INFO_ARGS

_BT_MAX = 32  # samples per grid step -> conv matmul M dim = 32*128 = 4096 rows


# ----------------------------- fused Pallas kernel --------------------------


def _bentes_fused_kernel(p_ref, w1b_ref, b1t_ref, w2_ref, b2_ref, mask_ref,
                         wlr_ref, blp_ref, out_ref):
    bt = p_ref.shape[0]
    m = bt * 128
    p2d = p_ref[...].reshape(m, 128)                       # bf16, (m, 128)

    # conv1 (+bias, ReLU) at all 16 (pool1-parity x conv2-tap) shifted taps,
    # fused with maxpool1: one (m,128)@(128,128) bf16 MXU matmul per (a,b)
    # pool1 parity, running max.  Avoids materializing the (m,512) activation.
    # TODO(synk): original InformationDropoutLayer activation not given; ReLU used.
    w1b = w1b_ref[...]
    t = None
    for j in range(4):
        zj = jnp.dot(p2d, w1b[:, 128 * j:128 * (j + 1)],
                     preferred_element_type=jnp.float32)   # (m, 128) f32
        zj = jnp.maximum(zj + b1t_ref[...], 0.0)
        t = zj if t is None else jnp.maximum(t, zj)

    # ZeroPad2d((0,1,0,1)) before conv2 + zeroing of the 7 padded rows / group.
    t = (t.reshape(bt, 128, 128) * mask_ref[...]).reshape(m, 128)

    # conv2 (+bias, ReLU): K = 2*2*32 = 128 lanes, bf16 MXU matmul.
    y = jnp.dot(t.astype(jnp.bfloat16), w2_ref[...],
                preferred_element_type=jnp.float32)        # (m, 64)
    y = jnp.maximum(y + b2_ref[...], 0.0)

    # maxpool2 over the four (a2,b2) 32-row groups (8-aligned, relayout-free).
    y4 = y.reshape(bt, 4, 32, 64)
    pooled = jnp.maximum(jnp.maximum(y4[:, 0], y4[:, 1]),
                         jnp.maximum(y4[:, 2], y4[:, 3]))  # (bt, 32, 64) f32

    # Linear(1600 -> 2) in f32 on the VPU (tiny; keeps the 1600-term reduction
    # accurate).  Weight pre-permuted to (out, q, c2) torch NCHW-flatten order
    # with zero rows at the 7 padded q positions per group.
    w_lin = wlr_ref[...]                                   # (2, 32, 64)
    l0 = jnp.sum(jnp.sum(pooled * w_lin[0], axis=2), axis=1, keepdims=True)
    l1 = jnp.sum(jnp.sum(pooled * w_lin[1], axis=2), axis=1, keepdims=True)

    # Lane-dense (bt, 128) output slab: logits in columns 0/1, zeros elsewhere.
    col = jax.lax.broadcasted_iota(jnp.int32, (bt, 128), 1)
    out_ref[...] = jnp.where(col == 0, l0,
                             jnp.where(col == 1, l1, 0.0)) + blp_ref[...]


# --------------------------- host-side layout prep ---------------------------


def _build_pad_mask():
    """(128,128) 0/1 mask: zeros the second ZeroPad2d positions and the 7
    zero-padded rows of each (a2,b2) pool2 group."""
    r = np.arange(128)
    a2 = r // 64
    b2 = (r // 32) % 2
    q = r % 32
    u = q // 5
    v = q % 5
    col = np.arange(128)
    dh = col // 64
    dw = (col // 32) % 2
    bad = ((((a2 == 1) & (u == 4))[:, None]) & ((dh == 1)[None, :])) | \
          ((((b2 == 1) & (v == 4))[:, None]) & ((dw == 1)[None, :]))
    mask = (~bad).astype(np.float32)
    mask[q >= 25, :] = 0.0
    return mask                                            # (128, 128)


_PAD_MASK_NP = _build_pad_mask()


def _grid_plan(batch):
    """Samples per grid step (multiple of 8) and number of grid steps (>=2)."""
    steps = max(2, -(-batch // _BT_MAX))   # >= 2 steps keeps both v7x TCs busy
    bt = -(-batch // steps)
    bt = max(8, -(-bt // 8) * 8)           # sublane-aligned output tile
    steps = max(2, -(-batch // bt))
    return bt, steps


def _make_patch_matrix(x_nchw, b_pad):
    """(B, 2, 75, 75) NCHW -> (b_pad, 128, 128) lane-dense bf16 patch matrix.

    rows r   = (pool2 parity a2,b2 | q = u*5+v, padded 25->32)
    cols col = (pool1 parity a,b | conv2 tap dh,dw | conv1 tap dh1,dw1 | cin)
    """
    B = x_nchw.shape[0]
    x = jnp.transpose(x_nchw, (0, 2, 3, 1)).astype(jnp.float32)   # (B,75,75,2)
    # ZeroPad2d((0,1,0,1)) plus a virtual zero halo out to 80x80 (= 5 * 16).
    x = jnp.pad(x, ((0, 0), (0, 5), (0, 5), (0, 0)))              # (B,80,80,2)
    #                 B  u a2 dh  a dh1  v b2 dw  b dw1 cin
    x = x.reshape(B, 5, 2, 2, 2, 2, 5, 2, 2, 2, 2, 2)
    x = x.transpose(0, 2, 7, 1, 6, 4, 9, 3, 8, 5, 10, 11)
    # (B, a2, b2, u, v, a, b, dh, dw, dh1, dw1, cin)
    x = x.reshape(B, 4, 25, 128)
    x = jnp.pad(x, ((0, b_pad - B), (0, 0), (0, 7), (0, 0)))      # q 25->32, pad B
    return x.reshape(b_pad, 128, 128).astype(jnp.bfloat16)


def prepare_kernel_params(params):
    """One-time kernel-layout operand prep (hoisted out of the per-call path)."""
    # conv1 weight on a block diagonal: one matmul = the conv at all 16 shifts.
    w1b = jnp.kron(jnp.eye(16, dtype=jnp.float32),
                   params["w1"]).astype(jnp.bfloat16)             # (128, 512)
    b1t = jnp.tile(params["b1"], (1, 4))                          # (1, 128)
    w2 = params["w2"].astype(jnp.bfloat16)                        # (128, 64)
    b2 = params["b2"]                                             # (1, 64)
    # Linear weight re-ordered: wlr[o, q, c2] = wl[c2*25 + q, o]; q padded to 32.
    wlr = params["wl"].reshape(64, 25, 2).transpose(2, 1, 0)      # (2, 25, 64)
    wlr = jnp.pad(wlr, ((0, 0), (0, 7), (0, 0)))                  # (2, 32, 64)
    blp = jnp.pad(params["bl"], ((0, 0), (0, 126)))               # (1, 128)
    mask = jnp.asarray(_PAD_MASK_NP)                              # (128, 128)
    return dict(w1b=w1b, b1t=b1t, w2=w2, b2=b2, mask=mask, wlr=wlr, blp=blp)


# --------------------------------- forward ----------------------------------


def bentes_forward(kparams, x_nchw):
    B = x_nchw.shape[0]
    assert x_nchw.shape[1:] == (2, 75, 75)
    # TODO(synk): max_alpha > 0 (noise sampling + alpha head + KL of
    # InformationDropoutLayer) is not implemented; with max_alpha == 0.0 the
    # layers are deterministic and the KL contribution is exactly zero.
    assert all(a == 0.0 for a in MAX_ALPHA)

    bt, steps = _grid_plan(B)
    b_pad = bt * steps
    p = _make_patch_matrix(x_nchw, b_pad)                         # (b_pad,128,128)

    flops = b_pad * (2 * 128 * 128 * 512 + 2 * 128 * 128 * 64 + 2 * 2 * 32 * 64)
    bytes_accessed = (p.size * 2 + kparams["w1b"].size * 2 + kparams["w2"].size * 2
                      + kparams["mask"].size * 4 + kparams["wlr"].size * 4
                      + kparams["b1t"].size * 4 + kparams["b2"].size * 4
                      + kparams["blp"].size * 4 + b_pad * 128 * 4)

    out = pl.pallas_call(
        _bentes_fused_kernel,
        out_shape=jax.ShapeDtypeStruct((b_pad, 128), jnp.float32),
        grid_spec=pltpu.PrefetchScalarGridSpec(
            num_scalar_prefetch=0,
            grid=(steps,),
            in_specs=[
                pl.BlockSpec((bt, 128, 128), lambda s: (s, 0, 0)),  # patches
                pl.BlockSpec((128, 512), lambda s: (0, 0)),         # W1 blockdiag
                pl.BlockSpec((1, 128), lambda s: (0, 0)),           # b1 tiled
                pl.BlockSpec((128, 64), lambda s: (0, 0)),          # W2
                pl.BlockSpec((1, 64), lambda s: (0, 0)),            # b2
                pl.BlockSpec((128, 128), lambda s: (0, 0)),         # pad mask
                pl.BlockSpec((2, 32, 64), lambda s: (0, 0, 0)),     # linear W
                pl.BlockSpec((1, 128), lambda s: (0, 0)),           # linear b (padded)
            ],
            out_specs=pl.BlockSpec((bt, 128), lambda s: (s, 0)),
        ),
        compiler_params=pltpu.CompilerParams(
            dimension_semantics=("parallel",),
            vmem_limit_bytes=32 * 1024 * 1024),
        cost_estimate=pl.CostEstimate(
            flops=flops, transcendentals=0, bytes_accessed=bytes_accessed),
    )(p, kparams["w1b"], kparams["b1t"], kparams["w2"], kparams["b2"],
      kparams["mask"], kparams["wlr"], kparams["blp"])

    logits = out[:B, 0:2]                      # (B, 2)
    kl = jnp.zeros((B,), jnp.float32)          # max_alpha == 0 -> KL == 0 exactly
    return logits, kl


# ------------------------------- parameters ---------------------------------


def init_params(key):
    ks = jax.random.split(key, 6)

    def winit(k, shape, fan_in):
        return (jax.random.normal(k, shape, jnp.float32) /
                jnp.sqrt(jnp.float32(fan_in)))

    # NOTE: alpha-head params of InformationDropout are omitted (dead with
    # max_alpha == 0.0).
    # TODO(synk): real torch Conv2d weights are (cout, cin, kh, kw); they need a
    # transpose to (kh, kw, cin, cout) before the flatten used here.
    return {
        # conv1: (kh, kw, cin, cout) = (2, 2, 2, 32) flattened to (8, 32)
        "w1": winit(ks[0], (2, 2, 2, 32), 8).reshape(8, 32),
        "b1": 0.1 * jax.random.normal(ks[1], (1, 32), jnp.float32),
        # conv2: (2, 2, 32, 64) -> (128, 64), rows ordered (kh, kw, cin)
        "w2": winit(ks[2], (2, 2, 32, 64), 128).reshape(128, 64),
        "b2": 0.1 * jax.random.normal(ks[3], (1, 64), jnp.float32),
        # linear: 1600 -> 2 (rows in torch NCHW-flatten order)
        "wl": winit(ks[4], (1600, 2), 1600),
        "bl": 0.1 * jax.random.normal(ks[5], (1, 2), jnp.float32),
    }


# ----------------------- pure-numpy reference (self-check) -------------------


def _reference_forward_np(params, x_nchw):
    x = np.asarray(x_nchw, np.float32)
    w1 = np.asarray(params["w1"], np.float32)             # (8, 32)
    b1 = np.asarray(params["b1"], np.float32).reshape(32)
    w2 = np.asarray(params["w2"], np.float32)             # (128, 64)
    b2 = np.asarray(params["b2"], np.float32).reshape(64)
    wl = np.asarray(params["wl"], np.float32)             # (1600, 2)
    bl = np.asarray(params["bl"], np.float32).reshape(2)

    def conv2x2_s2_relu(h, wflat, b):
        B, H, W, C = h.shape
        Ho, Wo = H // 2, W // 2
        p = (h.reshape(B, Ho, 2, Wo, 2, C).transpose(0, 1, 3, 2, 4, 5)
               .reshape(B, Ho, Wo, 4 * C))
        return np.maximum(p @ wflat + b, 0.0)

    def maxpool2x2(h):
        B, H, W, C = h.shape
        return h.reshape(B, H // 2, 2, W // 2, 2, C).max(axis=(2, 4))

    h = np.transpose(x, (0, 2, 3, 1))                      # NHWC
    h = np.pad(h, ((0, 0), (0, 1), (0, 1), (0, 0)))        # (B, 76, 76, 2)
    h = conv2x2_s2_relu(h, w1, b1)                         # (B, 38, 38, 32)
    h = maxpool2x2(h)                                      # (B, 19, 19, 32)
    h = np.pad(h, ((0, 0), (0, 1), (0, 1), (0, 0)))        # (B, 20, 20, 32)
    h = conv2x2_s2_relu(h, w2, b2)                         # (B, 10, 10, 64)
    h = maxpool2x2(h)                                      # (B, 5, 5, 64)
    flat = np.transpose(h, (0, 3, 1, 2)).reshape(h.shape[0], -1)  # NCHW flatten
    return flat @ wl + bl


# ---------------------------------- main -------------------------------------

if __name__ == "__main__":
    key = jax.random.PRNGKey(0)
    kx, kp = jax.random.split(key)

    x = jax.random.normal(kx, (2, 2, 75, 75), dtype=jnp.float32)   # NCHW input
    params = init_params(kp)
    kparams = prepare_kernel_params(params)    # hoisted, once per parameter set

    fwd = jax.jit(bentes_forward)
    activations, kl = fwd(kparams, x)
    activations = jax.block_until_ready(activations)
    kl = jax.block_until_ready(kl)

    assert activations.shape == (2, 2) and activations.dtype == jnp.float32
    assert kl.shape == (2,) and kl.dtype == jnp.float32
    assert bool(jnp.all(jnp.isfinite(activations)))
    assert bool(jnp.all(jnp.isfinite(kl)))

    # Correctness self-check against an independent pure-numpy (f32) reference.
    ref = _reference_forward_np(jax.device_get(params), jax.device_get(x))
    np.testing.assert_allclose(np.asarray(activations), ref, rtol=2e-2, atol=2e-2)

    print("KERNEL_OK")
</pallas_src>

<mosaic_0001>
module attributes {stable_mosaic.version = 11 : i64} {
  func.func @_bentes_fused_kernel(%arg0: i32, %arg1: memref<8x128x128xbf16, #tpu.memory_space<vmem>>, %arg2: memref<128x512xbf16, #tpu.memory_space<vmem>>, %arg3: memref<1x128xf32, #tpu.memory_space<vmem>>, %arg4: memref<128x64xbf16, #tpu.memory_space<vmem>>, %arg5: memref<1x64xf32, #tpu.memory_space<vmem>>, %arg6: memref<128x128xf32, #tpu.memory_space<vmem>>, %arg7: memref<2x32x64xf32, #tpu.memory_space<vmem>>, %arg8: memref<1x128xf32, #tpu.memory_space<vmem>>, %arg9: memref<8x128xf32, #tpu.memory_space<vmem>>) attributes {dimension_semantics = [#tpu.dimension_semantics<parallel>], iteration_bounds = array<i64: 2>, scalar_prefetch = 0 : i64, scratch_operands = 0 : i64, tpu.core_type = #tpu.core_type<tc>, window_params = [{transform_indices = @transform_0, window_bounds = array<i64: 8, 128, 128>}, {pipeline_mode = #tpu.pipeline_mode<synchronous>, transform_indices = @transform_1, window_bounds = array<i64: 128, 512>}, {pipeline_mode = #tpu.pipeline_mode<synchronous>, transform_indices = @transform_2, window_bounds = array<i64: 1, 128>}, {pipeline_mode = #tpu.pipeline_mode<synchronous>, transform_indices = @transform_3, window_bounds = array<i64: 128, 64>}, {pipeline_mode = #tpu.pipeline_mode<synchronous>, transform_indices = @transform_4, window_bounds = array<i64: 1, 64>}, {pipeline_mode = #tpu.pipeline_mode<synchronous>, transform_indices = @transform_5, window_bounds = array<i64: 128, 128>}, {pipeline_mode = #tpu.pipeline_mode<synchronous>, transform_indices = @transform_6, window_bounds = array<i64: 2, 32, 64>}, {pipeline_mode = #tpu.pipeline_mode<synchronous>, transform_indices = @transform_7, window_bounds = array<i64: 1, 128>}, {transform_indices = @transform_8, window_bounds = array<i64: 8, 128>}]} {
    %c0 = arith.constant 0 : index
    %c0_0 = arith.constant 0 : index
    %c0_1 = arith.constant 0 : index
    %0 = vector.load %arg1[%c0, %c0_0, %c0_1] : memref<8x128x128xbf16, #tpu.memory_space<vmem>>, vector<8x128x128xbf16>
    %1 = vector.shape_cast %0 : vector<8x128x128xbf16> to vector<1024x128xbf16>
    %c0_2 = arith.constant 0 : index
    %c0_3 = arith.constant 0 : index
    %2 = vector.load %arg2[%c0_2, %c0_3] : memref<128x512xbf16, #tpu.memory_space<vmem>>, vector<128x512xbf16>
    %3 = vector.extract_strided_slice %2 {offsets = [0, 0], sizes = [128, 128], strides = [1, 1]} : vector<128x512xbf16> to vector<128x128xbf16>
    %cst = arith.constant dense<0.000000e+00> : vector<1024x128xf32>
    %4 = tpu.matmul %1, %3, %cst {dimension_numbers = #tpu.dot_dimension_numbers<[1], [0], [0], [1], [0, 0, 1, 1], [], []>} : vector<1024x128xbf16>, vector<128x128xbf16>, vector<1024x128xf32> -> vector<1024x128xf32>
    %c0_4 = arith.constant 0 : index
    %c0_5 = arith.constant 0 : index
    %5 = vector.load %arg3[%c0_4, %c0_5] : memref<1x128xf32, #tpu.memory_space<vmem>>, vector<1x128xf32>
    %6 = vector.broadcast %5 : vector<1x128xf32> to vector<1024x128xf32>
    %7 = arith.addf %4, %6 : vector<1024x128xf32>
    %cst_6 = arith.constant 0.000000e+00 : f32
    %8 = vector.broadcast %cst_6 : f32 to vector<1024x128xf32>
    %9 = arith.maximumf %7, %8 : vector<1024x128xf32>
    %10 = vector.extract_strided_slice %2 {offsets = [0, 128], sizes = [128, 128], strides = [1, 1]} : vector<128x512xbf16> to vector<128x128xbf16>
    %cst_7 = arith.constant dense<0.000000e+00> : vector<1024x128xf32>
    %11 = tpu.matmul %1, %10, %cst_7 {dimension_numbers = #tpu.dot_dimension_numbers<[1], [0], [0], [1], [0, 0, 1, 1], [], []>} : vector<1024x128xbf16>, vector<128x128xbf16>, vector<1024x128xf32> -> vector<1024x128xf32>
    %c0_8 = arith.constant 0 : index
    %c0_9 = arith.constant 0 : index
    %12 = vector.load %arg3[%c0_8, %c0_9] : memref<1x128xf32, #tpu.memory_space<vmem>>, vector<1x128xf32>
    %13 = vector.broadcast %12 : vector<1x128xf32> to vector<1024x128xf32>
    %14 = arith.addf %11, %13 : vector<1024x128xf32>
    %cst_10 = arith.constant 0.000000e+00 : f32
    %15 = vector.broadcast %cst_10 : f32 to vector<1024x128xf32>
    %16 = arith.maximumf %14, %15 : vector<1024x128xf32>
    %17 = arith.maximumf %9, %16 : vector<1024x128xf32>
    %18 = vector.extract_strided_slice %2 {offsets = [0, 256], sizes = [128, 128], strides = [1, 1]} : vector<128x512xbf16> to vector<128x128xbf16>
    %cst_11 = arith.constant dense<0.000000e+00> : vector<1024x128xf32>
    %19 = tpu.matmul %1, %18, %cst_11 {dimension_numbers = #tpu.dot_dimension_numbers<[1], [0], [0], [1], [0, 0, 1, 1], [], []>} : vector<1024x128xbf16>, vector<128x128xbf16>, vector<1024x128xf32> -> vector<1024x128xf32>
    %c0_12 = arith.constant 0 : index
    %c0_13 = arith.constant 0 : index
    %20 = vector.load %arg3[%c0_12, %c0_13] : memref<1x128xf32, #tpu.memory_space<vmem>>, vector<1x128xf32>
    %21 = vector.broadcast %20 : vector<1x128xf32> to vector<1024x128xf32>
    %22 = arith.addf %19, %21 : vector<1024x128xf32>
    %cst_14 = arith.constant 0.000000e+00 : f32
    %23 = vector.broadcast %cst_14 : f32 to vector<1024x128xf32>
    %24 = arith.maximumf %22, %23 : vector<1024x128xf32>
    %25 = arith.maximumf %17, %24 : vector<1024x128xf32>
    %26 = vector.extract_strided_slice %2 {offsets = [0, 384], sizes = [128, 128], strides = [1, 1]} : vector<128x512xbf16> to vector<128x128xbf16>
    %cst_15 = arith.constant dense<0.000000e+00> : vector<1024x128xf32>
    %27 = tpu.matmul %1, %26, %cst_15 {dimension_numbers = #tpu.dot_dimension_numbers<[1], [0], [0], [1], [0, 0, 1, 1], [], []>} : vector<1024x128xbf16>, vector<128x128xbf16>, vector<1024x128xf32> -> vector<1024x128xf32>
    %c0_16 = arith.constant 0 : index
    %c0_17 = arith.constant 0 : index
    %28 = vector.load %arg3[%c0_16, %c0_17] : memref<1x128xf32, #tpu.memory_space<vmem>>, vector<1x128xf32>
    %29 = vector.broadcast %28 : vector<1x128xf32> to vector<1024x128xf32>
    %30 = arith.addf %27, %29 : vector<1024x128xf32>
    %cst_18 = arith.constant 0.000000e+00 : f32
    %31 = vector.broadcast %cst_18 : f32 to vector<1024x128xf32>
    %32 = arith.maximumf %30, %31 : vector<1024x128xf32>
    %33 = arith.maximumf %25, %32 : vector<1024x128xf32>
    %34 = vector.shape_cast %33 : vector<1024x128xf32> to vector<8x128x128xf32>
    %c0_19 = arith.constant 0 : index
    %c0_20 = arith.constant 0 : index
    %35 = vector.load %arg6[%c0_19, %c0_20] : memref<128x128xf32, #tpu.memory_space<vmem>>, vector<128x128xf32>
    %36 = vector.shape_cast %35 : vector<128x128xf32> to vector<1x128x128xf32>
    %37 = vector.broadcast %36 : vector<1x128x128xf32> to vector<8x128x128xf32>
    %38 = arith.mulf %34, %37 : vector<8x128x128xf32>
    %39 = vector.shape_cast %38 : vector<8x128x128xf32> to vector<1024x128xf32>
    %40 = arith.truncf %39 : vector<1024x128xf32> to vector<1024x128xbf16>
    %c0_21 = arith.constant 0 : index
    %c0_22 = arith.constant 0 : index
    %41 = vector.load %arg4[%c0_21, %c0_22] : memref<128x64xbf16, #tpu.memory_space<vmem>>, vector<128x64xbf16>
    %cst_23 = arith.constant dense<0.000000e+00> : vector<1024x64xf32>
    %42 = tpu.matmul %40, %41, %cst_23 {dimension_numbers = #tpu.dot_dimension_numbers<[1], [0], [0], [1], [0, 0, 1, 1], [], []>} : vector<1024x128xbf16>, vector<128x64xbf16>, vector<1024x64xf32> -> vector<1024x64xf32>
    %c0_24 = arith.constant 0 : index
    %c0_25 = arith.constant 0 : index
    %43 = vector.load %arg5[%c0_24, %c0_25] : memref<1x64xf32, #tpu.memory_space<vmem>>, vector<1x64xf32>
    %44 = vector.broadcast %43 : vector<1x64xf32> to vector<1024x64xf32>
    %45 = arith.addf %42, %44 : vector<1024x64xf32>
    %cst_26 = arith.constant 0.000000e+00 : f32
    %46 = vector.broadcast %cst_26 : f32 to vector<1024x64xf32>
    %47 = arith.maximumf %45, %46 : vector<1024x64xf32>
    %48 = vector.shape_cast %47 : vector<1024x64xf32> to vector<8x4x32x64xf32>
    %49 = vector.extract_strided_slice %48 {offsets = [0, 0, 0, 0], sizes = [8, 1, 32, 64], strides = [1, 1, 1, 1]} : vector<8x4x32x64xf32> to vector<8x1x32x64xf32>
    %50 = vector.shape_cast %49 : vector<8x1x32x64xf32> to vector<8x32x64xf32>
    %51 = vector.extract_strided_slice %48 {offsets = [0, 1, 0, 0], sizes = [8, 1, 32, 64], strides = [1, 1, 1, 1]} : vector<8x4x32x64xf32> to vector<8x1x32x64xf32>
    %52 = vector.shape_cast %51 : vector<8x1x32x64xf32> to vector<8x32x64xf32>
    %53 = arith.maximumf %50, %52 : vector<8x32x64xf32>
    %54 = vector.extract_strided_slice %48 {offsets = [0, 2, 0, 0], sizes = [8, 1, 32, 64], strides = [1, 1, 1, 1]} : vector<8x4x32x64xf32> to vector<8x1x32x64xf32>
    %55 = vector.shape_cast %54 : vector<8x1x32x64xf32> to vector<8x32x64xf32>
    %56 = vector.extract_strided_slice %48 {offsets = [0, 3, 0, 0], sizes = [8, 1, 32, 64], strides = [1, 1, 1, 1]} : vector<8x4x32x64xf32> to vector<8x1x32x64xf32>
    %57 = vector.shape_cast %56 : vector<8x1x32x64xf32> to vector<8x32x64xf32>
    %58 = arith.maximumf %55, %57 : vector<8x32x64xf32>
    %59 = arith.maximumf %53, %58 : vector<8x32x64xf32>
    %c0_27 = arith.constant 0 : index
    %c0_28 = arith.constant 0 : index
    %c0_29 = arith.constant 0 : index
    %60 = vector.load %arg7[%c0_27, %c0_28, %c0_29] : memref<2x32x64xf32, #tpu.memory_space<vmem>>, vector<2x32x64xf32>
    %61 = vector.extract_strided_slice %60 {offsets = [0, 0, 0], sizes = [1, 32, 64], strides = [1, 1, 1]} : vector<2x32x64xf32> to vector<1x32x64xf32>
    %62 = vector.shape_cast %61 : vector<1x32x64xf32> to vector<32x64xf32>
    %63 = vector.shape_cast %62 : vector<32x64xf32> to vector<1x32x64xf32>
    %64 = vector.broadcast %63 : vector<1x32x64xf32> to vector<8x32x64xf32>
    %65 = arith.mulf %59, %64 : vector<8x32x64xf32>
    %cst_30 = arith.constant dense<0.000000e+00> : vector<8x32xf32>
    %66 = vector.multi_reduction <add>, %65, %cst_30 [2] : vector<8x32x64xf32> to vector<8x32xf32>
    %cst_31 = arith.constant dense<0.000000e+00> : vector<8xf32>
    %67 = vector.multi_reduction <add>, %66, %cst_31 [1] : vector<8x32xf32> to vector<8xf32>
    %68 = vector.shape_cast %67 : vector<8xf32> to vector<8x1xf32>
    %69 = vector.extract_strided_slice %60 {offsets = [1, 0, 0], sizes = [1, 32, 64], strides = [1, 1, 1]} : vector<2x32x64xf32> to vector<1x32x64xf32>
    %70 = vector.shape_cast %69 : vector<1x32x64xf32> to vector<32x64xf32>
    %71 = vector.shape_cast %70 : vector<32x64xf32> to vector<1x32x64xf32>
    %72 = vector.broadcast %71 : vector<1x32x64xf32> to vector<8x32x64xf32>
    %73 = arith.mulf %59, %72 : vector<8x32x64xf32>
    %cst_32 = arith.constant dense<0.000000e+00> : vector<8x32xf32>
    %74 = vector.multi_reduction <add>, %73, %cst_32 [2] : vector<8x32x64xf32> to vector<8x32xf32>
    %cst_33 = arith.constant dense<0.000000e+00> : vector<8xf32>
    %75 = vector.multi_reduction <add>, %74, %cst_33 [1] : vector<8x32xf32> to vector<8xf32>
    %76 = vector.shape_cast %75 : vector<8xf32> to vector<8x1xf32>
    %77 = tpu.iota {dimensions = array<i32: 1>} : vector<8x128xi32>
    %c0_i32 = arith.constant 0 : i32
    %78 = vector.broadcast %c0_i32 : i32 to vector<8x128xi32>
    %79 = arith.cmpi eq, %77, %78 : vector<8x128xi32>
    %c1_i32 = arith.constant 1 : i32
    %80 = vector.broadcast %c1_i32 : i32 to vector<8x128xi32>
    %81 = arith.cmpi eq, %77, %80 : vector<8x128xi32>
    %cst_34 = arith.constant 0.000000e+00 : f32
    %82 = vector.shape_cast %76 : vector<8x1xf32> to vector<8x1xf32>
    %83 = vector.broadcast %82 : vector<8x1xf32> to vector<8x128xf32>
    %84 = vector.broadcast %cst_34 : f32 to vector<8x128xf32>
    %85 = arith.select %81, %83, %84 : vector<8x128xi1>, vector<8x128xf32>
    %86 = vector.shape_cast %68 : vector<8x1xf32> to vector<8x1xf32>
    %87 = vector.broadcast %86 : vector<8x1xf32> to vector<8x128xf32>
    %88 = arith.select %79, %87, %85 : vector<8x128xi1>, vector<8x128xf32>
    %c0_35 = arith.constant 0 : index
    %c0_36 = arith.constant 0 : index
    %89 = vector.load %arg8[%c0_35, %c0_36] : memref<1x128xf32, #tpu.memory_space<vmem>>, vector<1x128xf32>
    %90 = vector.broadcast %89 : vector<1x128xf32> to vector<8x128xf32>
    %91 = arith.addf %88, %90 : vector<8x128xf32>
    %c0_37 = arith.constant 0 : index
    %c0_38 = arith.constant 0 : index
    %92 = vector.load %arg9[%c0_37, %c0_38] : memref<8x128xf32, #tpu.memory_space<vmem>>, vector<8x128xf32>
    tpu.vector_store %arg9[%c0_37, %c0_38], %91 {strides = array<i32>} : memref<8x128xf32, #tpu.memory_space<vmem>>, vector<8x128xf32>,
    return
  }
  func.func @transform_0(%arg0: i32) -> (i32, i32, i32) {
    %c0_i32 = arith.constant 0 : i32
    %c0_i32_0 = arith.constant 0 : i32
    %c0_i32_1 = arith.constant 0 : i32
    return %arg0, %c0_i32, %c0_i32_0 : i32, i32, i32
  }
  func.func @transform_1(%arg0: i32) -> (i32, i32) {
    %c0_i32 = arith.constant 0 : i32
    %c0_i32_0 = arith.constant 0 : i32
    %c0_i32_1 = arith.constant 0 : i32
    return %c0_i32, %c0_i32_0 : i32, i32
  }
  func.func @transform_2(%arg0: i32) -> (i32, i32) {
    %c0_i32 = arith.constant 0 : i32
    %c0_i32_0 = arith.constant 0 : i32
    %c0_i32_1 = arith.constant 0 : i32
    return %c0_i32, %c0_i32_0 : i32, i32
  }
  func.func @transform_3(%arg0: i32) -> (i32, i32) {
    %c0_i32 = arith.constant 0 : i32
    %c0_i32_0 = arith.constant 0 : i32
    %c0_i32_1 = arith.constant 0 : i32
    return %c0_i32, %c0_i32_0 : i32, i32
  }
  func.func @transform_4(%arg0: i32) -> (i32, i32) {
    %c0_i32 = arith.constant 0 : i32
    %c0_i32_0 = arith.constant 0 : i32
    %c0_i32_1 = arith.constant 0 : i32
    return %c0_i32, %c0_i32_0 : i32, i32
  }
  func.func @transform_5(%arg0: i32) -> (i32, i32) {
    %c0_i32 = arith.constant 0 : i32
    %c0_i32_0 = arith.constant 0 : i32
    %c0_i32_1 = arith.constant 0 : i32
    return %c0_i32, %c0_i32_0 : i32, i32
  }
  func.func @transform_6(%arg0: i32) -> (i32, i32, i32) {
    %c0_i32 = arith.constant 0 : i32
    %c0_i32_0 = arith.constant 0 : i32
    %c0_i32_1 = arith.constant 0 : i32
    %c0_i32_2 = arith.constant 0 : i32
    return %c0_i32, %c0_i32_0, %c0_i32_1 : i32, i32, i32
  }
  func.func @transform_7(%arg0: i32) -> (i32, i32) {
    %c0_i32 = arith.constant 0 : i32
    %c0_i32_0 = arith.constant 0 : i32
    %c0_i32_1 = arith.constant 0 : i32
    return %c0_i32, %c0_i32_0 : i32, i32
  }
  func.func @transform_8(%arg0: i32) -> (i32, i32) {
    %c0_i32 = arith.constant 0 : i32
    %c0_i32_0 = arith.constant 0 : i32
    return %arg0, %c0_i32 : i32, i32
  }
}

</mosaic_0001>

<llo_original>
// kernel: bentes_forward.1
$region0: #{bentes_forward.1}
  #allocation0 [shape = 'u32[]', space=smem, size = 0x4, offset = 0x4, fixed_abs, tag = 'smem constant byte address 0x4 - core index']
  #allocation1 [shape = 'u32[144,128]{1,0:T(1,128)}', space=vmem, size = 0x12000, scoped, tag = 'internal scratch']
  %s0 = inlined_call_operand.vmem [shape: bf16[16,128,128], index: 0, kind: input, shape index: {}]
  %s1 = inlined_call_operand.vmem [shape: bf16[128,512], index: 1, kind: input, shape index: {}]
  %s2 = inlined_call_operand.vmem [shape: f32[1,128], index: 2, kind: input, shape index: {}]
  %s3 = inlined_call_operand.vmem [shape: bf16[128,64], index: 3, kind: input, shape index: {}]
  %s4 = inlined_call_operand.vmem [shape: f32[1,64], index: 4, kind: input, shape index: {}]
  %s5 = inlined_call_operand.vmem [shape: f32[128,128], index: 5, kind: input, shape index: {}]
  %s6 = inlined_call_operand.vmem [shape: f32[2,32,64], index: 6, kind: input, shape index: {}]
  %s7 = inlined_call_operand.vmem [shape: f32[1,128], index: 7, kind: input, shape index: {}]
  %s8 = inlined_call_operand.vmem [shape: f32[16,128], index: 8, kind: output, shape index: {}]
  %s9 = sld [smem:[#allocation0]]
  $region65: #{bentes_forward.1} parent=0
    _
  %s11 = ssub.s32 1, %s9
  %s12 = scalar_select 0, %s11, %s9
  loop: start=0, step=1, limit=4
  $region2: #{bentes_forward.1} parent=0 // loop_pre_header
    _
  $region3: #{bentes_forward.1} parent=0 // loop_header
    %s14 = sphi 0, %s18
    %p15 = scmp.ge.s32.totalorder %s14, 4
    %s24 = sphi 0, %s26
    %s27 = sphi 0, %s24
    %s28 = sphi 0, %s27
    %s44 = sphi 0, %s28
    %s48 = sphi 0, %s48
    %s50 = sphi 0, %s48
    %s51 = sphi 0, %s50
    %s65 = sphi 0, %s51
    %s69 = sphi 0, %s69
    %s71 = sphi 0, %s69
    %s72 = sphi 0, %s71
    %s86 = sphi 0, %s72
    %s90 = sphi 0, %s90
    %s92 = sphi 0, %s90
    %s93 = sphi 0, %s92
    %s107 = sphi 0, %s93
    %s111 = sphi 0, %s111
    %s113 = sphi 0, %s111
    %s114 = sphi 0, %s113
    %s128 = sphi 0, %s114
    %s132 = sphi 0, %s132
    %s134 = sphi 0, %s132
    %s135 = sphi 0, %s134
    %s149 = sphi 0, %s135
    %s153 = sphi 0, %s153
    %s155 = sphi 0, %s153
    %s156 = sphi 0, %s155
    %s170 = sphi 0, %s156
    %s174 = sphi 0, %s174
    %s176 = sphi 0, %s174
    %s177 = sphi 0, %s176
    %s191 = sphi 0, %s177
    %s197 = sphi 0, %s199
    %s200 = sphi 0, %s197
    %s201 = sphi 0, %s200
    %s217 = sphi 0, %s201
  $region4: #{bentes_forward.1} parent=0 // loop_header_branch
    %17 = sbr.rel (%p15) target = $region8
  $region5: #{bentes_forward.1} parent=0 // loop_body
    %s19 = ssub.s32 %s14, 1
    %s20 = ssub.s32 %s14, 2
    %s21 = sadd.s32 %s14, 1
    %s22 = ssub.s32 %s14, %s21
    %p23 = scmp.eq.s32.totalorder %s22, 0
    %s25 = sadd.s32 %s24, 1
    %s26 = scalar_select %p23, %s24, %s25
    %p29 = pneg %p23
    %p30 = scmp.eq.s32.totalorder %s14, 1
    %p31 = por %p29, %p30
    %p32 = scmp.ne.s32.totalorder %s24, %s27
    %p33 = scmp.eq.s32.totalorder %s14, 0
    %p34 = por %p32, %p33
    %p35 = scmp.ne.s32.totalorder %s24, %s27
    %p36 = scmp.eq.s32.totalorder %s19, 1
    %p37 = por %p35, %p36
    %p38 = scmp.ne.s32.totalorder %s27, %s28
    %p39 = scmp.eq.s32.totalorder %s19, 0
    %p40 = por %p38, %p39
    %p41 = scmp.ne.s32.totalorder %s27, %s28
    %p42 = scmp.eq.s32.totalorder %s20, 1
    %p43 = por %p41, %p42
    %p45 = scmp.ne.s32.totalorder %s28, %s44
    %p46 = scmp.eq.s32.totalorder %s20, 0
    %p47 = por %p45, %p46
    %s49 = sadd.s32 %s48, 1
    %p52 = scmp.eq.s32.totalorder %s14, 1
    %p53 = scmp.ne.s32.totalorder %s48, %s50
    %p54 = scmp.eq.s32.totalorder %s14, 0
    %p55 = por %p53, %p54
    %p56 = scmp.ne.s32.totalorder %s48, %s50
    %p57 = scmp.eq.s32.totalorder %s19, 1
    %p58 = por %p56, %p57
    %p59 = scmp.ne.s32.totalorder %s50, %s51
    %p60 = scmp.eq.s32.totalorder %s19, 0
    %p61 = por %p59, %p60
    %p62 = scmp.ne.s32.totalorder %s50, %s51
    %p63 = scmp.eq.s32.totalorder %s20, 1
    %p64 = por %p62, %p63
    %p66 = scmp.ne.s32.totalorder %s51, %s65
    %p67 = scmp.eq.s32.totalorder %s20, 0
    %p68 = por %p66, %p67
    %s70 = sadd.s32 %s69, 1
    %p73 = scmp.eq.s32.totalorder %s14, 1
    %p74 = scmp.ne.s32.totalorder %s69, %s71
    %p75 = scmp.eq.s32.totalorder %s14, 0
    %p76 = por %p74, %p75
    %p77 = scmp.ne.s32.totalorder %s69, %s71
    %p78 = scmp.eq.s32.totalorder %s19, 1
    %p79 = por %p77, %p78
    %p80 = scmp.ne.s32.totalorder %s71, %s72
    %p81 = scmp.eq.s32.totalorder %s19, 0
    %p82 = por %p80, %p81
    %p83 = scmp.ne.s32.totalorder %s71, %s72
    %p84 = scmp.eq.s32.totalorder %s20, 1
    %p85 = por %p83, %p84
    %p87 = scmp.ne.s32.totalorder %s72, %s86
    %p88 = scmp.eq.s32.totalorder %s20, 0
    %p89 = por %p87, %p88
    %s91 = sadd.s32 %s90, 1
    %p94 = scmp.eq.s32.totalorder %s14, 1
    %p95 = scmp.ne.s32.totalorder %s90, %s92
    %p96 = scmp.eq.s32.totalorder %s14, 0
    %p97 = por %p95, %p96
    %p98 = scmp.ne.s32.totalorder %s90, %s92
    %p99 = scmp.eq.s32.totalorder %s19, 1
    %p100 = por %p98, %p99
    %p101 = scmp.ne.s32.totalorder %s92, %s93
    %p102 = scmp.eq.s32.totalorder %s19, 0
    %p103 = por %p101, %p102
    %p104 = scmp.ne.s32.totalorder %s92, %s93
    %p105 = scmp.eq.s32.totalorder %s20, 1
    %p106 = por %p104, %p105
    %p108 = scmp.ne.s32.totalorder %s93, %s107
    %p109 = scmp.eq.s32.totalorder %s20, 0
    %p110 = por %p108, %p109
    %s112 = sadd.s32 %s111, 1
    %p115 = scmp.eq.s32.totalorder %s14, 1
    %p116 = scmp.ne.s32.totalorder %s111, %s113
    %p117 = scmp.eq.s32.totalorder %s14, 0
    %p118 = por %p116, %p117
    %p119 = scmp.ne.s32.totalorder %s111, %s113
    %p120 = scmp.eq.s32.totalorder %s19, 1
    %p121 = por %p119, %p120
    %p122 = scmp.ne.s32.totalorder %s113, %s114
    %p123 = scmp.eq.s32.totalorder %s19, 0
    %p124 = por %p122, %p123
    %p125 = scmp.ne.s32.totalorder %s113, %s114
    %p126 = scmp.eq.s32.totalorder %s20, 1
    %p127 = por %p125, %p126
    %p129 = scmp.ne.s32.totalorder %s114, %s128
    %p130 = scmp.eq.s32.totalorder %s20, 0
    %p131 = por %p129, %p130
    %s133 = sadd.s32 %s132, 1
    %p136 = scmp.eq.s32.totalorder %s14, 1
    %p137 = scmp.ne.s32.totalorder %s132, %s134
    %p138 = scmp.eq.s32.totalorder %s14, 0
    %p139 = por %p137, %p138
    %p140 = scmp.ne.s32.totalorder %s132, %s134
    %p141 = scmp.eq.s32.totalorder %s19, 1
    %p142 = por %p140, %p141
    %p143 = scmp.ne.s32.totalorder %s134, %s135
    %p144 = scmp.eq.s32.totalorder %s19, 0
    %p145 = por %p143, %p144
    %p146 = scmp.ne.s32.totalorder %s134, %s135
    %p147 = scmp.eq.s32.totalorder %s20, 1
    %p148 = por %p146, %p147
    %p150 = scmp.ne.s32.totalorder %s135, %s149
    %p151 = scmp.eq.s32.totalorder %s20, 0
    %p152 = por %p150, %p151
    %s154 = sadd.s32 %s153, 1
    %p157 = scmp.eq.s32.totalorder %s14, 1
    %p158 = scmp.ne.s32.totalorder %s153, %s155
    %p159 = scmp.eq.s32.totalorder %s14, 0
    %p160 = por %p158, %p159
    %p161 = scmp.ne.s32.totalorder %s153, %s155
    %p162 = scmp.eq.s32.totalorder %s19, 1
    %p163 = por %p161, %p162
    %p164 = scmp.ne.s32.totalorder %s155, %s156
    %p165 = scmp.eq.s32.totalorder %s19, 0
    %p166 = por %p164, %p165
    %p167 = scmp.ne.s32.totalorder %s155, %s156
    %p168 = scmp.eq.s32.totalorder %s20, 1
    %p169 = por %p167, %p168
    %p171 = scmp.ne.s32.totalorder %s156, %s170
    %p172 = scmp.eq.s32.totalorder %s20, 0
    %p173 = por %p171, %p172
    %s175 = sadd.s32 %s174, 1
    %p178 = scmp.eq.s32.totalorder %s14, 1
    %p179 = scmp.ne.s32.totalorder %s174, %s176
    %p180 = scmp.eq.s32.totalorder %s14, 0
    %p181 = por %p179, %p180
    %p182 = scmp.ne.s32.totalorder %s174, %s176
    %p183 = scmp.eq.s32.totalorder %s19, 1
    %p184 = por %p182, %p183
    %p185 = scmp.ne.s32.totalorder %s176, %s177
    %p186 = scmp.eq.s32.totalorder %s19, 0
    %p187 = por %p185, %p186
    %p188 = scmp.ne.s32.totalorder %s176, %s177
    %p189 = scmp.eq.s32.totalorder %s20, 1
    %p190 = por %p188, %p189
    %p192 = scmp.ne.s32.totalorder %s177, %s191
    %p193 = scmp.eq.s32.totalorder %s20, 0
    %p194 = por %p192, %p193
    %s195 = ssub.s32 %s14, %s21
    %p196 = scmp.eq.s32.totalorder %s195, 0
    %s198 = sadd.s32 %s197, 1
    %s199 = scalar_select %p196, %s197, %s198
    %p202 = pneg %p196
    %p203 = scmp.eq.s32.totalorder %s14, 1
    %p204 = por %p202, %p203
    %p205 = scmp.ne.s32.totalorder %s197, %s200
    %p206 = scmp.eq.s32.totalorder %s14, 0
    %p207 = por %p205, %p206
    %p208 = scmp.ne.s32.totalorder %s197, %s200
    %p209 = scmp.eq.s32.totalorder %s19, 1
    %p210 = por %p208, %p209
    %p211 = scmp.ne.s32.totalorder %s200, %s201
    %p212 = scmp.eq.s32.totalorder %s19, 0
    %p213 = por %p211, %p212
    %p214 = scmp.ne.s32.totalorder %s200, %s201
    %p215 = scmp.eq.s32.totalorder %s20, 1
    %p216 = por %p214, %p215
    %p218 = scmp.ne.s32.totalorder %s201, %s217
    %p219 = scmp.eq.s32.totalorder %s20, 0
    %p220 = por %p218, %p219
    %p221 = scmp.le.s32.totalorder 1, %s14
    %p222 = scmp.lt.s32.totalorder %s14, 3
    %p223 = pnand %p221, %p222
    %p224 = pneg %p223
    // Predicated region
    $region9: #{bentes_forward.1} parent=5 // pred_check
      _
    $region10: #{bentes_forward.1} parent=5 // pred_check_branch
      %226 = sbr.rel (%p223) target = $region12
    $region11: #{bentes_forward.1} parent=5 // pred_region
      %s227 = ssub.s32 %s14, 1
      // Predicated region
      $region13: #{bentes_forward.1} parent=11 // pred_check
        %p228 = pneg %p61
      $region14: #{bentes_forward.1} parent=11 // pred_check_branch
        %230 = sbr.rel (%p228) target = $region16
      $region15: #{bentes_forward.1} parent=11 // pred_region
        _
      $region16: #{bentes_forward.1} parent=11 // pred_fallthru
        _
      // Predicated region
      $region17: #{bentes_forward.1} parent=11 // pred_check
        %p231 = pneg %p82
      $region18: #{bentes_forward.1} parent=11 // pred_check_branch
        %233 = sbr.rel (%p231) target = $region20
      $region19: #{bentes_forward.1} parent=11 // pred_region
        _
      $region20: #{bentes_forward.1} parent=11 // pred_fallthru
        _
      // Predicated region
      $region21: #{bentes_forward.1} parent=11 // pred_check
        %p234 = pneg %p103
      $region22: #{bentes_forward.1} parent=11 // pred_check_branch
        %236 = sbr.rel (%p234) target = $region24
      $region23: #{bentes_forward.1} parent=11 // pred_region
        _
      $region24: #{bentes_forward.1} parent=11 // pred_fallthru
        _
      // Predicated region
      $region25: #{bentes_forward.1} parent=11 // pred_check
        %p237 = pneg %p124
      $region26: #{bentes_forward.1} parent=11 // pred_check_branch
        %239 = sbr.rel (%p237) target = $region28
      $region27: #{bentes_forward.1} parent=11 // pred_region
        _
      $region28: #{bentes_forward.1} parent=11 // pred_fallthru
        _
      // Predicated region
      $region29: #{bentes_forward.1} parent=11 // pred_check
        %p240 = pneg %p145
      $region30: #{bentes_forward.1} parent=11 // pred_check_branch
        %242 = sbr.rel (%p240) target = $region32
      $region31: #{bentes_forward.1} parent=11 // pred_region
        _
      $region32: #{bentes_forward.1} parent=11 // pred_fallthru
        _
      // Predicated region
      $region33: #{bentes_forward.1} parent=11 // pred_check
        %p243 = pneg %p166
      $region34: #{bentes_forward.1} parent=11 // pred_check_branch
        %245 = sbr.rel (%p243) target = $region36
      $region35: #{bentes_forward.1} parent=11 // pred_region
        _
      $region36: #{bentes_forward.1} parent=11 // pred_fallthru
        _
      // Predicated region
      $region37: #{bentes_forward.1} parent=11 // pred_check
        %p246 = pneg %p187
      $region38: #{bentes_forward.1} parent=11 // pred_check_branch
        %248 = sbr.rel (%p246) target = $region40
      $region39: #{bentes_forward.1} parent=11 // pred_region
        _
      $region40: #{bentes_forward.1} parent=11 // pred_fallthru
        _
    $region12: #{bentes_forward.1} parent=5 // pred_fallthru
      _
    %p249 = scmp.lt.s32.totalorder %s14, 2
    // Predicated region
    $region41: #{bentes_forward.1} parent=5 // pred_check
      %p250 = pneg %p249
    $region42: #{bentes_forward.1} parent=5 // pred_check_branch
      %252 = sbr.rel (%p250) target = $region44
    $region43: #{bentes_forward.1} parent=5 // pred_region
      // Predicated region
      $region45: #{bentes_forward.1} parent=43 // pred_check
        %p253 = pneg %p34
      $region46: #{bentes_forward.1} parent=43 // pred_check_branch
        %255 = sbr.rel (%p253) target = $region48
      $region47: #{bentes_forward.1} parent=43 // pred_region
        %s256 = smul.u32 8, %s14
        %p257 = scmp.lt.s32.totalorder %s256, 15
        %s258 = scalar_select %p257, %s256, 15
        %s259 = smul.addr %s258, 16
        %s260 = smul.addr %s259, 4
        %s261 = scalar_lea.vmem %s0, %s260
        %s262 = smul.u32 8, %s14
      $region48: #{bentes_forward.1} parent=43 // pred_fallthru
        _
    $region44: #{bentes_forward.1} parent=5 // pred_fallthru
      _
    %p263 = scmp.le.s32.totalorder 1, %s14
    %p264 = scmp.lt.s32.totalorder %s14, 3
    %p265 = pnand %p263, %p264
    %p266 = pneg %p265
    // Predicated region
    $region49: #{bentes_forward.1} parent=5 // pred_check
      _
    $region50: #{bentes_forward.1} parent=5 // pred_check_branch
      %268 = sbr.rel (%p265) target = $region52
    $region51: #{bentes_forward.1} parent=5 // pred_region
      %s269 = ssub.s32 %s14, 1
      %s270 = smul.u32 8, %s19
      %p271 = scmp.lt.s32.totalorder %s270, 15
      %s272 = scalar_select %p271, %s270, 15
      %s273 = smul.addr %s272, 16
      %s274 = smul.addr %s273, 4
      %s275 = scalar_lea.vmem %s0, %s274
      %p276 = pneg %p40
      %p277 = pneg %p37
      %p278 = pneg %p61
      %p279 = pneg %p58
      %p280 = pneg %p82
      %p281 = pneg %p79
      %p282 = pneg %p103
      %p283 = pneg %p100
      %p284 = pneg %p124
      %p285 = pneg %p121
      %p286 = pneg %p145
      %p287 = pneg %p142
      %p288 = pneg %p166
      %p289 = pneg %p163
      %p290 = pneg %p187
      %p291 = pneg %p184
      %p292 = pneg %p213
      %p293 = pneg %p210
      %p294 = scmp.lt.s32.totalorder %s19, 1
      %s295 = scalar_select %p294, %s19, 1
      %s296 = smul.addr %s295, 8
      %s297 = scalar_lea.vmem %s8, %s296
      %s298 = smul.u32 8, %s19
      %p299 = scmp.lt.s32.totalorder %s298, 15
      %s300 = scalar_select %p299, %s298, 15
      %s301 = smul.addr %s300, 16
      %s302 = smul.addr %s301, 4
      %s303 = scalar_lea.vmem %s0, %s302
      %s304 = smul.u32 8, %s19
      %p305 = scmp.lt.s32.totalorder %s19, 1
      %s306 = scalar_select %p305, %s19, 1
      %s307 = smul.addr %s306, 8
      %s308 = scalar_lea.vmem %s8, %s307
      %v310 = vld [vmem:[%s303] sm:$0xf]
      %v311 = vld [vmem:[%s303 + $0x4] sm:$0xf]
      %v312 = vld [vmem:[%s303 + $0x8] sm:$0xf]
      %v313 = vld [vmem:[%s303 + $0xc] sm:$0xf]
      %v314 = vld [vmem:[%s303 + $0x10] sm:$0xf]
      %v315 = vld [vmem:[%s303 + $0x14] sm:$0xf]
      %v316 = vld [vmem:[%s303 + $0x18] sm:$0xf]
      %v317 = vld [vmem:[%s303 + $0x1c] sm:$0xf]
      %v318 = vld [vmem:[%s303 + $0x20] sm:$0xf]
      %v319 = vld [vmem:[%s303 + $0x24] sm:$0xf]
      %v320 = vld [vmem:[%s303 + $0x28] sm:$0xf]
      %v321 = vld [vmem:[%s303 + $0x2c] sm:$0xf]
      %v322 = vld [vmem:[%s303 + $0x30] sm:$0xf]
      %v323 = vld [vmem:[%s303 + $0x34] sm:$0xf]
      %v324 = vld [vmem:[%s303 + $0x38] sm:$0xf]
      %v325 = vld [vmem:[%s303 + $0x3c] sm:$0xf]
      %v326 = vld [vmem:[%s303 + $0x40] sm:$0xf]
      %v327 = vld [vmem:[%s303 + $0x44] sm:$0xf]
      %v328 = vld [vmem:[%s303 + $0x48] sm:$0xf]
      %v329 = vld [vmem:[%s303 + $0x4c] sm:$0xf]
      %v330 = vld [vmem:[%s303 + $0x50] sm:$0xf]
      %v331 = vld [vmem:[%s303 + $0x54] sm:$0xf]
      %v332 = vld [vmem:[%s303 + $0x58] sm:$0xf]
      %v333 = vld [vmem:[%s303 + $0x5c] sm:$0xf]
      %v334 = vld [vmem:[%s303 + $0x60] sm:$0xf]
      %v335 = vld [vmem:[%s303 + $0x64] sm:$0xf]
      %v336 = vld [vmem:[%s303 + $0x68] sm:$0xf]
      %v337 = vld [vmem:[%s303 + $0x6c] sm:$0xf]
      %v338 = vld [vmem:[%s303 + $0x70] sm:$0xf]
      %v339 = vld [vmem:[%s303 + $0x74] sm:$0xf]
      %v340 = vld [vmem:[%s303 + $0x78] sm:$0xf]
      %v341 = vld [vmem:[%s303 + $0x7c] sm:$0xf]
      %v342 = vld [vmem:[%s303 + $0x80] sm:$0xf]
      %v343 = vld [vmem:[%s303 + $0x84] sm:$0xf]
      %v344 = vld [vmem:[%s303 + $0x88] sm:$0xf]
      %v345 = vld [vmem:[%s303 + $0x8c] sm:$0xf]
      %v346 = vld [vmem:[%s303 + $0x90] sm:$0xf]
      %v347 = vld [vmem:[%s303 + $0x94] sm:$0xf]
      %v348 = vld [vmem:[%s303 + $0x98] sm:$0xf]
      %v349 = vld [vmem:[%s303 + $0x9c] sm:$0xf]
      %v350 = vld [vmem:[%s303 + $0xa0] sm:$0xf]
      %v351 = vld [vmem:[%s303 + $0xa4] sm:$0xf]
      %v352 = vld [vmem:[%s303 + $0xa8] sm:$0xf]
      %v353 = vld [vmem:[%s303 + $0xac] sm:$0xf]
      %v354 = vld [vmem:[%s303 + $0xb0] sm:$0xf]
      %v355 = vld [vmem:[%s303 + $0xb4] sm:$0xf]
      %v356 = vld [vmem:[%s303 + $0xb8] sm:$0xf]
      %v357 = vld [vmem:[%s303 + $0xbc] sm:$0xf]
      %v358 = vld [vmem:[%s303 + $0xc0] sm:$0xf]
      %v359 = vld [vmem:[%s303 + $0xc4] sm:$0xf]
      %v360 = vld [vmem:[%s303 + $0xc8] sm:$0xf]
      %v361 = vld [vmem:[%s303 + $0xcc] sm:$0xf]
      %v362 = vld [vmem:[%s303 + $0xd0] sm:$0xf]
      %v363 = vld [vmem:[%s303 + $0xd4] sm:$0xf]
      %v364 = vld [vmem:[%s303 + $0xd8] sm:$0xf]
      %v365 = vld [vmem:[%s303 + $0xdc] sm:$0xf]
      %v366 = vld [vmem:[%s303 + $0xe0] sm:$0xf]
      %v367 = vld [vmem:[%s303 + $0xe4] sm:$0xf]
      %v368 = vld [vmem:[%s303 + $0xe8] sm:$0xf]
      %v369 = vld [vmem:[%s303 + $0xec] sm:$0xf]
      %v370 = vld [vmem:[%s303 + $0xf0] sm:$0xf]
      %v371 = vld [vmem:[%s303 + $0xf4] sm:$0xf]
      %v372 = vld [vmem:[%s303 + $0xf8] sm:$0xf]
      %v373 = vld [vmem:[%s303 + $0xfc] sm:$0xf]
      %v374 = vld [vmem:[%s303 + $0x100] sm:$0xf]
      %v375 = vld [vmem:[%s303 + $0x104] sm:$0xf]
      %v376 = vld [vmem:[%s303 + $0x108] sm:$0xf]
      %v377 = vld [vmem:[%s303 + $0x10c] sm:$0xf]
      %v378 = vld [vmem:[%s303 + $0x110] sm:$0xf]
      %v379 = vld [vmem:[%s303 + $0x114] sm:$0xf]
      %v380 = vld [vmem:[%s303 + $0x118] sm:$0xf]
      %v381 = vld [vmem:[%s303 + $0x11c] sm:$0xf]
      %v382 = vld [vmem:[%s303 + $0x120] sm:$0xf]
      %v383 = vld [vmem:[%s303 + $0x124] sm:$0xf]
      %v384 = vld [vmem:[%s303 + $0x128] sm:$0xf]
      %v385 = vld [vmem:[%s303 + $0x12c] sm:$0xf]
      %v386 = vld [vmem:[%s303 + $0x130] sm:$0xf]
      %v387 = vld [vmem:[%s303 + $0x134] sm:$0xf]
      %v388 = vld [vmem:[%s303 + $0x138] sm:$0xf]
      %v389 = vld [vmem:[%s303 + $0x13c] sm:$0xf]
      %v390 = vld [vmem:[%s303 + $0x140] sm:$0xf]
      %v391 = vld [vmem:[%s303 + $0x144] sm:$0xf]
      %v392 = vld [vmem:[%s303 + $0x148] sm:$0xf]
      %v393 = vld [vmem:[%s303 + $0x14c] sm:$0xf]
      %v394 = vld [vmem:[%s303 + $0x150] sm:$0xf]
      %v395 = vld [vmem:[%s303 + $0x154] sm:$0xf]
      %v396 = vld [vmem:[%s303 + $0x158] sm:$0xf]
      %v397 = vld [vmem:[%s303 + $0x15c] sm:$0xf]
      %v398 = vld [vmem:[%s303 + $0x160] sm:$0xf]
      %v399 = vld [vmem:[%s303 + $0x164] sm:$0xf]
      %v400 = vld [vmem:[%s303 + $0x168] sm:$0xf]
      %v401 = vld [vmem:[%s303 + $0x16c] sm:$0xf]
      %v402 = vld [vmem:[%s303 + $0x170] sm:$0xf]
      %v403 = vld [vmem:[%s303 + $0x174] sm:$0xf]
      %v404 = vld [vmem:[%s303 + $0x178] sm:$0xf]
      %v405 = vld [vmem:[%s303 + $0x17c] sm:$0xf]
      %v406 = vld [vmem:[%s303 + $0x180] sm:$0xf]
      %v407 = vld [vmem:[%s303 + $0x184] sm:$0xf]
      %v408 = vld [vmem:[%s303 + $0x188] sm:$0xf]
      %v409 = vld [vmem:[%s303 + $0x18c] sm:$0xf]
      %v410 = vld [vmem:[%s303 + $0x190] sm:$0xf]
      %v411 = vld [vmem:[%s303 + $0x194] sm:$0xf]
      %v412 = vld [vmem:[%s303 + $0x198] sm:$0xf]
      %v413 = vld [vmem:[%s303 + $0x19c] sm:$0xf]
      %v414 = vld [vmem:[%s303 + $0x1a0] sm:$0xf]
      %v415 = vld [vmem:[%s303 + $0x1a4] sm:$0xf]
      %v416 = vld [vmem:[%s303 + $0x1a8] sm:$0xf]
      %v417 = vld [vmem:[%s303 + $0x1ac] sm:$0xf]
      %v418 = vld [vmem:[%s303 + $0x1b0] sm:$0xf]
      %v419 = vld [vmem:[%s303 + $0x1b4] sm:$0xf]
      %v420 = vld [vmem:[%s303 + $0x1b8] sm:$0xf]
      %v421 = vld [vmem:[%s303 + $0x1bc] sm:$0xf]
      %v422 = vld [vmem:[%s303 + $0x1c0] sm:$0xf]
      %v423 = vld [vmem:[%s303 + $0x1c4] sm:$0xf]
      %v424 = vld [vmem:[%s303 + $0x1c8] sm:$0xf]
      %v425 = vld [vmem:[%s303 + $0x1cc] sm:$0xf]
      %v426 = vld [vmem:[%s303 + $0x1d0] sm:$0xf]
      %v427 = vld [vmem:[%s303 + $0x1d4] sm:$0xf]
      %v428 = vld [vmem:[%s303 + $0x1d8] sm:$0xf]
      %v429 = vld [vmem:[%s303 + $0x1dc] sm:$0xf]
      %v430 = vld [vmem:[%s303 + $0x1e0] sm:$0xf]
      %v431 = vld [vmem:[%s303 + $0x1e4] sm:$0xf]
      %v432 = vld [vmem:[%s303 + $0x1e8] sm:$0xf]
      %v433 = vld [vmem:[%s303 + $0x1ec] sm:$0xf]
      %v434 = vld [vmem:[%s303 + $0x1f0] sm:$0xf]
      %v435 = vld [vmem:[%s303 + $0x1f4] sm:$0xf]
      %v436 = vld [vmem:[%s303 + $0x1f8] sm:$0xf]
      %v437 = vld [vmem:[%s303 + $0x1fc] sm:$0xf]
      %v438 = vld [vmem:[%s1] sm:$0xff]
      %v439 = vld [vmem:[%s1 + $0x8] sm:$0xff]
      %v440 = vld [vmem:[%s1 + $0x10] sm:$0xff]
      %v441 = vld [vmem:[%s1 + $0x18] sm:$0xff]
      %v442 = vld [vmem:[%s1 + $0x20] sm:$0xff]
      %v443 = vld [vmem:[%s1 + $0x28] sm:$0xff]
      %v444 = vld [vmem:[%s1 + $0x30] sm:$0xff]
      %v445 = vld [vmem:[%s1 + $0x38] sm:$0xff]
      %v446 = vld [vmem:[%s1 + $0x40] sm:$0xff]
      %v447 = vld [vmem:[%s1 + $0x48] sm:$0xff]
      %v448 = vld [vmem:[%s1 + $0x50] sm:$0xff]
      %v449 = vld [vmem:[%s1 + $0x58] sm:$0xff]
      %v450 = vld [vmem:[%s1 + $0x60] sm:$0xff]
      %v451 = vld [vmem:[%s1 + $0x68] sm:$0xff]
      %v452 = vld [vmem:[%s1 + $0x70] sm:$0xff]
      %v453 = vld [vmem:[%s1 + $0x78] sm:$0xff]
      %v454 = vld [vmem:[%s1 + $0x80] sm:$0xff]
      %v455 = vld [vmem:[%s1 + $0x88] sm:$0xff]
      %v456 = vld [vmem:[%s1 + $0x90] sm:$0xff]
      %v457 = vld [vmem:[%s1 + $0x98] sm:$0xff]
      %v458 = vld [vmem:[%s1 + $0xa0] sm:$0xff]
      %v459 = vld [vmem:[%s1 + $0xa8] sm:$0xff]
      %v460 = vld [vmem:[%s1 + $0xb0] sm:$0xff]
      %v461 = vld [vmem:[%s1 + $0xb8] sm:$0xff]
      %v462 = vld [vmem:[%s1 + $0xc0] sm:$0xff]
      %v463 = vld [vmem:[%s1 + $0xc8] sm:$0xff]
      %v464 = vld [vmem:[%s1 + $0xd0] sm:$0xff]
      %v465 = vld [vmem:[%s1 + $0xd8] sm:$0xff]
      %v466 = vld [vmem:[%s1 + $0xe0] sm:$0xff]
      %v467 = vld [vmem:[%s1 + $0xe8] sm:$0xff]
      %v468 = vld [vmem:[%s1 + $0xf0] sm:$0xff]
      %v469 = vld [vmem:[%s1 + $0xf8] sm:$0xff]
      %v470 = vld [vmem:[%s2] sm:$0x1]
      %v472 = vlaneseq
      %v473 = vshrl.u32 %v472, 7
      %v474 = vsub.s32 0, %v473
      %v475 = vrot.slane %v470, %v474
      %v605 = vunpack.c.l.b16 %v310
      %v606 = vunpack.c.l.b16 %v311
      %v607 = vunpack.c.l.b16 %v312
      %v608 = vunpack.c.l.b16 %v313
      %v609 = vunpack.c.l.b16 %v314
      %v610 = vunpack.c.l.b16 %v315
      %v611 = vunpack.c.l.b16 %v316
      %v612 = vunpack.c.l.b16 %v317
      %v613 = vunpack.c.l.b16 %v318
      %v614 = vunpack.c.l.b16 %v319
      %v615 = vunpack.c.l.b16 %v320
      %v616 = vunpack.c.l.b16 %v321
      %v617 = vunpack.c.l.b16 %v322
      %v618 = vunpack.c.l.b16 %v323
      %v619 = vunpack.c.l.b16 %v324
      %v620 = vunpack.c.l.b16 %v325
      %v621 = vunpack.c.l.b16 %v326
      %v622 = vunpack.c.l.b16 %v327
      %v623 = vunpack.c.l.b16 %v328
      %v624 = vunpack.c.l.b16 %v329
      %v625 = vunpack.c.l.b16 %v330
      %v626 = vunpack.c.l.b16 %v331
      %v627 = vunpack.c.l.b16 %v332
      %v628 = vunpack.c.l.b16 %v333
      %v629 = vunpack.c.l.b16 %v334
      %v630 = vunpack.c.l.b16 %v335
      %v631 = vunpack.c.l.b16 %v336
      %v632 = vunpack.c.l.b16 %v337
      %v633 = vunpack.c.l.b16 %v338
      %v634 = vunpack.c.l.b16 %v339
      %v635 = vunpack.c.l.b16 %v340
      %v636 = vunpack.c.l.b16 %v341
      %v637 = vunpack.c.l.b16 %v342
      %v638 = vunpack.c.l.b16 %v343
      %v639 = vunpack.c.l.b16 %v344
      %v640 = vunpack.c.l.b16 %v345
      %v641 = vunpack.c.l.b16 %v346
      %v642 = vunpack.c.l.b16 %v347
      %v643 = vunpack.c.l.b16 %v348
      %v644 = vunpack.c.l.b16 %v349
      %v645 = vunpack.c.l.b16 %v350
      %v646 = vunpack.c.l.b16 %v351
      %v647 = vunpack.c.l.b16 %v352
      %v648 = vunpack.c.l.b16 %v353
      %v649 = vunpack.c.l.b16 %v354
      %v650 = vunpack.c.l.b16 %v355
      %v651 = vunpack.c.l.b16 %v356
      %v652 = vunpack.c.l.b16 %v357
      %v653 = vunpack.c.l.b16 %v358
      %v654 = vunpack.c.l.b16 %v359
      %v655 = vunpack.c.l.b16 %v360
      %v656 = vunpack.c.l.b16 %v361
      %v657 = vunpack.c.l.b16 %v362
      %v658 = vunpack.c.l.b16 %v363
      %v659 = vunpack.c.l.b16 %v364
      %v660 = vunpack.c.l.b16 %v365
      %v661 = vunpack.c.l.b16 %v366
      %v662 = vunpack.c.l.b16 %v367
      %v663 = vunpack.c.l.b16 %v368
      %v664 = vunpack.c.l.b16 %v369
      %v665 = vunpack.c.l.b16 %v370
      %v666 = vunpack.c.l.b16 %v371
      %v667 = vunpack.c.l.b16 %v372
      %v668 = vunpack.c.l.b16 %v373
      %v669 = vunpack.c.l.b16 %v374
      %v670 = vunpack.c.l.b16 %v375
      %v671 = vunpack.c.l.b16 %v376
      %v672 = vunpack.c.l.b16 %v377
      %v673 = vunpack.c.l.b16 %v378
      %v674 = vunpack.c.l.b16 %v379
      %v675 = vunpack.c.l.b16 %v380
      %v676 = vunpack.c.l.b16 %v381
      %v677 = vunpack.c.l.b16 %v382
      %v678 = vunpack.c.l.b16 %v383
      %v679 = vunpack.c.l.b16 %v384
      %v680 = vunpack.c.l.b16 %v385
      %v681 = vunpack.c.l.b16 %v386
      %v682 = vunpack.c.l.b16 %v387
      %v683 = vunpack.c.l.b16 %v388
      %v684 = vunpack.c.l.b16 %v389
      %v685 = vunpack.c.l.b16 %v390
      %v686 = vunpack.c.l.b16 %v391
      %v687 = vunpack.c.l.b16 %v392
      %v688 = vunpack.c.l.b16 %v393
      %v689 = vunpack.c.l.b16 %v394
      %v690 = vunpack.c.l.b16 %v395
      %v691 = vunpack.c.l.b16 %v396
      %v692 = vunpack.c.l.b16 %v397
      %v693 = vunpack.c.l.b16 %v398
      %v694 = vunpack.c.l.b16 %v399
      %v695 = vunpack.c.l.b16 %v400
      %v696 = vunpack.c.l.b16 %v401
      %v697 = vunpack.c.l.b16 %v402
      %v698 = vunpack.c.l.b16 %v403
      %v699 = vunpack.c.l.b16 %v404
      %v700 = vunpack.c.l.b16 %v405
      %v701 = vunpack.c.l.b16 %v406
      %v702 = vunpack.c.l.b16 %v407
      %v703 = vunpack.c.l.b16 %v408
      %v704 = vunpack.c.l.b16 %v409
      %v705 = vunpack.c.l.b16 %v410
      %v706 = vunpack.c.l.b16 %v411
      %v707 = vunpack.c.l.b16 %v412
      %v708 = vunpack.c.l.b16 %v413
      %v709 = vunpack.c.l.b16 %v414
      %v710 = vunpack.c.l.b16 %v415
      %v711 = vunpack.c.l.b16 %v416
      %v712 = vunpack.c.l.b16 %v417
      %v713 = vunpack.c.l.b16 %v418
      %v714 = vunpack.c.l.b16 %v419
      %v715 = vunpack.c.l.b16 %v420
      %v716 = vunpack.c.l.b16 %v421
      %v717 = vunpack.c.l.b16 %v422
      %v718 = vunpack.c.l.b16 %v423
      %v719 = vunpack.c.l.b16 %v424
      %v720 = vunpack.c.l.b16 %v425
      %v721 = vunpack.c.l.b16 %v426
      %v722 = vunpack.c.l.b16 %v427
      %v723 = vunpack.c.l.b16 %v428
      %v724 = vunpack.c.l.b16 %v429
      %v725 = vunpack.c.l.b16 %v430
      %v726 = vunpack.c.l.b16 %v431
      %v727 = vunpack.c.l.b16 %v432
      %v728 = vunpack.c.l.b16 %v433
      %v729 = vunpack.c.l.b16 %v434
      %v730 = vunpack.c.l.b16 %v435
      %v731 = vunpack.c.l.b16 %v436
      %v732 = vunpack.c.l.b16 %v437
      %v733 = vpack.c.b16 %v606, %v605
      %v734 = vpack.c.b16 %v608, %v607
      %v735 = vpack.c.b16 %v610, %v609
      %v736 = vpack.c.b16 %v612, %v611
      %v737 = vpack.c.b16 %v614, %v613
      %v738 = vpack.c.b16 %v616, %v615
      %v739 = vpack.c.b16 %v618, %v617
      %v740 = vpack.c.b16 %v620, %v619
      %v741 = vpack.c.b16 %v622, %v621
      %v742 = vpack.c.b16 %v624, %v623
      %v743 = vpack.c.b16 %v626, %v625
      %v744 = vpack.c.b16 %v628, %v627
      %v745 = vpack.c.b16 %v630, %v629
      %v746 = vpack.c.b16 %v632, %v631
      %v747 = vpack.c.b16 %v634, %v633
      %v748 = vpack.c.b16 %v636, %v635
      %v749 = vpack.c.b16 %v638, %v637
      %v750 = vpack.c.b16 %v640, %v639
      %v751 = vpack.c.b16 %v642, %v641
      %v752 = vpack.c.b16 %v644, %v643
      %v753 = vpack.c.b16 %v646, %v645
      %v754 = vpack.c.b16 %v648, %v647
      %v755 = vpack.c.b16 %v650, %v649
      %v756 = vpack.c.b16 %v652, %v651
      %v757 = vpack.c.b16 %v654, %v653
      %v758 = vpack.c.b16 %v656, %v655
      %v759 = vpack.c.b16 %v658, %v657
      %v760 = vpack.c.b16 %v660, %v659
      %v761 = vpack.c.b16 %v662, %v661
      %v762 = vpack.c.b16 %v664, %v663
      %v763 = vpack.c.b16 %v666, %v665
      %v764 = vpack.c.b16 %v668, %v667
      %v765 = vpack.c.b16 %v670, %v669
      %v766 = vpack.c.b16 %v672, %v671
      %v767 = vpack.c.b16 %v674, %v673
      %v768 = vpack.c.b16 %v676, %v675
      %v769 = vpack.c.b16 %v678, %v677
      %v770 = vpack.c.b16 %v680, %v679
      %v771 = vpack.c.b16 %v682, %v681
      %v772 = vpack.c.b16 %v684, %v683
      %v773 = vpack.c.b16 %v686, %v685
      %v774 = vpack.c.b16 %v688, %v687
      %v775 = vpack.c.b16 %v690, %v689
      %v776 = vpack.c.b16 %v692, %v691
      %v777 = vpack.c.b16 %v694, %v693
      %v778 = vpack.c.b16 %v696, %v695
      %v779 = vpack.c.b16 %v698, %v697
      %v780 = vpack.c.b16 %v700, %v699
      %v781 = vpack.c.b16 %v702, %v701
      %v782 = vpack.c.b16 %v704, %v703
      %v783 = vpack.c.b16 %v706, %v705
      %v784 = vpack.c.b16 %v708, %v707
      %v785 = vpack.c.b16 %v710, %v709
      %v786 = vpack.c.b16 %v712, %v711
      %v787 = vpack.c.b16 %v714, %v713
      %v788 = vpack.c.b16 %v716, %v715
      %v789 = vpack.c.b16 %v718, %v717
      %v790 = vpack.c.b16 %v720, %v719
      %v791 = vpack.c.b16 %v722, %v721
      %v792 = vpack.c.b16 %v724, %v723
      %v793 = vpack.c.b16 %v726, %v725
      %v794 = vpack.c.b16 %v728, %v727
      %v795 = vpack.c.b16 %v730, %v729
      %v796 = vpack.c.b16 %v732, %v731
      %v877 = vunpack.c.l.b16 %v438
      %v878 = vunpack.c.l.b16 %v440
      %v879 = vunpack.c.l.b16 %v442
      %v880 = vunpack.c.l.b16 %v444
      %v881 = vunpack.c.l.b16 %v446
      %v882 = vunpack.c.l.b16 %v448
      %v883 = vunpack.c.l.b16 %v450
      %v884 = vunpack.c.l.b16 %v452
      %v885 = vunpack.c.l.b16 %v454
      %v886 = vunpack.c.l.b16 %v456
      %v887 = vunpack.c.l.b16 %v458
      %v888 = vunpack.c.l.b16 %v460
      %v889 = vunpack.c.l.b16 %v462
      %v890 = vunpack.c.l.b16 %v464
      %v891 = vunpack.c.l.b16 %v466
      %v892 = vunpack.c.l.b16 %v468
      %v893 = vpack.c.b16 %v878, %v877
      %v894 = vpack.c.b16 %v880, %v879
      %v895 = vpack.c.b16 %v882, %v881
      %v896 = vpack.c.b16 %v884, %v883
      %v897 = vpack.c.b16 %v886, %v885
      %v898 = vpack.c.b16 %v888, %v887
      %v899 = vpack.c.b16 %v890, %v889
      %v900 = vpack.c.b16 %v892, %v891
      %909 = vmatprep.subr.bf16.mxu0 0
      %910 = vmatpush1.bf16.msra.mxu0 %v893
      %911 = vmatprep.subr.bf16.mxu0 0
      %912 = vmatpush1.bf16.msra.mxu0 %v894
      %913 = vmatprep.subr.bf16.mxu0 0
      %914 = vmatpush1.bf16.msra.mxu0 %v895
      %915 = vmatprep.subr.bf16.mxu0 0
      %916 = vmatpush1.bf16.msra.mxu0 %v896
      %917 = vmatprep.subr.bf16.mxu0 0
      %918 = vmatpush1.bf16.msra.mxu0 %v897
      %919 = vmatprep.subr.bf16.mxu0 0
      %920 = vmatpush1.bf16.msra.mxu0 %v898
      %921 = vmatprep.subr.bf16.mxu0 0
      %922 = vmatpush1.bf16.msra.mxu0 %v899
      %923 = vmatprep.subr.bf16.mxu0 0
      %924 = vmatpush1.bf16.msra.mxu0 %v900
      %925 = vmatprep.subr.bf16.mxu0 0
      %926 = vmatpush1.bf16.msra.mxu0 0
      %927 = vmatprep.subr.bf16.mxu0 0
      %928 = vmatpush1.bf16.msra.mxu0 0
      %929 = vmatprep.subr.bf16.mxu0 0
      %930 = vmatpush1.bf16.msra.mxu0 0
      %931 = vmatprep.subr.bf16.mxu0 0
      %932 = vmatpush1.bf16.msra.mxu0 0
      %933 = vmatprep.subr.bf16.mxu0 0
      %934 = vmatpush1.bf16.msra.mxu0 0
      %935 = vmatprep.subr.bf16.mxu0 0
      %936 = vmatpush1.bf16.msra.mxu0 0
      %937 = vmatprep.subr.bf16.mxu0 0
      %938 = vmatpush1.bf16.msra.mxu0 0
      %939 = vmatprep.subr.bf16.mxu0 0
      %940 = vmatpush1.bf16.msra.mxu0 0
      %941 = vmatprep.mubr.bf16.mxu0 0
      %942 = vmatmul.mubr.bf16.gmra.mrb[0].mxu0 %v733
      %v943 = vpop.f32.mrb[0].mxu0
      %v944 = vadd.f32 %v475, %v943
      %v945 = vpop.f32.mrb[0].mxu0
      %v946 = vpop.f32.mrb[0].mxu0
      %v947 = vadd.f32 %v475, %v946
      %v948 = vpop.f32.mrb[0].mxu0
      %949 = vmatprep.mubr.bf16.mxu0 0
      %950 = vmatmul.mubr.bf16.gmra.mrb[0].mxu0 %v734
      %v951 = vpop.f32.mrb[0].mxu0
      %v952 = vadd.f32 %v475, %v951
      %v953 = vpop.f32.mrb[0].mxu0
      %v954 = vpop.f32.mrb[0].mxu0
      %v955 = vadd.f32 %v475, %v954
      %v956 = vpop.f32.mrb[0].mxu0
      %957 = vmatprep.mubr.bf16.mxu0 0
      %958 = vmatmul.mubr.bf16.gmra.mrb[0].mxu0 %v735
      %v959 = vpop.f32.mrb[0].mxu0
      %v960 = vadd.f32 %v475, %v959
      %v961 = vpop.f32.mrb[0].mxu0
      %v962 = vpop.f32.mrb[0].mxu0
      %v963 = vadd.f32 %v475, %v962
      %v964 = vpop.f32.mrb[0].mxu0
      %965 = vmatprep.mubr.bf16.mxu0 0
      %966 = vmatmul.mubr.bf16.gmra.mrb[0].mxu0 %v736
      %v967 = vpop.f32.mrb[0].mxu0
      %v968 = vadd.f32 %v475, %v967
      %v969 = vpop.f32.mrb[0].mxu0
      %v970 = vpop.f32.mrb[0].mxu0
      %v971 = vadd.f32 %v475, %v970
      %v972 = vpop.f32.mrb[0].mxu0
      %973 = vmatprep.mubr.bf16.mxu0 0
      %974 = vmatmul.mubr.bf16.gmra.mrb[0].mxu0 %v737
      %v975 = vpop.f32.mrb[0].mxu0
      %v976 = vadd.f32 %v475, %v975
      %v977 = vpop.f32.mrb[0].mxu0
      %v978 = vpop.f32.mrb[0].mxu0
      %v979 = vadd.f32 %v475, %v978
      %v980 = vpop.f32.mrb[0].mxu0
      %981 = vmatprep.mubr.bf16.mxu0 0
      %982 = vmatmul.mubr.bf16.gmra.mrb[0].mxu0 %v738
      %v983 = vpop.f32.mrb[0].mxu0
      %v984 = vadd.f32 %v475, %v983
      %v985 = vpop.f32.mrb[0].mxu0
      %v986 = vpop.f32.mrb[0].mxu0
      %v987 = vadd.f32 %v475, %v986
      %v988 = vpop.f32.mrb[0].mxu0
      %989 = vmatprep.mubr.bf16.mxu0 0
      %990 = vmatmul.mubr.bf16.gmra.mrb[0].mxu0 %v739
      %v991 = vpop.f32.mrb[0].mxu0
      %v992 = vadd.f32 %v475, %v991
      %v993 = vpop.f32.mrb[0].mxu0
      %v994 = vpop.f32.mrb[0].mxu0
      %v995 = vadd.f32 %v475, %v994
      %v996 = vpop.f32.mrb[0].mxu0
      %997 = vmatprep.mubr.bf16.mxu0 0
      %998 = vmatmul.mubr.bf16.gmra.mrb[0].mxu0 %v740
      %v999 = vpop.f32.mrb[0].mxu0
      %v1000 = vadd.f32 %v475, %v999
      %v1001 = vpop.f32.mrb[0].mxu0
      %v1002 = vpop.f32.mrb[0].mxu0
      %v1003 = vadd.f32 %v475, %v1002
      %v1004 = vpop.f32.mrb[0].mxu0
      %1005 = vmatprep.mubr.bf16.mxu0 0
      %1006 = vmatmul.mubr.bf16.gmra.mrb[0].mxu0 %v741
      %v1007 = vpop.f32.mrb[0].mxu0
      %v1008 = vadd.f32 %v475, %v1007
      %v1009 = vpop.f32.mrb[0].mxu0
      %v1010 = vpop.f32.mrb[0].mxu0
      %v1011 = vadd.f32 %v475, %v1010
      %v1012 = vpop.f32.mrb[0].mxu0
      %1013 = vmatprep.mubr.bf16.mxu0 0
      %1014 = vmatmul.mubr.bf16.gmra.mrb[0].mxu0 %v742
      %v1015 = vpop.f32.mrb[0].mxu0
      %v1016 = vadd.f32 %v475, %v1015
      %v1017 = vpop.f32.mrb[0].mxu0
      %v1018 = vpop.f32.mrb[0].mxu0
      %v1019 = vadd.f32 %v475, %v1018
      %v1020 = vpop.f32.mrb[0].mxu0
      %1021 = vmatprep.mubr.bf16.mxu0 0
      %1022 = vmatmul.mubr.bf16.gmra.mrb[0].mxu0 %v743
      %v1023 = vpop.f32.mrb[0].mxu0
      %v1024 = vadd.f32 %v475, %v1023
      %v1025 = vpop.f32.mrb[0].mxu0
      %v1026 = vpop.f32.mrb[0].mxu0
      %v1027 = vadd.f32 %v475, %v1026
      %v1028 = vpop.f32.mrb[0].mxu0
      %1029 = vmatprep.mubr.bf16.mxu0 0
      %1030 = vmatmul.mubr.bf16.gmra.mrb[0].mxu0 %v744
      %v1031 = vpop.f32.mrb[0].mxu0
      %v1032 = vadd.f32 %v475, %v1031
      %v1033 = vpop.f32.mrb[0].mxu0
      %v1034 = vpop.f32.mrb[0].mxu0
      %v1035 = vadd.f32 %v475, %v1034
      %v1036 = vpop.f32.mrb[0].mxu0
      %1037 = vmatprep.mubr.bf16.mxu0 0
      %1038 = vmatmul.mubr.bf16.gmra.mrb[0].mxu0 %v745
      %v1039 = vpop.f32.mrb[0].mxu0
      %v1040 = vadd.f32 %v475, %v1039
      %v1041 = vpop.f32.mrb[0].mxu0
      %v1042 = vpop.f32.mrb[0].mxu0
      %v1043 = vadd.f32 %v475, %v1042
      %v1044 = vpop.f32.mrb[0].mxu0
      %1045 = vmatprep.mubr.bf16.mxu0 0
      %1046 = vmatmul.mubr.bf16.gmra.mrb[0].mxu0 %v746
      %v1047 = vpop.f32.mrb[0].mxu0
      %v1048 = vadd.f32 %v475, %v1047
      %v1049 = vpop.f32.mrb[0].mxu0
      %v1050 = vpop.f32.mrb[0].mxu0
      %v1051 = vadd.f32 %v475, %v1050
      %v1052 = vpop.f32.mrb[0].mxu0
      %1053 = vmatprep.mubr.bf16.mxu0 0
      %1054 = vmatmul.mubr.bf16.gmra.mrb[0].mxu0 %v747
      %v1055 = vpop.f32.mrb[0].mxu0
      %v1056 = vadd.f32 %v475, %v1055
      %v1057 = vpop.f32.mrb[0].mxu0
      %v1058 = vpop.f32.mrb[0].mxu0
      %v1059 = vadd.f32 %v475, %v1058
      %v1060 = vpop.f32.mrb[0].mxu0
      %1061 = vmatprep.mubr.bf16.mxu0 0
      %1062 = vmatmul.mubr.bf16.gmra.mrb[0].mxu0 %v748
      %v1063 = vpop.f32.mrb[0].mxu0
      %v1064 = vadd.f32 %v475, %v1063
      %v1065 = vpop.f32.mrb[0].mxu0
      %v1066 = vpop.f32.mrb[0].mxu0
      %v1067 = vadd.f32 %v475, %v1066
      %v1068 = vpop.f32.mrb[0].mxu0
      %1069 = vmatprep.mubr.bf16.mxu0 0
      %1070 = vmatmul.mubr.bf16.gmra.mrb[0].mxu0 %v749
      %v1071 = vpop.f32.mrb[0].mxu0
      %v1072 = vadd.f32 %v475, %v1071
      %v1073 = vpop.f32.mrb[0].mxu0
      %v1074 = vpop.f32.mrb[0].mxu0
      %v1075 = vadd.f32 %v475, %v1074
      %v1076 = vpop.f32.mrb[0].mxu0
      %1077 = vmatprep.mubr.bf16.mxu0 0
      %1078 = vmatmul.mubr.bf16.gmra.mrb[0].mxu0 %v750
      %v1079 = vpop.f32.mrb[0].mxu0
      %v1080 = vadd.f32 %v475, %v1079
      %v1081 = vpop.f32.mrb[0].mxu0
      %v1082 = vpop.f32.mrb[0].mxu0
      %v1083 = vadd.f32 %v475, %v1082
      %v1084 = vpop.f32.mrb[0].mxu0
      %1085 = vmatprep.mubr.bf16.mxu0 0
      %1086 = vmatmul.mubr.bf16.gmra.mrb[0].mxu0 %v751
      %v1087 = vpop.f32.mrb[0].mxu0
      %v1088 = vadd.f32 %v475, %v1087
      %v1089 = vpop.f32.mrb[0].mxu0
      %v1090 = vpop.f32.mrb[0].mxu0
      %v1091 = vadd.f32 %v475, %v1090
      %v1092 = vpop.f32.mrb[0].mxu0
      %1093 = vmatprep.mubr.bf16.mxu0 0
      %1094 = vmatmul.mubr.bf16.gmra.mrb[0].mxu0 %v752
      %v1095 = vpop.f32.mrb[0].mxu0
      %v1096 = vadd.f32 %v475, %v1095
      %v1097 = vpop.f32.mrb[0].mxu0
      %v1098 = vpop.f32.mrb[0].mxu0
      %v1099 = vadd.f32 %v475, %v1098
      %v1100 = vpop.f32.mrb[0].mxu0
      %1101 = vmatprep.mubr.bf16.mxu0 0
      %1102 = vmatmul.mubr.bf16.gmra.mrb[0].mxu0 %v753
      %v1103 = vpop.f32.mrb[0].mxu0
      %v1104 = vadd.f32 %v475, %v1103
      %v1105 = vpop.f32.mrb[0].mxu0
      %v1106 = vpop.f32.mrb[0].mxu0
      %v1107 = vadd.f32 %v475, %v1106
      %v1108 = vpop.f32.mrb[0].mxu0
      %1109 = vmatprep.mubr.bf16.mxu0 0
      %1110 = vmatmul.mubr.bf16.gmra.mrb[0].mxu0 %v754
      %v1111 = vpop.f32.mrb[0].mxu0
      %v1112 = vadd.f32 %v475, %v1111
      %v1113 = vpop.f32.mrb[0].mxu0
      %v1114 = vpop.f32.mrb[0].mxu0
      %v1115 = vadd.f32 %v475, %v1114
      %v1116 = vpop.f32.mrb[0].mxu0
      %1117 = vmatprep.mubr.bf16.mxu0 0
      %1118 = vmatmul.mubr.bf16.gmra.mrb[0].mxu0 %v755
      %v1119 = vpop.f32.mrb[0].mxu0
      %v1120 = vadd.f32 %v475, %v1119
      %v1121 = vpop.f32.mrb[0].mxu0
      %v1122 = vpop.f32.mrb[0].mxu0
      %v1123 = vadd.f32 %v475, %v1122
      %v1124 = vpop.f32.mrb[0].mxu0
      %1125 = vmatprep.mubr.bf16.mxu0 0
      %1126 = vmatmul.mubr.bf16.gmra.mrb[0].mxu0 %v756
      %v1127 = vpop.f32.mrb[0].mxu0
      %v1128 = vadd.f32 %v475, %v1127
      %v1129 = vpop.f32.mrb[0].mxu0
      %v1130 = vpop.f32.mrb[0].mxu0
      %v1131 = vadd.f32 %v475, %v1130
      %v1132 = vpop.f32.mrb[0].mxu0
      %1133 = vmatprep.mubr.bf16.mxu0 0
      %1134 = vmatmul.mubr.bf16.gmra.mrb[0].mxu0 %v757
      %v1135 = vpop.f32.mrb[0].mxu0
      %v1136 = vadd.f32 %v475, %v1135
      %v1137 = vpop.f32.mrb[0].mxu0
      %v1138 = vpop.f32.mrb[0].mxu0
      %v1139 = vadd.f32 %v475, %v1138
      %v1140 = vpop.f32.mrb[0].mxu0
      %1141 = vmatprep.mubr.bf16.mxu0 0
      %1142 = vmatmul.mubr.bf16.gmra.mrb[0].mxu0 %v758
      %v1143 = vpop.f32.mrb[0].mxu0
      %v1144 = vadd.f32 %v475, %v1143
      %v1145 = vpop.f32.mrb[0].mxu0
      %v1146 = vpop.f32.mrb[0].mxu0
      %v1147 = vadd.f32 %v475, %v1146
      %v1148 = vpop.f32.mrb[0].mxu0
      %1149 = vmatprep.mubr.bf16.mxu0 0
      %1150 = vmatmul.mubr.bf16.gmra.mrb[0].mxu0 %v759
      %v1151 = vpop.f32.mrb[0].mxu0
      %v1152 = vadd.f32 %v475, %v1151
      %v1153 = vpop.f32.mrb[0].mxu0
      %v1154 = vpop.f32.mrb[0].mxu0
      %v1155 = vadd.f32 %v475, %v1154
      %v1156 = vpop.f32.mrb[0].mxu0
      %1157 = vmatprep.mubr.bf16.mxu0 0
      %1158 = vmatmul.mubr.bf16.gmra.mrb[0].mxu0 %v760
      %v1159 = vpop.f32.mrb[0].mxu0
      %v1160 = vadd.f32 %v475, %v1159
      %v1161 = vpop.f32.mrb[0].mxu0
      %v1162 = vpop.f32.mrb[0].mxu0
      %v1163 = vadd.f32 %v475, %v1162
      %v1164 = vpop.f32.mrb[0].mxu0
      %1165 = vmatprep.mubr.bf16.mxu0 0
      %1166 = vmatmul.mubr.bf16.gmra.mrb[0].mxu0 %v761
      %v1167 = vpop.f32.mrb[0].mxu0
      %v1168 = vadd.f32 %v475, %v1167
      %v1169 = vpop.f32.mrb[0].mxu0
      %v1170 = vpop.f32.mrb[0].mxu0
      %v1171 = vadd.f32 %v475, %v1170
      %v1172 = vpop.f32.mrb[0].mxu0
      %1173 = vmatprep.mubr.bf16.mxu0 0
      %1174 = vmatmul.mubr.bf16.gmra.mrb[0].mxu0 %v762
      %v1175 = vpop.f32.mrb[0].mxu0
      %v1176 = vadd.f32 %v475, %v1175
      %v1177 = vpop.f32.mrb[0].mxu0
      %v1178 = vpop.f32.mrb[0].mxu0
      %v1179 = vadd.f32 %v475, %v1178
      %v1180 = vpop.f32.mrb[0].mxu0
      %1181 = vmatprep.mubr.bf16.mxu0 0
      %1182 = vmatmul.mubr.bf16.gmra.mrb[0].mxu0 %v763
      %v1183 = vpop.f32.mrb[0].mxu0
      %v1184 = vadd.f32 %v475, %v1183
      %v1185 = vpop.f32.mrb[0].mxu0
      %v1186 = vpop.f32.mrb[0].mxu0
      %v1187 = vadd.f32 %v475, %v1186
      %v1188 = vpop.f32.mrb[0].mxu0
      %1189 = vmatprep.mubr.bf16.mxu0 0
      %1190 = vmatmul.mubr.bf16.gmra.mrb[0].mxu0 %v764
      %v1191 = vpop.f32.mrb[0].mxu0
      %v1192 = vadd.f32 %v475, %v1191
      %v1193 = vpop.f32.mrb[0].mxu0
      %v1194 = vpop.f32.mrb[0].mxu0
      %v1195 = vadd.f32 %v475, %v1194
      %v1196 = vpop.f32.mrb[0].mxu0
      %1197 = vmatprep.mubr.bf16.mxu0 0
      %1198 = vmatmul.mubr.bf16.gmra.mrb[0].mxu0 %v765
      %v1199 = vpop.f32.mrb[0].mxu0
      %v1200 = vadd.f32 %v475, %v1199
      %v1201 = vpop.f32.mrb[0].mxu0
      %v1202 = vpop.f32.mrb[0].mxu0
      %v1203 = vadd.f32 %v475, %v1202
      %v1204 = vpop.f32.mrb[0].mxu0
      %1205 = vmatprep.mubr.bf16.mxu0 0
      %1206 = vmatmul.mubr.bf16.gmra.mrb[0].mxu0 %v766
      %v1207 = vpop.f32.mrb[0].mxu0
      %v1208 = vadd.f32 %v475, %v1207
      %v1209 = vpop.f32.mrb[0].mxu0
      %v1210 = vpop.f32.mrb[0].mxu0
      %v1211 = vadd.f32 %v475, %v1210
      %v1212 = vpop.f32.mrb[0].mxu0
      %1213 = vmatprep.mubr.bf16.mxu0 0
      %1214 = vmatmul.mubr.bf16.gmra.mrb[0].mxu0 %v767
      %v1215 = vpop.f32.mrb[0].mxu0
      %v1216 = vadd.f32 %v475, %v1215
      %v1217 = vpop.f32.mrb[0].mxu0
      %v1218 = vpop.f32.mrb[0].mxu0
      %v1219 = vadd.f32 %v475, %v1218
      %v1220 = vpop.f32.mrb[0].mxu0
      %1221 = vmatprep.mubr.bf16.mxu0 0
      %1222 = vmatmul.mubr.bf16.gmra.mrb[0].mxu0 %v768
      %v1223 = vpop.f32.mrb[0].mxu0
      %v1224 = vadd.f32 %v475, %v1223
      %v1225 = vpop.f32.mrb[0].mxu0
      %v1226 = vpop.f32.mrb[0].mxu0
      %v1227 = vadd.f32 %v475, %v1226
      %v1228 = vpop.f32.mrb[0].mxu0
      %1229 = vmatprep.mubr.bf16.mxu0 0
      %1230 = vmatmul.mubr.bf16.gmra.mrb[0].mxu0 %v769
      %v1231 = vpop.f32.mrb[0].mxu0
      %v1232 = vadd.f32 %v475, %v1231
      %v1233 = vpop.f32.mrb[0].mxu0
      %v1234 = vpop.f32.mrb[0].mxu0
      %v1235 = vadd.f32 %v475, %v1234
      %v1236 = vpop.f32.mrb[0].mxu0
      %1237 = vmatprep.mubr.bf16.mxu0 0
      %1238 = vmatmul.mubr.bf16.gmra.mrb[0].mxu0 %v770
      %v1239 = vpop.f32.mrb[0].mxu0
      %v1240 = vadd.f32 %v475, %v1239
      %v1241 = vpop.f32.mrb[0].mxu0
      %v1242 = vpop.f32.mrb[0].mxu0
      %v1243 = vadd.f32 %v475, %v1242
      %v1244 = vpop.f32.mrb[0].mxu0
      %1245 = vmatprep.mubr.bf16.mxu0 0
      %1246 = vmatmul.mubr.bf16.gmra.mrb[0].mxu0 %v771
      %v1247 = vpop.f32.mrb[0].mxu0
      %v1248 = vadd.f32 %v475, %v1247
      %v1249 = vpop.f32.mrb[0].mxu0
      %v1250 = vpop.f32.mrb[0].mxu0
      %v1251 = vadd.f32 %v475, %v1250
      %v1252 = vpop.f32.mrb[0].mxu0
      %1253 = vmatprep.mubr.bf16.mxu0 0
      %1254 = vmatmul.mubr.bf16.gmra.mrb[0].mxu0 %v772
      %v1255 = vpop.f32.mrb[0].mxu0
      %v1256 = vadd.f32 %v475, %v1255
      %v1257 = vpop.f32.mrb[0].mxu0
      %v1258 = vpop.f32.mrb[0].mxu0
      %v1259 = vadd.f32 %v475, %v1258
      %v1260 = vpop.f32.mrb[0].mxu0
      %1261 = vmatprep.mubr.bf16.mxu0 0
      %1262 = vmatmul.mubr.bf16.gmra.mrb[0].mxu0 %v773
      %v1263 = vpop.f32.mrb[0].mxu0
      %v1264 = vadd.f32 %v475, %v1263
      %v1265 = vpop.f32.mrb[0].mxu0
      %v1266 = vpop.f32.mrb[0].mxu0
      %v1267 = vadd.f32 %v475, %v1266
      %v1268 = vpop.f32.mrb[0].mxu0
      %1269 = vmatprep.mubr.bf16.mxu0 0
      %1270 = vmatmul.mubr.bf16.gmra.mrb[0].mxu0 %v774
      %v1271 = vpop.f32.mrb[0].mxu0
      %v1272 = vadd.f32 %v475, %v1271
      %v1273 = vpop.f32.mrb[0].mxu0
      %v1274 = vpop.f32.mrb[0].mxu0
      %v1275 = vadd.f32 %v475, %v1274
      %v1276 = vpop.f32.mrb[0].mxu0
      %1277 = vmatprep.mubr.bf16.mxu0 0
      %1278 = vmatmul.mubr.bf16.gmra.mrb[0].mxu0 %v775
      %v1279 = vpop.f32.mrb[0].mxu0
      %v1280 = vadd.f32 %v475, %v1279
      %v1281 = vpop.f32.mrb[0].mxu0
      %v1282 = vpop.f32.mrb[0].mxu0
      %v1283 = vadd.f32 %v475, %v1282
      %v1284 = vpop.f32.mrb[0].mxu0
      %1285 = vmatprep.mubr.bf16.mxu0 0
      %1286 = vmatmul.mubr.bf16.gmra.mrb[0].mxu0 %v776
      %v1287 = vpop.f32.mrb[0].mxu0
      %v1288 = vadd.f32 %v475, %v1287
      %v1289 = vpop.f32.mrb[0].mxu0
      %v1290 = vpop.f32.mrb[0].mxu0
      %v1291 = vadd.f32 %v475, %v1290
      %v1292 = vpop.f32.mrb[0].mxu0
      %1293 = vmatprep.mubr.bf16.mxu0 0
      %1294 = vmatmul.mubr.bf16.gmra.mrb[0].mxu0 %v777
      %v1295 = vpop.f32.mrb[0].mxu0
      %v1296 = vadd.f32 %v475, %v1295
      %v1297 = vpop.f32.mrb[0].mxu0
      %v1298 = vpop.f32.mrb[0].mxu0
      %v1299 = vadd.f32 %v475, %v1298
      %v1300 = vpop.f32.mrb[0].mxu0
      %1301 = vmatprep.mubr.bf16.mxu0 0
      %1302 = vmatmul.mubr.bf16.gmra.mrb[0].mxu0 %v778
      %v1303 = vpop.f32.mrb[0].mxu0
      %v1304 = vadd.f32 %v475, %v1303
      %v1305 = vpop.f32.mrb[0].mxu0
      %v1306 = vpop.f32.mrb[0].mxu0
      %v1307 = vadd.f32 %v475, %v1306
      %v1308 = vpop.f32.mrb[0].mxu0
      %1309 = vmatprep.mubr.bf16.mxu0 0
      %1310 = vmatmul.mubr.bf16.gmra.mrb[0].mxu0 %v779
      %v1311 = vpop.f32.mrb[0].mxu0
      %v1312 = vadd.f32 %v475, %v1311
      %v1313 = vpop.f32.mrb[0].mxu0
      %v1314 = vpop.f32.mrb[0].mxu0
      %v1315 = vadd.f32 %v475, %v1314
      %v1316 = vpop.f32.mrb[0].mxu0
      %1317 = vmatprep.mubr.bf16.mxu0 0
      %1318 = vmatmul.mubr.bf16.gmra.mrb[0].mxu0 %v780
      %v1319 = vpop.f32.mrb[0].mxu0
      %v1320 = vadd.f32 %v475, %v1319
      %v1321 = vpop.f32.mrb[0].mxu0
      %v1322 = vpop.f32.mrb[0].mxu0
      %v1323 = vadd.f32 %v475, %v1322
      %v1324 = vpop.f32.mrb[0].mxu0
      %1325 = vmatprep.mubr.bf16.mxu0 0
      %1326 = vmatmul.mubr.bf16.gmra.mrb[0].mxu0 %v781
      %v1327 = vpop.f32.mrb[0].mxu0
      %v1328 = vadd.f32 %v475, %v1327
      %v1329 = vpop.f32.mrb[0].mxu0
      %v1330 = vpop.f32.mrb[0].mxu0
      %v1331 = vadd.f32 %v475, %v1330
      %v1332 = vpop.f32.mrb[0].mxu0
      %1333 = vmatprep.mubr.bf16.mxu0 0
      %1334 = vmatmul.mubr.bf16.gmra.mrb[0].mxu0 %v782
      %v1335 = vpop.f32.mrb[0].mxu0
      %v1336 = vadd.f32 %v475, %v1335
      %v1337 = vpop.f32.mrb[0].mxu0
      %v1338 = vpop.f32.mrb[0].mxu0
      %v1339 = vadd.f32 %v475, %v1338
      %v1340 = vpop.f32.mrb[0].mxu0
      %1341 = vmatprep.mubr.bf16.mxu0 0
      %1342 = vmatmul.mubr.bf16.gmra.mrb[0].mxu0 %v783
      %v1343 = vpop.f32.mrb[0].mxu0
      %v1344 = vadd.f32 %v475, %v1343
      %v1345 = vpop.f32.mrb[0].mxu0
      %v1346 = vpop.f32.mrb[0].mxu0
      %v1347 = vadd.f32 %v475, %v1346
      %v1348 = vpop.f32.mrb[0].mxu0
      %1349 = vmatprep.mubr.bf16.mxu0 0
      %1350 = vmatmul.mubr.bf16.gmra.mrb[0].mxu0 %v784
      %v1351 = vpop.f32.mrb[0].mxu0
      %v1352 = vadd.f32 %v475, %v1351
      %v1353 = vpop.f32.mrb[0].mxu0
      %v1354 = vpop.f32.mrb[0].mxu0
      %v1355 = vadd.f32 %v475, %v1354
      %v1356 = vpop.f32.mrb[0].mxu0
      %1357 = vmatprep.mubr.bf16.mxu0 0
      %1358 = vmatmul.mubr.bf16.gmra.mrb[0].mxu0 %v785
      %v1359 = vpop.f32.mrb[0].mxu0
      %v1360 = vadd.f32 %v475, %v1359
      %v1361 = vpop.f32.mrb[0].mxu0
      %v1362 = vpop.f32.mrb[0].mxu0
      %v1363 = vadd.f32 %v475, %v1362
      %v1364 = vpop.f32.mrb[0].mxu0
      %1365 = vmatprep.mubr.bf16.mxu0 0
      %1366 = vmatmul.mubr.bf16.gmra.mrb[0].mxu0 %v786
      %v1367 = vpop.f32.mrb[0].mxu0
      %v1368 = vadd.f32 %v475, %v1367
      %v1369 = vpop.f32.mrb[0].mxu0
      %v1370 = vpop.f32.mrb[0].mxu0
      %v1371 = vadd.f32 %v475, %v1370
      %v1372 = vpop.f32.mrb[0].mxu0
      %1373 = vmatprep.mubr.bf16.mxu0 0
      %1374 = vmatmul.mubr.bf16.gmra.mrb[0].mxu0 %v787
      %v1375 = vpop.f32.mrb[0].mxu0
      %v1376 = vadd.f32 %v475, %v1375
      %v1377 = vpop.f32.mrb[0].mxu0
      %v1378 = vpop.f32.mrb[0].mxu0
      %v1379 = vadd.f32 %v475, %v1378
      %v1380 = vpop.f32.mrb[0].mxu0
      %1381 = vmatprep.mubr.bf16.mxu0 0
      %1382 = vmatmul.mubr.bf16.gmra.mrb[0].mxu0 %v788
      %v1383 = vpop.f32.mrb[0].mxu0
      %v1384 = vadd.f32 %v475, %v1383
      %v1385 = vpop.f32.mrb[0].mxu0
      %v1386 = vpop.f32.mrb[0].mxu0
      %v1387 = vadd.f32 %v475, %v1386
      %v1388 = vpop.f32.mrb[0].mxu0
      %1389 = vmatprep.mubr.bf16.mxu0 0
      %1390 = vmatmul.mubr.bf16.gmra.mrb[0].mxu0 %v789
      %v1391 = vpop.f32.mrb[0].mxu0
      %v1392 = vadd.f32 %v475, %v1391
      %v1393 = vpop.f32.mrb[0].mxu0
      %v1394 = vpop.f32.mrb[0].mxu0
      %v1395 = vadd.f32 %v475, %v1394
      %v1396 = vpop.f32.mrb[0].mxu0
      %1397 = vmatprep.mubr.bf16.mxu0 0
      %1398 = vmatmul.mubr.bf16.gmra.mrb[0].mxu0 %v790
      %v1399 = vpop.f32.mrb[0].mxu0
      %v1400 = vadd.f32 %v475, %v1399
      %v1401 = vpop.f32.mrb[0].mxu0
      %v1402 = vpop.f32.mrb[0].mxu0
      %v1403 = vadd.f32 %v475, %v1402
      %v1404 = vpop.f32.mrb[0].mxu0
      %1405 = vmatprep.mubr.bf16.mxu0 0
      %1406 = vmatmul.mubr.bf16.gmra.mrb[0].mxu0 %v791
      %v1407 = vpop.f32.mrb[0].mxu0
      %v1408 = vadd.f32 %v475, %v1407
      %v1409 = vpop.f32.mrb[0].mxu0
      %v1410 = vpop.f32.mrb[0].mxu0
      %v1411 = vadd.f32 %v475, %v1410
      %v1412 = vpop.f32.mrb[0].mxu0
      %1413 = vmatprep.mubr.bf16.mxu0 0
      %1414 = vmatmul.mubr.bf16.gmra.mrb[0].mxu0 %v792
      %v1415 = vpop.f32.mrb[0].mxu0
      %v1416 = vadd.f32 %v475, %v1415
      %v1417 = vpop.f32.mrb[0].mxu0
      %v1418 = vpop.f32.mrb[0].mxu0
      %v1419 = vadd.f32 %v475, %v1418
      %v1420 = vpop.f32.mrb[0].mxu0
      %1421 = vmatprep.mubr.bf16.mxu0 0
      %1422 = vmatmul.mubr.bf16.gmra.mrb[0].mxu0 %v793
      %v1423 = vpop.f32.mrb[0].mxu0
      %v1424 = vadd.f32 %v475, %v1423
      %v1425 = vpop.f32.mrb[0].mxu0
      %v1426 = vpop.f32.mrb[0].mxu0
      %v1427 = vadd.f32 %v475, %v1426
      %v1428 = vpop.f32.mrb[0].mxu0
      %1429 = vmatprep.mubr.bf16.mxu0 0
      %1430 = vmatmul.mubr.bf16.gmra.mrb[0].mxu0 %v794
      %v1431 = vpop.f32.mrb[0].mxu0
      %v1432 = vadd.f32 %v475, %v1431
      %v1433 = vpop.f32.mrb[0].mxu0
      %v1434 = vpop.f32.mrb[0].mxu0
      %v1435 = vadd.f32 %v475, %v1434
      %v1436 = vpop.f32.mrb[0].mxu0
      %1437 = vmatprep.mubr.bf16.mxu0 0
      %1438 = vmatmul.mubr.bf16.gmra.mrb[0].mxu0 %v795
      %v1439 = vpop.f32.mrb[0].mxu0
      %v1440 = vadd.f32 %v475, %v1439
      %v1441 = vpop.f32.mrb[0].mxu0
      %v1442 = vpop.f32.mrb[0].mxu0
      %v1443 = vadd.f32 %v475, %v1442
      %v1444 = vpop.f32.mrb[0].mxu0
      %1445 = vmatprep.mubr.bf16.mxu0 0
      %1446 = vmatmul.mubr.bf16.gmra.mrb[0].mxu0 %v796
      %v1447 = vpop.f32.mrb[0].mxu0
      %v1448 = vadd.f32 %v475, %v1447
      %v1449 = vpop.f32.mrb[0].mxu0
      %v1450 = vpop.f32.mrb[0].mxu0
      %v1451 = vadd.f32 %v475, %v1450
      %v1452 = vpop.f32.mrb[0].mxu0
      %1453 = vdwg.mxu0
      %v1454 = vmax.f32 %v944, 0.0
      %v1455 = vmax.f32 %v947, 0.0
      %v1456 = vmax.f32 %v952, 0.0
      %v1457 = vmax.f32 %v955, 0.0
      %v1458 = vmax.f32 %v960, 0.0
      %v1459 = vmax.f32 %v963, 0.0
      %v1460 = vmax.f32 %v968, 0.0
      %v1461 = vmax.f32 %v971, 0.0
      %v1462 = vmax.f32 %v976, 0.0
      %v1463 = vmax.f32 %v979, 0.0
      %v1464 = vmax.f32 %v984, 0.0
      %v1465 = vmax.f32 %v987, 0.0
      %v1466 = vmax.f32 %v992, 0.0
      %v1467 = vmax.f32 %v995, 0.0
      %v1468 = vmax.f32 %v1000, 0.0
      %v1469 = vmax.f32 %v1003, 0.0
      %v1470 = vmax.f32 %v1008, 0.0
      %v1471 = vmax.f32 %v1011, 0.0
      %v1472 = vmax.f32 %v1016, 0.0
      %v1473 = vmax.f32 %v1019, 0.0
      %v1474 = vmax.f32 %v1024, 0.0
      %v1475 = vmax.f32 %v1027, 0.0
      %v1476 = vmax.f32 %v1032, 0.0
      %v1477 = vmax.f32 %v1035, 0.0
      %v1478 = vmax.f32 %v1040, 0.0
      %v1479 = vmax.f32 %v1043, 0.0
      %v1480 = vmax.f32 %v1048, 0.0
      %v1481 = vmax.f32 %v1051, 0.0
      %v1482 = vmax.f32 %v1056, 0.0
      %v1483 = vmax.f32 %v1059, 0.0
      %v1484 = vmax.f32 %v1064, 0.0
      %v1485 = vmax.f32 %v1067, 0.0
      %v1486 = vmax.f32 %v1072, 0.0
      %v1487 = vmax.f32 %v1075, 0.0
      %v1488 = vmax.f32 %v1080, 0.0
      %v1489 = vmax.f32 %v1083, 0.0
      %v1490 = vmax.f32 %v1088, 0.0
      %v1491 = vmax.f32 %v1091, 0.0
      %v1492 = vmax.f32 %v1096, 0.0
      %v1493 = vmax.f32 %v1099, 0.0
      %v1494 = vmax.f32 %v1104, 0.0
      %v1495 = vmax.f32 %v1107, 0.0
      %v1496 = vmax.f32 %v1112, 0.0
      %v1497 = vmax.f32 %v1115, 0.0
      %v1498 = vmax.f32 %v1120, 0.0
      %v1499 = vmax.f32 %v1123, 0.0
      %v1500 = vmax.f32 %v1128, 0.0
      %v1501 = vmax.f32 %v1131, 0.0
      %v1502 = vmax.f32 %v1136, 0.0
      %v1503 = vmax.f32 %v1139, 0.0
      %v1504 = vmax.f32 %v1144, 0.0
      %v1505 = vmax.f32 %v1147, 0.0
      %v1506 = vmax.f32 %v1152, 0.0
      %v1507 = vmax.f32 %v1155, 0.0
      %v1508 = vmax.f32 %v1160, 0.0
      %v1509 = vmax.f32 %v1163, 0.0
      %v1510 = vmax.f32 %v1168, 0.0
      %v1511 = vmax.f32 %v1171, 0.0
      %v1512 = vmax.f32 %v1176, 0.0
      %v1513 = vmax.f32 %v1179, 0.0
      %v1514 = vmax.f32 %v1184, 0.0
      %v1515 = vmax.f32 %v1187, 0.0
      %v1516 = vmax.f32 %v1192, 0.0
      %v1517 = vmax.f32 %v1195, 0.0
      %v1518 = vmax.f32 %v1200, 0.0
      %v1519 = vmax.f32 %v1203, 0.0
      %v1520 = vmax.f32 %v1208, 0.0
      %v1521 = vmax.f32 %v1211, 0.0
      %v1522 = vmax.f32 %v1216, 0.0
      %v1523 = vmax.f32 %v1219, 0.0
      %v1524 = vmax.f32 %v1224, 0.0
      %v1525 = vmax.f32 %v1227, 0.0
      %v1526 = vmax.f32 %v1232, 0.0
      %v1527 = vmax.f32 %v1235, 0.0
      %v1528 = vmax.f32 %v1240, 0.0
      %v1529 = vmax.f32 %v1243, 0.0
      %v1530 = vmax.f32 %v1248, 0.0
      %v1531 = vmax.f32 %v1251, 0.0
      %v1532 = vmax.f32 %v1256, 0.0
      %v1533 = vmax.f32 %v1259, 0.0
      %v1534 = vmax.f32 %v1264, 0.0
      %v1535 = vmax.f32 %v1267, 0.0
      %v1536 = vmax.f32 %v1272, 0.0
      %v1537 = vmax.f32 %v1275, 0.0
      %v1538 = vmax.f32 %v1280, 0.0
      %v1539 = vmax.f32 %v1283, 0.0
      %v1540 = vmax.f32 %v1288, 0.0
      %v1541 = vmax.f32 %v1291, 0.0
      %v1542 = vmax.f32 %v1296, 0.0
      %v1543 = vmax.f32 %v1299, 0.0
      %v1544 = vmax.f32 %v1304, 0.0
      %v1545 = vmax.f32 %v1307, 0.0
      %v1546 = vmax.f32 %v1312, 0.0
      %v1547 = vmax.f32 %v1315, 0.0
      %v1548 = vmax.f32 %v1320, 0.0
      %v1549 = vmax.f32 %v1323, 0.0
      %v1550 = vmax.f32 %v1328, 0.0
      %v1551 = vmax.f32 %v1331, 0.0
      %v1552 = vmax.f32 %v1336, 0.0
      %v1553 = vmax.f32 %v1339, 0.0
      %v1554 = vmax.f32 %v1344, 0.0
      %v1555 = vmax.f32 %v1347, 0.0
      %v1556 = vmax.f32 %v1352, 0.0
      %v1557 = vmax.f32 %v1355, 0.0
      %v1558 = vmax.f32 %v1360, 0.0
      %v1559 = vmax.f32 %v1363, 0.0
      %v1560 = vmax.f32 %v1368, 0.0
      %v1561 = vmax.f32 %v1371, 0.0
      %v1562 = vmax.f32 %v1376, 0.0
      %v1563 = vmax.f32 %v1379, 0.0
      %v1564 = vmax.f32 %v1384, 0.0
      %v1565 = vmax.f32 %v1387, 0.0
      %v1566 = vmax.f32 %v1392, 0.0
      %v1567 = vmax.f32 %v1395, 0.0
      %v1568 = vmax.f32 %v1400, 0.0
      %v1569 = vmax.f32 %v1403, 0.0
      %v1570 = vmax.f32 %v1408, 0.0
      %v1571 = vmax.f32 %v1411, 0.0
      %v1572 = vmax.f32 %v1416, 0.0
      %v1573 = vmax.f32 %v1419, 0.0
      %v1574 = vmax.f32 %v1424, 0.0
      %v1575 = vmax.f32 %v1427, 0.0
      %v1576 = vmax.f32 %v1432, 0.0
      %v1577 = vmax.f32 %v1435, 0.0
      %v1578 = vmax.f32 %v1440, 0.0
      %v1579 = vmax.f32 %v1443, 0.0
      %v1580 = vmax.f32 %v1448, 0.0
      %v1581 = vmax.f32 %v1451, 0.0
      %v1582 = vunpack.c.h.b16 %v438
      %v1583 = vunpack.c.h.b16 %v440
      %v1584 = vunpack.c.h.b16 %v442
      %v1585 = vunpack.c.h.b16 %v444
      %v1586 = vunpack.c.h.b16 %v446
      %v1587 = vunpack.c.h.b16 %v448
      %v1588 = vunpack.c.h.b16 %v450
      %v1589 = vunpack.c.h.b16 %v452
      %v1590 = vunpack.c.h.b16 %v454
      %v1591 = vunpack.c.h.b16 %v456
      %v1592 = vunpack.c.h.b16 %v458
      %v1593 = vunpack.c.h.b16 %v460
      %v1594 = vunpack.c.h.b16 %v462
      %v1595 = vunpack.c.h.b16 %v464
      %v1596 = vunpack.c.h.b16 %v466
      %v1597 = vunpack.c.h.b16 %v468
      %v1598 = vpack.c.b16 %v1583, %v1582
      %v1599 = vpack.c.b16 %v1585, %v1584
      %v1600 = vpack.c.b16 %v1587, %v1586
      %v1601 = vpack.c.b16 %v1589, %v1588
      %v1602 = vpack.c.b16 %v1591, %v1590
      %v1603 = vpack.c.b16 %v1593, %v1592
      %v1604 = vpack.c.b16 %v1595, %v1594
      %v1605 = vpack.c.b16 %v1597, %v1596
      %1614 = vmatprep.subr.bf16.mxu0 0
      %1615 = vmatpush1.bf16.msra.mxu0 %v1598
      %1616 = vmatprep.subr.bf16.mxu0 0
      %1617 = vmatpush1.bf16.msra.mxu0 %v1599
      %1618 = vmatprep.subr.bf16.mxu0 0
      %1619 = vmatpush1.bf16.msra.mxu0 %v1600
      %1620 = vmatprep.subr.bf16.mxu0 0
      %1621 = vmatpush1.bf16.msra.mxu0 %v1601
      %1622 = vmatprep.subr.bf16.mxu0 0
      %1623 = vmatpush1.bf16.msra.mxu0 %v1602
      %1624 = vmatprep.subr.bf16.mxu0 0
      %1625 = vmatpush1.bf16.msra.mxu0 %v1603
      %1626 = vmatprep.subr.bf16.mxu0 0
      %1627 = vmatpush1.bf16.msra.mxu0 %v1604
      %1628 = vmatprep.subr.bf16.mxu0 0
      %1629 = vmatpush1.bf16.msra.mxu0 %v1605
      %1630 = vmatprep.subr.bf16.mxu0 0
      %1631 = vmatpush1.bf16.msra.mxu0 0
      %1632 = vmatprep.subr.bf16.mxu0 0
      %1633 = vmatpush1.bf16.msra.mxu0 0
      %1634 = vmatprep.subr.bf16.mxu0 0
      %1635 = vmatpush1.bf16.msra.mxu0 0
      %1636 = vmatprep.subr.bf16.mxu0 0
      %1637 = vmatpush1.bf16.msra.mxu0 0
      %1638 = vmatprep.subr.bf16.mxu0 0
      %1639 = vmatpush1.bf16.msra.mxu0 0
      %1640 = vmatprep.subr.bf16.mxu0 0
      %1641 = vmatpush1.bf16.msra.mxu0 0
      %1642 = vmatprep.subr.bf16.mxu0 0
      %1643 = vmatpush1.bf16.msra.mxu0 0
      %1644 = vmatprep.subr.bf16.mxu0 0
      %1645 = vmatpush1.bf16.msra.mxu0 0
      %1646 = vmatprep.mubr.bf16.mxu0 0
      %1647 = vmatmul.mubr.bf16.gmra.mrb[0].mxu0 %v733
      %v1648 = vpop.f32.mrb[0].mxu0
      %v1649 = vadd.f32 %v475, %v1648
      %v1650 = vpop.f32.mrb[0].mxu0
      %v1651 = vpop.f32.mrb[0].mxu0
      %v1652 = vadd.f32 %v475, %v1651
      %v1653 = vpop.f32.mrb[0].mxu0
      %1654 = vmatprep.mubr.bf16.mxu0 0
      %1655 = vmatmul.mubr.bf16.gmra.mrb[0].mxu0 %v734
      %v1656 = vpop.f32.mrb[0].mxu0
      %v1657 = vadd.f32 %v475, %v1656
      %v1658 = vpop.f32.mrb[0].mxu0
      %v1659 = vpop.f32.mrb[0].mxu0
      %v1660 = vadd.f32 %v475, %v1659
      %v1661 = vpop.f32.mrb[0].mxu0
      %1662 = vmatprep.mubr.bf16.mxu0 0
      %1663 = vmatmul.mubr.bf16.gmra.mrb[0].mxu0 %v735
      %v1664 = vpop.f32.mrb[0].mxu0
      %v1665 = vadd.f32 %v475, %v1664
      %v1666 = vpop.f32.mrb[0].mxu0
      %v1667 = vpop.f32.mrb[0].mxu0
      %v1668 = vadd.f32 %v475, %v1667
      %v1669 = vpop.f32.mrb[0].mxu0
      %1670 = vmatprep.mubr.bf16.mxu0 0
      %1671 = vmatmul.mubr.bf16.gmra.mrb[0].mxu0 %v736
      %v1672 = vpop.f32.mrb[0].mxu0
      %v1673 = vadd.f32 %v475, %v1672
      %v1674 = vpop.f32.mrb[0].mxu0
      %v1675 = vpop.f32.mrb[0].mxu0
      %v1676 = vadd.f32 %v475, %v1675
      %v1677 = vpop.f32.mrb[0].mxu0
      %1678 = vmatprep.mubr.bf16.mxu0 0
      %1679 = vmatmul.mubr.bf16.gmra.mrb[0].mxu0 %v737
      %v1680 = vpop.f32.mrb[0].mxu0
      %v1681 = vadd.f32 %v475, %v1680
      %v1682 = vpop.f32.mrb[0].mxu0
      %v1683 = vpop.f32.mrb[0].mxu0
      %v1684 = vadd.f32 %v475, %v1683
      %v1685 = vpop.f32.mrb[0].mxu0
      %1686 = vmatprep.mubr.bf16.mxu0 0
      %1687 = vmatmul.mubr.bf16.gmra.mrb[0].mxu0 %v738
      %v1688 = vpop.f32.mrb[0].mxu0
      %v1689 = vadd.f32 %v475, %v1688
      %v1690 = vpop.f32.mrb[0].mxu0
      %v1691 = vpop.f32.mrb[0].mxu0
      %v1692 = vadd.f32 %v475, %v1691
      %v1693 = vpop.f32.mrb[0].mxu0
      %1694 = vmatprep.mubr.bf16.mxu0 0
      %1695 = vmatmul.mubr.bf16.gmra.mrb[0].mxu0 %v739
      %v1696 = vpop.f32.mrb[0].mxu0
      %v1697 = vadd.f32 %v475, %v1696
      %v1698 = vpop.f32.mrb[0].mxu0
      %v1699 = vpop.f32.mrb[0].mxu0
      %v1700 = vadd.f32 %v475, %v1699
      %v1701 = vpop.f32.mrb[0].mxu0
      %1702 = vmatprep.mubr.bf16.mxu0 0
      %1703 = vmatmul.mubr.bf16.gmra.mrb[0].mxu0 %v740
      %v1704 = vpop.f32.mrb[0].mxu0
      %v1705 = vadd.f32 %v475, %v1704
      %v1706 = vpop.f32.mrb[0].mxu0
      %v1707 = vpop.f32.mrb[0].mxu0
      %v1708 = vadd.f32 %v475, %v1707
      %v1709 = vpop.f32.mrb[0].mxu0
      %1710 = vmatprep.mubr.bf16.mxu0 0
      %1711 = vmatmul.mubr.bf16.gmra.mrb[0].mxu0 %v741
      %v1712 = vpop.f32.mrb[0].mxu0
      %v1713 = vadd.f32 %v475, %v1712
      %v1714 = vpop.f32.mrb[0].mxu0
      %v1715 = vpop.f32.mrb[0].mxu0
      %v1716 = vadd.f32 %v475, %v1715
      %v1717 = vpop.f32.mrb[0].mxu0
      %1718 = vmatprep.mubr.bf16.mxu0 0
      %1719 = vmatmul.mubr.bf16.gmra.mrb[0].mxu0 %v742
      %v1720 = vpop.f32.mrb[0].mxu0
      %v1721 = vadd.f32 %v475, %v1720
      %v1722 = vpop.f32.mrb[0].mxu0
      %v1723 = vpop.f32.mrb[0].mxu0
      %v1724 = vadd.f32 %v475, %v1723
      %v1725 = vpop.f32.mrb[0].mxu0
      %1726 = vmatprep.mubr.bf16.mxu0 0
      %1727 = vmatmul.mubr.bf16.gmra.mrb[0].mxu0 %v743
      %v1728 = vpop.f32.mrb[0].mxu0
      %v1729 = vadd.f32 %v475, %v1728
      %v1730 = vpop.f32.mrb[0].mxu0
      %v1731 = vpop.f32.mrb[0].mxu0
      %v1732 = vadd.f32 %v475, %v1731
      %v1733 = vpop.f32.mrb[0].mxu0
      %1734 = vmatprep.mubr.bf16.mxu0 0
      %1735 = vmatmul.mubr.bf16.gmra.mrb[0].mxu0 %v744
      %v1736 = vpop.f32.mrb[0].mxu0
      %v1737 = vadd.f32 %v475, %v1736
      %v1738 = vpop.f32.mrb[0].mxu0
      %v1739 = vpop.f32.mrb[0].mxu0
      %v1740 = vadd.f32 %v475, %v1739
      %v1741 = vpop.f32.mrb[0].mxu0
      %1742 = vmatprep.mubr.bf16.mxu0 0
      %1743 = vmatmul.mubr.bf16.gmra.mrb[0].mxu0 %v745
      %v1744 = vpop.f32.mrb[0].mxu0
      %v1745 = vadd.f32 %v475, %v1744
      %v1746 = vpop.f32.mrb[0].mxu0
      %v1747 = vpop.f32.mrb[0].mxu0
      %v1748 = vadd.f32 %v475, %v1747
      %v1749 = vpop.f32.mrb[0].mxu0
      %1750 = vmatprep.mubr.bf16.mxu0 0
      %1751 = vmatmul.mubr.bf16.gmra.mrb[0].mxu0 %v746
      %v1752 = vpop.f32.mrb[0].mxu0
      %v1753 = vadd.f32 %v475, %v1752
      %v1754 = vpop.f32.mrb[0].mxu0
      %v1755 = vpop.f32.mrb[0].mxu0
      %v1756 = vadd.f32 %v475, %v1755
      %v1757 = vpop.f32.mrb[0].mxu0
      %1758 = vmatprep.mubr.bf16.mxu0 0
      %1759 = vmatmul.mubr.bf16.gmra.mrb[0].mxu0 %v747
      %v1760 = vpop.f32.mrb[0].mxu0
      %v1761 = vadd.f32 %v475, %v1760
      %v1762 = vpop.f32.mrb[0].mxu0
      %v1763 = vpop.f32.mrb[0].mxu0
      %v1764 = vadd.f32 %v475, %v1763
      %v1765 = vpop.f32.mrb[0].mxu0
      %1766 = vmatprep.mubr.bf16.mxu0 0
      %1767 = vmatmul.mubr.bf16.gmra.mrb[0].mxu0 %v748
      %v1768 = vpop.f32.mrb[0].mxu0
      %v1769 = vadd.f32 %v475, %v1768
      %v1770 = vpop.f32.mrb[0].mxu0
      %v1771 = vpop.f32.mrb[0].mxu0
      %v1772 = vadd.f32 %v475, %v1771
      %v1773 = vpop.f32.mrb[0].mxu0
      %1774 = vmatprep.mubr.bf16.mxu0 0
      %1775 = vmatmul.mubr.bf16.gmra.mrb[0].mxu0 %v749
      %v1776 = vpop.f32.mrb[0].mxu0
      %v1777 = vadd.f32 %v475, %v1776
      %v1778 = vpop.f32.mrb[0].mxu0
      %v1779 = vpop.f32.mrb[0].mxu0
      %v1780 = vadd.f32 %v475, %v1779
      %v1781 = vpop.f32.mrb[0].mxu0
      %1782 = vmatprep.mubr.bf16.mxu0 0
      %1783 = vmatmul.mubr.bf16.gmra.mrb[0].mxu0 %v750
      %v1784 = vpop.f32.mrb[0].mxu0
      %v1785 = vadd.f32 %v475, %v1784
      %v1786 = vpop.f32.mrb[0].mxu0
      %v1787 = vpop.f32.mrb[0].mxu0
      %v1788 = vadd.f32 %v475, %v1787
      %v1789 = vpop.f32.mrb[0].mxu0
      %1790 = vmatprep.mubr.bf16.mxu0 0
      %1791 = vmatmul.mubr.bf16.gmra.mrb[0].mxu0 %v751
      %v1792 = vpop.f32.mrb[0].mxu0
      %v1793 = vadd.f32 %v475, %v1792
      %v1794 = vpop.f32.mrb[0].mxu0
      %v1795 = vpop.f32.mrb[0].mxu0
      %v1796 = vadd.f32 %v475, %v1795
      %v1797 = vpop.f32.mrb[0].mxu0
      %1798 = vmatprep.mubr.bf16.mxu0 0
      %1799 = vmatmul.mubr.bf16.gmra.mrb[0].mxu0 %v752
      %v1800 = vpop.f32.mrb[0].mxu0
      %v1801 = vadd.f32 %v475, %v1800
      %v1802 = vpop.f32.mrb[0].mxu0
      %v1803 = vpop.f32.mrb[0].mxu0
      %v1804 = vadd.f32 %v475, %v1803
      %v1805 = vpop.f32.mrb[0].mxu0
      %1806 = vmatprep.mubr.bf16.mxu0 0
      %1807 = vmatmul.mubr.bf16.gmra.mrb[0].mxu0 %v753
      %v1808 = vpop.f32.mrb[0].mxu0
      %v1809 = vadd.f32 %v475, %v1808
      %v1810 = vpop.f32.mrb[0].mxu0
      %v1811 = vpop.f32.mrb[0].mxu0
      %v1812 = vadd.f32 %v475, %v1811
      %v1813 = vpop.f32.mrb[0].mxu0
      %1814 = vmatprep.mubr.bf16.mxu0 0
      %1815 = vmatmul.mubr.bf16.gmra.mrb[0].mxu0 %v754
      %v1816 = vpop.f32.mrb[0].mxu0
      %v1817 = vadd.f32 %v475, %v1816
      %v1818 = vpop.f32.mrb[0].mxu0
      %v1819 = vpop.f32.mrb[0].mxu0
      %v1820 = vadd.f32 %v475, %v1819
      %v1821 = vpop.f32.mrb[0].mxu0
      %1822 = vmatprep.mubr.bf16.mxu0 0
      %1823 = vmatmul.mubr.bf16.gmra.mrb[0].mxu0 %v755
      %v1824 = vpop.f32.mrb[0].mxu0
      %v1825 = vadd.f32 %v475, %v1824
      %v1826 = vpop.f32.mrb[0].mxu0
      %v1827 = vpop.f32.mrb[0].mxu0
      %v1828 = vadd.f32 %v475, %v1827
      %v1829 = vpop.f32.mrb[0].mxu0
      %1830 = vmatprep.mubr.bf16.mxu0 0
      %1831 = vmatmul.mubr.bf16.gmra.mrb[0].mxu0 %v756
      %v1832 = vpop.f32.mrb[0].mxu0
      %v1833 = vadd.f32 %v475, %v1832
      %v1834 = vpop.f32.mrb[0].mxu0
      %v1835 = vpop.f32.mrb[0].mxu0
      %v1836 = vadd.f32 %v475, %v1835
      %v1837 = vpop.f32.mrb[0].mxu0
      %1838 = vmatprep.mubr.bf16.mxu0 0
      %1839 = vmatmul.mubr.bf16.gmra.mrb[0].mxu0 %v757
      %v1840 = vpop.f32.mrb[0].mxu0
      %v1841 = vadd.f32 %v475, %v1840
      %v1842 = vpop.f32.mrb[0].mxu0
      %v1843 = vpop.f32.mrb[0].mxu0
      %v1844 = vadd.f32 %v475, %v1843
      %v1845 = vpop.f32.mrb[0].mxu0
      %1846 = vmatprep.mubr.bf16.mxu0 0
      %1847 = vmatmul.mubr.bf16.gmra.mrb[0].mxu0 %v758
      %v1848 = vpop.f32.mrb[0].mxu0
      %v1849 = vadd.f32 %v475, %v1848
      %v1850 = vpop.f32.mrb[0].mxu0
      %v1851 = vpop.f32.mrb[0].mxu0
      %v1852 = vadd.f32 %v475, %v1851
      %v1853 = vpop.f32.mrb[0].mxu0
      %1854 = vmatprep.mubr.bf16.mxu0 0
      %1855 = vmatmul.mubr.bf16.gmra.mrb[0].mxu0 %v759
      %v1856 = vpop.f32.mrb[0].mxu0
      %v1857 = vadd.f32 %v475, %v1856
      %v1858 = vpop.f32.mrb[0].mxu0
      %v1859 = vpop.f32.mrb[0].mxu0
      %v1860 = vadd.f32 %v475, %v1859
      %v1861 = vpop.f32.mrb[0].mxu0
      %1862 = vmatprep.mubr.bf16.mxu0 0
      %1863 = vmatmul.mubr.bf16.gmra.mrb[0].mxu0 %v760
      %v1864 = vpop.f32.mrb[0].mxu0
      %v1865 = vadd.f32 %v475, %v1864
      %v1866 = vpop.f32.mrb[0].mxu0
      %v1867 = vpop.f32.mrb[0].mxu0
      %v1868 = vadd.f32 %v475, %v1867
      %v1869 = vpop.f32.mrb[0].mxu0
      %1870 = vmatprep.mubr.bf16.mxu0 0
      %1871 = vmatmul.mubr.bf16.gmra.mrb[0].mxu0 %v761
      %v1872 = vpop.f32.mrb[0].mxu0
      %v1873 = vadd.f32 %v475, %v1872
      %v1874 = vpop.f32.mrb[0].mxu0
      %v1875 = vpop.f32.mrb[0].mxu0
      %v1876 = vadd.f32 %v475, %v1875
      %v1877 = vpop.f32.mrb[0].mxu0
      %1878 = vmatprep.mubr.bf16.mxu0 0
      %1879 = vmatmul.mubr.bf16.gmra.mrb[0].mxu0 %v762
      %v1880 = vpop.f32.mrb[0].mxu0
      %v1881 = vadd.f32 %v475, %v1880
      %v1882 = vpop.f32.mrb[0].mxu0
      %v1883 = vpop.f32.mrb[0].mxu0
      %v1884 = vadd.f32 %v475, %v1883
      %v1885 = vpop.f32.mrb[0].mxu0
      %1886 = vmatprep.mubr.bf16.mxu0 0
      %1887 = vmatmul.mubr.bf16.gmra.mrb[0].mxu0 %v763
      %v1888 = vpop.f32.mrb[0].mxu0
      %v1889 = vadd.f32 %v475, %v1888
      %v1890 = vpop.f32.mrb[0].mxu0
      %v1891 = vpop.f32.mrb[0].mxu0
      %v1892 = vadd.f32 %v475, %v1891
      %v1893 = vpop.f32.mrb[0].mxu0
      %1894 = vmatprep.mubr.bf16.mxu0 0
      %1895 = vmatmul.mubr.bf16.gmra.mrb[0].mxu0 %v764
      %v1896 = vpop.f32.mrb[0].mxu0
      %v1897 = vadd.f32 %v475, %v1896
      %v1898 = vpop.f32.mrb[0].mxu0
      %v1899 = vpop.f32.mrb[0].mxu0
      %v1900 = vadd.f32 %v475, %v1899
      %v1901 = vpop.f32.mrb[0].mxu0
      %1902 = vmatprep.mubr.bf16.mxu0 0
      %1903 = vmatmul.mubr.bf16.gmra.mrb[0].mxu0 %v765
      %v1904 = vpop.f32.mrb[0].mxu0
      %v1905 = vadd.f32 %v475, %v1904
      %v1906 = vpop.f32.mrb[0].mxu0
      %v1907 = vpop.f32.mrb[0].mxu0
      %v1908 = vadd.f32 %v475, %v1907
      %v1909 = vpop.f32.mrb[0].mxu0
      %1910 = vmatprep.mubr.bf16.mxu0 0
      %1911 = vmatmul.mubr.bf16.gmra.mrb[0].mxu0 %v766
      %v1912 = vpop.f32.mrb[0].mxu0
      %v1913 = vadd.f32 %v475, %v1912
      %v1914 = vpop.f32.mrb[0].mxu0
      %v1915 = vpop.f32.mrb[0].mxu0
      %v1916 = vadd.f32 %v475, %v1915
      %v1917 = vpop.f32.mrb[0].mxu0
      %1918 = vmatprep.mubr.bf16.mxu0 0
      %1919 = vmatmul.mubr.bf16.gmra.mrb[0].mxu0 %v767
      %v1920 = vpop.f32.mrb[0].mxu0
      %v1921 = vadd.f32 %v475, %v1920
      %v1922 = vpop.f32.mrb[0].mxu0
      %v1923 = vpop.f32.mrb[0].mxu0
      %v1924 = vadd.f32 %v475, %v1923
      %v1925 = vpop.f32.mrb[0].mxu0
      %1926 = vmatprep.mubr.bf16.mxu0 0
      %1927 = vmatmul.mubr.bf16.gmra.mrb[0].mxu0 %v768
      %v1928 = vpop.f32.mrb[0].mxu0
      %v1929 = vadd.f32 %v475, %v1928
      %v1930 = vpop.f32.mrb[0].mxu0
      %v1931 = vpop.f32.mrb[0].mxu0
      %v1932 = vadd.f32 %v475, %v1931
      %v1933 = vpop.f32.mrb[0].mxu0
      %1934 = vmatprep.mubr.bf16.mxu0 0
      %1935 = vmatmul.mubr.bf16.gmra.mrb[0].mxu0 %v769
      %v1936 = vpop.f32.mrb[0].mxu0
      %v1937 = vadd.f32 %v475, %v1936
      %v1938 = vpop.f32.mrb[0].mxu0
      %v1939 = vpop.f32.mrb[0].mxu0
      %v1940 = vadd.f32 %v475, %v1939
      %v1941 = vpop.f32.mrb[0].mxu0
      %1942 = vmatprep.mubr.bf16.mxu0 0
      %1943 = vmatmul.mubr.bf16.gmra.mrb[0].mxu0 %v770
      %v1944 = vpop.f32.mrb[0].mxu0
      %v1945 = vadd.f32 %v475, %v1944
      %v1946 = vpop.f32.mrb[0].mxu0
      %v1947 = vpop.f32.mrb[0].mxu0
      %v1948 = vadd.f32 %v475, %v1947
      %v1949 = vpop.f32.mrb[0].mxu0
      %1950 = vmatprep.mubr.bf16.mxu0 0
      %1951 = vmatmul.mubr.bf16.gmra.mrb[0].mxu0 %v771
      %v1952 = vpop.f32.mrb[0].mxu0
      %v1953 = vadd.f32 %v475, %v1952
      %v1954 = vpop.f32.mrb[0].mxu0
      %v1955 = vpop.f32.mrb[0].mxu0
      %v1956 = vadd.f32 %v475, %v1955
      %v1957 = vpop.f32.mrb[0].mxu0
      %1958 = vmatprep.mubr.bf16.mxu0 0
      %1959 = vmatmul.mubr.bf16.gmra.mrb[0].mxu0 %v772
      %v1960 = vpop.f32.mrb[0].mxu0
      %v1961 = vadd.f32 %v475, %v1960
      %v1962 = vpop.f32.mrb[0].mxu0
      %v1963 = vpop.f32.mrb[0].mxu0
      %v1964 = vadd.f32 %v475, %v1963
      %v1965 = vpop.f32.mrb[0].mxu0
      %1966 = vmatprep.mubr.bf16.mxu0 0
      %1967 = vmatmul.mubr.bf16.gmra.mrb[0].mxu0 %v773
      %v1968 = vpop.f32.mrb[0].mxu0
      %v1969 = vadd.f32 %v475, %v1968
      %v1970 = vpop.f32.mrb[0].mxu0
      %v1971 = vpop.f32.mrb[0].mxu0
      %v1972 = vadd.f32 %v475, %v1971
      %v1973 = vpop.f32.mrb[0].mxu0
      %1974 = vmatprep.mubr.bf16.mxu0 0
      %1975 = vmatmul.mubr.bf16.gmra.mrb[0].mxu0 %v774
      %v1976 = vpop.f32.mrb[0].mxu0
      %v1977 = vadd.f32 %v475, %v1976
      %v1978 = vpop.f32.mrb[0].mxu0
      %v1979 = vpop.f32.mrb[0].mxu0
      %v1980 = vadd.f32 %v475, %v1979
      %v1981 = vpop.f32.mrb[0].mxu0
      %1982 = vmatprep.mubr.bf16.mxu0 0
      %1983 = vmatmul.mubr.bf16.gmra.mrb[0].mxu0 %v775
      %v1984 = vpop.f32.mrb[0].mxu0
      %v1985 = vadd.f32 %v475, %v1984
      %v1986 = vpop.f32.mrb[0].mxu0
      %v1987 = vpop.f32.mrb[0].mxu0
      %v1988 = vadd.f32 %v475, %v1987
      %v1989 = vpop.f32.mrb[0].mxu0
      %1990 = vmatprep.mubr.bf16.mxu0 0
      %1991 = vmatmul.mubr.bf16.gmra.mrb[0].mxu0 %v776
      %v1992 = vpop.f32.mrb[0].mxu0
      %v1993 = vadd.f32 %v475, %v1992
      %v1994 = vpop.f32.mrb[0].mxu0
      %v1995 = vpop.f32.mrb[0].mxu0
      %v1996 = vadd.f32 %v475, %v1995
      %v1997 = vpop.f32.mrb[0].mxu0
      %1998 = vmatprep.mubr.bf16.mxu0 0
      %1999 = vmatmul.mubr.bf16.gmra.mrb[0].mxu0 %v777
      %v2000 = vpop.f32.mrb[0].mxu0
      %v2001 = vadd.f32 %v475, %v2000
      %v2002 = vpop.f32.mrb[0].mxu0
      %v2003 = vpop.f32.mrb[0].mxu0
      %v2004 = vadd.f32 %v475, %v2003
      %v2005 = vpop.f32.mrb[0].mxu0
      %2006 = vmatprep.mubr.bf16.mxu0 0
      %2007 = vmatmul.mubr.bf16.gmra.mrb[0].mxu0 %v778
      %v2008 = vpop.f32.mrb[0].mxu0
      %v2009 = vadd.f32 %v475, %v2008
      %v2010 = vpop.f32.mrb[0].mxu0
      %v2011 = vpop.f32.mrb[0].mxu0
      %v2012 = vadd.f32 %v475, %v2011
      %v2013 = vpop.f32.mrb[0].mxu0
      %2014 = vmatprep.mubr.bf16.mxu0 0
      %2015 = vmatmul.mubr.bf16.gmra.mrb[0].mxu0 %v779
      %v2016 = vpop.f32.mrb[0].mxu0
      %v2017 = vadd.f32 %v475, %v2016
      %v2018 = vpop.f32.mrb[0].mxu0
      %v2019 = vpop.f32.mrb[0].mxu0
      %v2020 = vadd.f32 %v475, %v2019
      %v2021 = vpop.f32.mrb[0].mxu0
      %2022 = vmatprep.mubr.bf16.mxu0 0
      %2023 = vmatmul.mubr.bf16.gmra.mrb[0].mxu0 %v780
      %v2024 = vpop.f32.mrb[0].mxu0
      %v2025 = vadd.f32 %v475, %v2024
      %v2026 = vpop.f32.mrb[0].mxu0
      %v2027 = vpop.f32.mrb[0].mxu0
      %v2028 = vadd.f32 %v475, %v2027
      %v2029 = vpop.f32.mrb[0].mxu0
      %2030 = vmatprep.mubr.bf16.mxu0 0
      %2031 = vmatmul.mubr.bf16.gmra.mrb[0].mxu0 %v781
      %v2032 = vpop.f32.mrb[0].mxu0
      %v2033 = vadd.f32 %v475, %v2032
      %v2034 = vpop.f32.mrb[0].mxu0
      %v2035 = vpop.f32.mrb[0].mxu0
      %v2036 = vadd.f32 %v475, %v2035
      %v2037 = vpop.f32.mrb[0].mxu0
      %2038 = vmatprep.mubr.bf16.mxu0 0
      %2039 = vmatmul.mubr.bf16.gmra.mrb[0].mxu0 %v782
      %v2040 = vpop.f32.mrb[0].mxu0
      %v2041 = vadd.f32 %v475, %v2040
      %v2042 = vpop.f32.mrb[0].mxu0
      %v2043 = vpop.f32.mrb[0].mxu0
      %v2044 = vadd.f32 %v475, %v2043
      %v2045 = vpop.f32.mrb[0].mxu0
      %2046 = vmatprep.mubr.bf16.mxu0 0
      %2047 = vmatmul.mubr.bf16.gmra.mrb[0].mxu0 %v783
      %v2048 = vpop.f32.mrb[0].mxu0
      %v2049 = vadd.f32 %v475, %v2048
      %v2050 = vpop.f32.mrb[0].mxu0
      %v2051 = vpop.f32.mrb[0].mxu0
      %v2052 = vadd.f32 %v475, %v2051
      %v2053 = vpop.f32.mrb[0].mxu0
      %2054 = vmatprep.mubr.bf16.mxu0 0
      %2055 = vmatmul.mubr.bf16.gmra.mrb[0].mxu0 %v784
      %v2056 = vpop.f32.mrb[0].mxu0
      %v2057 = vadd.f32 %v475, %v2056
      %v2058 = vpop.f32.mrb[0].mxu0
      %v2059 = vpop.f32.mrb[0].mxu0
      %v2060 = vadd.f32 %v475, %v2059
      %v2061 = vpop.f32.mrb[0].mxu0
      %2062 = vmatprep.mubr.bf16.mxu0 0
      %2063 = vmatmul.mubr.bf16.gmra.mrb[0].mxu0 %v785
      %v2064 = vpop.f32.mrb[0].mxu0
      %v2065 = vadd.f32 %v475, %v2064
      %v2066 = vpop.f32.mrb[0].mxu0
      %v2067 = vpop.f32.mrb[0].mxu0
      %v2068 = vadd.f32 %v475, %v2067
      %v2069 = vpop.f32.mrb[0].mxu0
      %2070 = vmatprep.mubr.bf16.mxu0 0
      %2071 = vmatmul.mubr.bf16.gmra.mrb[0].mxu0 %v786
      %v2072 = vpop.f32.mrb[0].mxu0
      %v2073 = vadd.f32 %v475, %v2072
      %v2074 = vpop.f32.mrb[0].mxu0
      %v2075 = vpop.f32.mrb[0].mxu0
      %v2076 = vadd.f32 %v475, %v2075
      %v2077 = vpop.f32.mrb[0].mxu0
      %2078 = vmatprep.mubr.bf16.mxu0 0
      %2079 = vmatmul.mubr.bf16.gmra.mrb[0].mxu0 %v787
      %v2080 = vpop.f32.mrb[0].mxu0
      %v2081 = vadd.f32 %v475, %v2080
      %v2082 = vpop.f32.mrb[0].mxu0
      %v2083 = vpop.f32.mrb[0].mxu0
      %v2084 = vadd.f32 %v475, %v2083
      %v2085 = vpop.f32.mrb[0].mxu0
      %2086 = vmatprep.mubr.bf16.mxu0 0
      %2087 = vmatmul.mubr.bf16.gmra.mrb[0].mxu0 %v788
      %v2088 = vpop.f32.mrb[0].mxu0
      %v2089 = vadd.f32 %v475, %v2088
      %v2090 = vpop.f32.mrb[0].mxu0
      %v2091 = vpop.f32.mrb[0].mxu0
      %v2092 = vadd.f32 %v475, %v2091
      %v2093 = vpop.f32.mrb[0].mxu0
      %2094 = vmatprep.mubr.bf16.mxu0 0
      %2095 = vmatmul.mubr.bf16.gmra.mrb[0].mxu0 %v789
      %v2096 = vpop.f32.mrb[0].mxu0
      %v2097 = vadd.f32 %v475, %v2096
      %v2098 = vpop.f32.mrb[0].mxu0
      %v2099 = vpop.f32.mrb[0].mxu0
      %v2100 = vadd.f32 %v475, %v2099
      %v2101 = vpop.f32.mrb[0].mxu0
      %2102 = vmatprep.mubr.bf16.mxu0 0
      %2103 = vmatmul.mubr.bf16.gmra.mrb[0].mxu0 %v790
      %v2104 = vpop.f32.mrb[0].mxu0
      %v2105 = vadd.f32 %v475, %v2104
      %v2106 = vpop.f32.mrb[0].mxu0
      %v2107 = vpop.f32.mrb[0].mxu0
      %v2108 = vadd.f32 %v475, %v2107
      %v2109 = vpop.f32.mrb[0].mxu0
      %2110 = vmatprep.mubr.bf16.mxu0 0
      %2111 = vmatmul.mubr.bf16.gmra.mrb[0].mxu0 %v791
      %v2112 = vpop.f32.mrb[0].mxu0
      %v2113 = vadd.f32 %v475, %v2112
      %v2114 = vpop.f32.mrb[0].mxu0
      %v2115 = vpop.f32.mrb[0].mxu0
      %v2116 = vadd.f32 %v475, %v2115
      %v2117 = vpop.f32.mrb[0].mxu0
      %2118 = vmatprep.mubr.bf16.mxu0 0
      %2119 = vmatmul.mubr.bf16.gmra.mrb[0].mxu0 %v792
      %v2120 = vpop.f32.mrb[0].mxu0
      %v2121 = vadd.f32 %v475, %v2120
      %v2122 = vpop.f32.mrb[0].mxu0
      %v2123 = vpop.f32.mrb[0].mxu0
      %v2124 = vadd.f32 %v475, %v2123
      %v2125 = vpop.f32.mrb[0].mxu0
      %2126 = vmatprep.mubr.bf16.mxu0 0
      %2127 = vmatmul.mubr.bf16.gmra.mrb[0].mxu0 %v793
      %v2128 = vpop.f32.mrb[0].mxu0
      %v2129 = vadd.f32 %v475, %v2128
      %v2130 = vpop.f32.mrb[0].mxu0
      %v2131 = vpop.f32.mrb[0].mxu0
      %v2132 = vadd.f32 %v475, %v2131
      %v2133 = vpop.f32.mrb[0].mxu0
      %2134 = vmatprep.mubr.bf16.mxu0 0
      %2135 = vmatmul.mubr.bf16.gmra.mrb[0].mxu0 %v794
      %v2136 = vpop.f32.mrb[0].mxu0
      %v2137 = vadd.f32 %v475, %v2136
      %v2138 = vpop.f32.mrb[0].mxu0
      %v2139 = vpop.f32.mrb[0].mxu0
      %v2140 = vadd.f32 %v475, %v2139
      %v2141 = vpop.f32.mrb[0].mxu0
      %2142 = vmatprep.mubr.bf16.mxu0 0
      %2143 = vmatmul.mubr.bf16.gmra.mrb[0].mxu0 %v795
      %v2144 = vpop.f32.mrb[0].mxu0
      %v2145 = vadd.f32 %v475, %v2144
      %v2146 = vpop.f32.mrb[0].mxu0
      %v2147 = vpop.f32.mrb[0].mxu0
      %v2148 = vadd.f32 %v475, %v2147
      %v2149 = vpop.f32.mrb[0].mxu0
      %2150 = vmatprep.mubr.bf16.mxu0 0
      %2151 = vmatmul.mubr.bf16.gmra.mrb[0].mxu0 %v796
      %v2152 = vpop.f32.mrb[0].mxu0
      %v2153 = vadd.f32 %v475, %v2152
      %v2154 = vpop.f32.mrb[0].mxu0
      %v2155 = vpop.f32.mrb[0].mxu0
      %v2156 = vadd.f32 %v475, %v2155
      %v2157 = vpop.f32.mrb[0].mxu0
      %2158 = vdwg.mxu0
      %v2159 = vmax.f32 %v1649, 0.0
      %v2160 = vmax.f32 %v1652, 0.0
      %v2161 = vmax.f32 %v1657, 0.0
      %v2162 = vmax.f32 %v1660, 0.0
      %v2163 = vmax.f32 %v1665, 0.0
      %v2164 = vmax.f32 %v1668, 0.0
      %v2165 = vmax.f32 %v1673, 0.0
      %v2166 = vmax.f32 %v1676, 0.0
      %v2167 = vmax.f32 %v1681, 0.0
      %v2168 = vmax.f32 %v1684, 0.0
      %v2169 = vmax.f32 %v1689, 0.0
      %v2170 = vmax.f32 %v1692, 0.0
      %v2171 = vmax.f32 %v1697, 0.0
      %v2172 = vmax.f32 %v1700, 0.0
      %v2173 = vmax.f32 %v1705, 0.0
      %v2174 = vmax.f32 %v1708, 0.0
      %v2175 = vmax.f32 %v1713, 0.0
      %v2176 = vmax.f32 %v1716, 0.0
      %v2177 = vmax.f32 %v1721, 0.0
      %v2178 = vmax.f32 %v1724, 0.0
      %v2179 = vmax.f32 %v1729, 0.0
      %v2180 = vmax.f32 %v1732, 0.0
      %v2181 = vmax.f32 %v1737, 0.0
      %v2182 = vmax.f32 %v1740, 0.0
      %v2183 = vmax.f32 %v1745, 0.0
      %v2184 = vmax.f32 %v1748, 0.0
      %v2185 = vmax.f32 %v1753, 0.0
      %v2186 = vmax.f32 %v1756, 0.0
      %v2187 = vmax.f32 %v1761, 0.0
      %v2188 = vmax.f32 %v1764, 0.0
      %v2189 = vmax.f32 %v1769, 0.0
      %v2190 = vmax.f32 %v1772, 0.0
      %v2191 = vmax.f32 %v1777, 0.0
      %v2192 = vmax.f32 %v1780, 0.0
      %v2193 = vmax.f32 %v1785, 0.0
      %v2194 = vmax.f32 %v1788, 0.0
      %v2195 = vmax.f32 %v1793, 0.0
      %v2196 = vmax.f32 %v1796, 0.0
      %v2197 = vmax.f32 %v1801, 0.0
      %v2198 = vmax.f32 %v1804, 0.0
      %v2199 = vmax.f32 %v1809, 0.0
      %v2200 = vmax.f32 %v1812, 0.0
      %v2201 = vmax.f32 %v1817, 0.0
      %v2202 = vmax.f32 %v1820, 0.0
      %v2203 = vmax.f32 %v1825, 0.0
      %v2204 = vmax.f32 %v1828, 0.0
      %v2205 = vmax.f32 %v1833, 0.0
      %v2206 = vmax.f32 %v1836, 0.0
      %v2207 = vmax.f32 %v1841, 0.0
      %v2208 = vmax.f32 %v1844, 0.0
      %v2209 = vmax.f32 %v1849, 0.0
      %v2210 = vmax.f32 %v1852, 0.0
      %v2211 = vmax.f32 %v1857, 0.0
      %v2212 = vmax.f32 %v1860, 0.0
      %v2213 = vmax.f32 %v1865, 0.0
      %v2214 = vmax.f32 %v1868, 0.0
      %v2215 = vmax.f32 %v1873, 0.0
      %v2216 = vmax.f32 %v1876, 0.0
      %v2217 = vmax.f32 %v1881, 0.0
      %v2218 = vmax.f32 %v1884, 0.0
      %v2219 = vmax.f32 %v1889, 0.0
      %v2220 = vmax.f32 %v1892, 0.0
      %v2221 = vmax.f32 %v1897, 0.0
      %v2222 = vmax.f32 %v1900, 0.0
      %v2223 = vmax.f32 %v1905, 0.0
      %v2224 = vmax.f32 %v1908, 0.0
      %v2225 = vmax.f32 %v1913, 0.0
      %v2226 = vmax.f32 %v1916, 0.0
      %v2227 = vmax.f32 %v1921, 0.0
      %v2228 = vmax.f32 %v1924, 0.0
      %v2229 = vmax.f32 %v1929, 0.0
      %v2230 = vmax.f32 %v1932, 0.0
      %v2231 = vmax.f32 %v1937, 0.0
      %v2232 = vmax.f32 %v1940, 0.0
      %v2233 = vmax.f32 %v1945, 0.0
      %v2234 = vmax.f32 %v1948, 0.0
      %v2235 = vmax.f32 %v1953, 0.0
      %v2236 = vmax.f32 %v1956, 0.0
      %v2237 = vmax.f32 %v1961, 0.0
      %v2238 = vmax.f32 %v1964, 0.0
      %v2239 = vmax.f32 %v1969, 0.0
      %v2240 = vmax.f32 %v1972, 0.0
      %v2241 = vmax.f32 %v1977, 0.0
      %v2242 = vmax.f32 %v1980, 0.0
      %v2243 = vmax.f32 %v1985, 0.0
      %v2244 = vmax.f32 %v1988, 0.0
      %v2245 = vmax.f32 %v1993, 0.0
      %v2246 = vmax.f32 %v1996, 0.0
      %v2247 = vmax.f32 %v2001, 0.0
      %v2248 = vmax.f32 %v2004, 0.0
      %v2249 = vmax.f32 %v2009, 0.0
      %v2250 = vmax.f32 %v2012, 0.0
      %v2251 = vmax.f32 %v2017, 0.0
      %v2252 = vmax.f32 %v2020, 0.0
      %v2253 = vmax.f32 %v2025, 0.0
      %v2254 = vmax.f32 %v2028, 0.0
      %v2255 = vmax.f32 %v2033, 0.0
      %v2256 = vmax.f32 %v2036, 0.0
      %v2257 = vmax.f32 %v2041, 0.0
      %v2258 = vmax.f32 %v2044, 0.0
      %v2259 = vmax.f32 %v2049, 0.0
      %v2260 = vmax.f32 %v2052, 0.0
      %v2261 = vmax.f32 %v2057, 0.0
      %v2262 = vmax.f32 %v2060, 0.0
      %v2263 = vmax.f32 %v2065, 0.0
      %v2264 = vmax.f32 %v2068, 0.0
      %v2265 = vmax.f32 %v2073, 0.0
      %v2266 = vmax.f32 %v2076, 0.0
      %v2267 = vmax.f32 %v2081, 0.0
      %v2268 = vmax.f32 %v2084, 0.0
      %v2269 = vmax.f32 %v2089, 0.0
      %v2270 = vmax.f32 %v2092, 0.0
      %v2271 = vmax.f32 %v2097, 0.0
      %v2272 = vmax.f32 %v2100, 0.0
      %v2273 = vmax.f32 %v2105, 0.0
      %v2274 = vmax.f32 %v2108, 0.0
      %v2275 = vmax.f32 %v2113, 0.0
      %v2276 = vmax.f32 %v2116, 0.0
      %v2277 = vmax.f32 %v2121, 0.0
      %v2278 = vmax.f32 %v2124, 0.0
      %v2279 = vmax.f32 %v2129, 0.0
      %v2280 = vmax.f32 %v2132, 0.0
      %v2281 = vmax.f32 %v2137, 0.0
      %v2282 = vmax.f32 %v2140, 0.0
      %v2283 = vmax.f32 %v2145, 0.0
      %v2284 = vmax.f32 %v2148, 0.0
      %v2285 = vmax.f32 %v2153, 0.0
      %v2286 = vmax.f32 %v2156, 0.0
      %v2287 = vmax.f32 %v1454, %v2159
      %v2288 = vmax.f32 %v1455, %v2160
      %v2289 = vmax.f32 %v1456, %v2161
      %v2290 = vmax.f32 %v1457, %v2162
      %v2291 = vmax.f32 %v1458, %v2163
      %v2292 = vmax.f32 %v1459, %v2164
      %v2293 = vmax.f32 %v1460, %v2165
      %v2294 = vmax.f32 %v1461, %v2166
      %v2295 = vmax.f32 %v1462, %v2167
      %v2296 = vmax.f32 %v1463, %v2168
      %v2297 = vmax.f32 %v1464, %v2169
      %v2298 = vmax.f32 %v1465, %v2170
      %v2299 = vmax.f32 %v1466, %v2171
      %v2300 = vmax.f32 %v1467, %v2172
      %v2301 = vmax.f32 %v1468, %v2173
      %v2302 = vmax.f32 %v1469, %v2174
      %v2303 = vmax.f32 %v1470, %v2175
      %v2304 = vmax.f32 %v1471, %v2176
      %v2305 = vmax.f32 %v1472, %v2177
      %v2306 = vmax.f32 %v1473, %v2178
      %v2307 = vmax.f32 %v1474, %v2179
      %v2308 = vmax.f32 %v1475, %v2180
      %v2309 = vmax.f32 %v1476, %v2181
      %v2310 = vmax.f32 %v1477, %v2182
      %v2311 = vmax.f32 %v1478, %v2183
      %v2312 = vmax.f32 %v1479, %v2184
      %v2313 = vmax.f32 %v1480, %v2185
      %v2314 = vmax.f32 %v1481, %v2186
      %v2315 = vmax.f32 %v1482, %v2187
      %v2316 = vmax.f32 %v1483, %v2188
      %v2317 = vmax.f32 %v1484, %v2189
      %v2318 = vmax.f32 %v1485, %v2190
      %v2319 = vmax.f32 %v1486, %v2191
      %v2320 = vmax.f32 %v1487, %v2192
      %v2321 = vmax.f32 %v1488, %v2193
      %v2322 = vmax.f32 %v1489, %v2194
      %v2323 = vmax.f32 %v1490, %v2195
      %v2324 = vmax.f32 %v1491, %v2196
      %v2325 = vmax.f32 %v1492, %v2197
      %v2326 = vmax.f32 %v1493, %v2198
      %v2327 = vmax.f32 %v1494, %v2199
      %v2328 = vmax.f32 %v1495, %v2200
      %v2329 = vmax.f32 %v1496, %v2201
      %v2330 = vmax.f32 %v1497, %v2202
      %v2331 = vmax.f32 %v1498, %v2203
      %v2332 = vmax.f32 %v1499, %v2204
      %v2333 = vmax.f32 %v1500, %v2205
      %v2334 = vmax.f32 %v1501, %v2206
      %v2335 = vmax.f32 %v1502, %v2207
      %v2336 = vmax.f32 %v1503, %v2208
      %v2337 = vmax.f32 %v1504, %v2209
      %v2338 = vmax.f32 %v1505, %v2210
      %v2339 = vmax.f32 %v1506, %v2211
      %v2340 = vmax.f32 %v1507, %v2212
      %v2341 = vmax.f32 %v1508, %v2213
      %v2342 = vmax.f32 %v1509, %v2214
      %v2343 = vmax.f32 %v1510, %v2215
      %v2344 = vmax.f32 %v1511, %v2216
      %v2345 = vmax.f32 %v1512, %v2217
      %v2346 = vmax.f32 %v1513, %v2218
      %v2347 = vmax.f32 %v1514, %v2219
      %v2348 = vmax.f32 %v1515, %v2220
      %v2349 = vmax.f32 %v1516, %v2221
      %v2350 = vmax.f32 %v1517, %v2222
      %v2351 = vmax.f32 %v1518, %v2223
      %v2352 = vmax.f32 %v1519, %v2224
      %v2353 = vmax.f32 %v1520, %v2225
      %v2354 = vmax.f32 %v1521, %v2226
      %v2355 = vmax.f32 %v1522, %v2227
      %v2356 = vmax.f32 %v1523, %v2228
      %v2357 = vmax.f32 %v1524, %v2229
      %v2358 = vmax.f32 %v1525, %v2230
      %v2359 = vmax.f32 %v1526, %v2231
      %v2360 = vmax.f32 %v1527, %v2232
      %v2361 = vmax.f32 %v1528, %v2233
      %v2362 = vmax.f32 %v1529, %v2234
      %v2363 = vmax.f32 %v1530, %v2235
      %v2364 = vmax.f32 %v1531, %v2236
      %v2365 = vmax.f32 %v1532, %v2237
      %v2366 = vmax.f32 %v1533, %v2238
      %v2367 = vmax.f32 %v1534, %v2239
      %v2368 = vmax.f32 %v1535, %v2240
      %v2369 = vmax.f32 %v1536, %v2241
      %v2370 = vmax.f32 %v1537, %v2242
      %v2371 = vmax.f32 %v1538, %v2243
      %v2372 = vmax.f32 %v1539, %v2244
      %v2373 = vmax.f32 %v1540, %v2245
      %v2374 = vmax.f32 %v1541, %v2246
      %v2375 = vmax.f32 %v1542, %v2247
      %v2376 = vmax.f32 %v1543, %v2248
      %v2377 = vmax.f32 %v1544, %v2249
      %v2378 = vmax.f32 %v1545, %v2250
      %v2379 = vmax.f32 %v1546, %v2251
      %v2380 = vmax.f32 %v1547, %v2252
      %v2381 = vmax.f32 %v1548, %v2253
      %v2382 = vmax.f32 %v1549, %v2254
      %v2383 = vmax.f32 %v1550, %v2255
      %v2384 = vmax.f32 %v1551, %v2256
      %v2385 = vmax.f32 %v1552, %v2257
      %v2386 = vmax.f32 %v1553, %v2258
      %v2387 = vmax.f32 %v1554, %v2259
      %v2388 = vmax.f32 %v1555, %v2260
      %v2389 = vmax.f32 %v1556, %v2261
      %v2390 = vmax.f32 %v1557, %v2262
      %v2391 = vmax.f32 %v1558, %v2263
      %v2392 = vmax.f32 %v1559, %v2264
      %v2393 = vmax.f32 %v1560, %v2265
      %v2394 = vmax.f32 %v1561, %v2266
      %v2395 = vmax.f32 %v1562, %v2267
      %v2396 = vmax.f32 %v1563, %v2268
      %v2397 = vmax.f32 %v1564, %v2269
      %v2398 = vmax.f32 %v1565, %v2270
      %v2399 = vmax.f32 %v1566, %v2271
      %v2400 = vmax.f32 %v1567, %v2272
      %v2401 = vmax.f32 %v1568, %v2273
      %v2402 = vmax.f32 %v1569, %v2274
      %v2403 = vmax.f32 %v1570, %v2275
      %v2404 = vmax.f32 %v1571, %v2276
      %v2405 = vmax.f32 %v1572, %v2277
      %v2406 = vmax.f32 %v1573, %v2278
      %v2407 = vmax.f32 %v1574, %v2279
      %v2408 = vmax.f32 %v1575, %v2280
      %v2409 = vmax.f32 %v1576, %v2281
      %v2410 = vmax.f32 %v1577, %v2282
      %v2411 = vmax.f32 %v1578, %v2283
      %v2412 = vmax.f32 %v1579, %v2284
      %v2413 = vmax.f32 %v1580, %v2285
      %v2414 = vmax.f32 %v1581, %v2286
      %v2431 = vunpack.c.l.b16 %v439
      %v2432 = vunpack.c.l.b16 %v441
      %v2433 = vunpack.c.l.b16 %v443
      %v2434 = vunpack.c.l.b16 %v445
      %v2435 = vunpack.c.l.b16 %v447
      %v2436 = vunpack.c.l.b16 %v449
      %v2437 = vunpack.c.l.b16 %v451
      %v2438 = vunpack.c.l.b16 %v453
      %v2439 = vunpack.c.l.b16 %v455
      %v2440 = vunpack.c.l.b16 %v457
      %v2441 = vunpack.c.l.b16 %v459
      %v2442 = vunpack.c.l.b16 %v461
      %v2443 = vunpack.c.l.b16 %v463
      %v2444 = vunpack.c.l.b16 %v465
      %v2445 = vunpack.c.l.b16 %v467
      %v2446 = vunpack.c.l.b16 %v469
      %v2447 = vpack.c.b16 %v2432, %v2431
      %v2448 = vpack.c.b16 %v2434, %v2433
      %v2449 = vpack.c.b16 %v2436, %v2435
      %v2450 = vpack.c.b16 %v2438, %v2437
      %v2451 = vpack.c.b16 %v2440, %v2439
      %v2452 = vpack.c.b16 %v2442, %v2441
      %v2453 = vpack.c.b16 %v2444, %v2443
      %v2454 = vpack.c.b16 %v2446, %v2445
      %2463 = vmatprep.subr.bf16.mxu0 0
      %2464 = vmatpush1.bf16.msra.mxu0 %v2447
      %2465 = vmatprep.subr.bf16.mxu0 0
      %2466 = vmatpush1.bf16.msra.mxu0 %v2448
      %2467 = vmatprep.subr.bf16.mxu0 0
      %2468 = vmatpush1.bf16.msra.mxu0 %v2449
      %2469 = vmatprep.subr.bf16.mxu0 0
      %2470 = vmatpush1.bf16.msra.mxu0 %v2450
      %2471 = vmatprep.subr.bf16.mxu0 0
      %2472 = vmatpush1.bf16.msra.mxu0 %v2451
      %2473 = vmatprep.subr.bf16.mxu0 0
      %2474 = vmatpush1.bf16.msra.mxu0 %v2452
      %2475 = vmatprep.subr.bf16.mxu0 0
      %2476 = vmatpush1.bf16.msra.mxu0 %v2453
      %2477 = vmatprep.subr.bf16.mxu0 0
      %2478 = vmatpush1.bf16.msra.mxu0 %v2454
      %2479 = vmatprep.subr.bf16.mxu0 0
      %2480 = vmatpush1.bf16.msra.mxu0 0
      %2481 = vmatprep.subr.bf16.mxu0 0
      %2482 = vmatpush1.bf16.msra.mxu0 0
      %2483 = vmatprep.subr.bf16.mxu0 0
      %2484 = vmatpush1.bf16.msra.mxu0 0
      %2485 = vmatprep.subr.bf16.mxu0 0
      %2486 = vmatpush1.bf16.msra.mxu0 0
      %2487 = vmatprep.subr.bf16.mxu0 0
      %2488 = vmatpush1.bf16.msra.mxu0 0
      %2489 = vmatprep.subr.bf16.mxu0 0
      %2490 = vmatpush1.bf16.msra.mxu0 0
      %2491 = vmatprep.subr.bf16.mxu0 0
      %2492 = vmatpush1.bf16.msra.mxu0 0
      %2493 = vmatprep.subr.bf16.mxu0 0
      %2494 = vmatpush1.bf16.msra.mxu0 0
      %2495 = vmatprep.mubr.bf16.mxu0 0
      %2496 = vmatmul.mubr.bf16.gmra.mrb[0].mxu0 %v733
      %v2497 = vpop.f32.mrb[0].mxu0
      %v2498 = vadd.f32 %v475, %v2497
      %v2499 = vpop.f32.mrb[0].mxu0
      %v2500 = vpop.f32.mrb[0].mxu0
      %v2501 = vadd.f32 %v475, %v2500
      %v2502 = vpop.f32.mrb[0].mxu0
      %2503 = vmatprep.mubr.bf16.mxu0 0
      %2504 = vmatmul.mubr.bf16.gmra.mrb[0].mxu0 %v734
      %v2505 = vpop.f32.mrb[0].mxu0
      %v2506 = vadd.f32 %v475, %v2505
      %v2507 = vpop.f32.mrb[0].mxu0
      %v2508 = vpop.f32.mrb[0].mxu0
      %v2509 = vadd.f32 %v475, %v2508
      %v2510 = vpop.f32.mrb[0].mxu0
      %2511 = vmatprep.mubr.bf16.mxu0 0
      %2512 = vmatmul.mubr.bf16.gmra.mrb[0].mxu0 %v735
      %v2513 = vpop.f32.mrb[0].mxu0
      %v2514 = vadd.f32 %v475, %v2513
      %v2515 = vpop.f32.mrb[0].mxu0
      %v2516 = vpop.f32.mrb[0].mxu0
      %v2517 = vadd.f32 %v475, %v2516
      %v2518 = vpop.f32.mrb[0].mxu0
      %2519 = vmatprep.mubr.bf16.mxu0 0
      %2520 = vmatmul.mubr.bf16.gmra.mrb[0].mxu0 %v736
      %v2521 = vpop.f32.mrb[0].mxu0
      %v2522 = vadd.f32 %v475, %v2521
      %v2523 = vpop.f32.mrb[0].mxu0
      %v2524 = vpop.f32.mrb[0].mxu0
      %v2525 = vadd.f32 %v475, %v2524
      %v2526 = vpop.f32.mrb[0].mxu0
      %2527 = vmatprep.mubr.bf16.mxu0 0
      %2528 = vmatmul.mubr.bf16.gmra.mrb[0].mxu0 %v737
      %v2529 = vpop.f32.mrb[0].mxu0
      %v2530 = vadd.f32 %v475, %v2529
      %v2531 = vpop.f32.mrb[0].mxu0
      %v2532 = vpop.f32.mrb[0].mxu0
      %v2533 = vadd.f32 %v475, %v2532
      %v2534 = vpop.f32.mrb[0].mxu0
      %2535 = vmatprep.mubr.bf16.mxu0 0
      %2536 = vmatmul.mubr.bf16.gmra.mrb[0].mxu0 %v738
      %v2537 = vpop.f32.mrb[0].mxu0
      %v2538 = vadd.f32 %v475, %v2537
      %v2539 = vpop.f32.mrb[0].mxu0
      %v2540 = vpop.f32.mrb[0].mxu0
      %v2541 = vadd.f32 %v475, %v2540
      %v2542 = vpop.f32.mrb[0].mxu0
      %2543 = vmatprep.mubr.bf16.mxu0 0
      %2544 = vmatmul.mubr.bf16.gmra.mrb[0].mxu0 %v739
      %v2545 = vpop.f32.mrb[0].mxu0
      %v2546 = vadd.f32 %v475, %v2545
      %v2547 = vpop.f32.mrb[0].mxu0
      %v2548 = vpop.f32.mrb[0].mxu0
      %v2549 = vadd.f32 %v475, %v2548
      %v2550 = vpop.f32.mrb[0].mxu0
      %2551 = vmatprep.mubr.bf16.mxu0 0
      %2552 = vmatmul.mubr.bf16.gmra.mrb[0].mxu0 %v740
      %v2553 = vpop.f32.mrb[0].mxu0
      %v2554 = vadd.f32 %v475, %v2553
      %v2555 = vpop.f32.mrb[0].mxu0
      %v2556 = vpop.f32.mrb[0].mxu0
      %v2557 = vadd.f32 %v475, %v2556
      %v2558 = vpop.f32.mrb[0].mxu0
      %2559 = vmatprep.mubr.bf16.mxu0 0
      %2560 = vmatmul.mubr.bf16.gmra.mrb[0].mxu0 %v741
      %v2561 = vpop.f32.mrb[0].mxu0
      %v2562 = vadd.f32 %v475, %v2561
      %v2563 = vpop.f32.mrb[0].mxu0
      %v2564 = vpop.f32.mrb[0].mxu0
      %v2565 = vadd.f32 %v475, %v2564
      %v2566 = vpop.f32.mrb[0].mxu0
      %2567 = vmatprep.mubr.bf16.mxu0 0
      %2568 = vmatmul.mubr.bf16.gmra.mrb[0].mxu0 %v742
      %v2569 = vpop.f32.mrb[0].mxu0
      %v2570 = vadd.f32 %v475, %v2569
      %v2571 = vpop.f32.mrb[0].mxu0
      %v2572 = vpop.f32.mrb[0].mxu0
      %v2573 = vadd.f32 %v475, %v2572
      %v2574 = vpop.f32.mrb[0].mxu0
      %2575 = vmatprep.mubr.bf16.mxu0 0
      %2576 = vmatmul.mubr.bf16.gmra.mrb[0].mxu0 %v743
      %v2577 = vpop.f32.mrb[0].mxu0
      %v2578 = vadd.f32 %v475, %v2577
      %v2579 = vpop.f32.mrb[0].mxu0
      %v2580 = vpop.f32.mrb[0].mxu0
      %v2581 = vadd.f32 %v475, %v2580
      %v2582 = vpop.f32.mrb[0].mxu0
      %2583 = vmatprep.mubr.bf16.mxu0 0
      %2584 = vmatmul.mubr.bf16.gmra.mrb[0].mxu0 %v744
      %v2585 = vpop.f32.mrb[0].mxu0
      %v2586 = vadd.f32 %v475, %v2585
      %v2587 = vpop.f32.mrb[0].mxu0
      %v2588 = vpop.f32.mrb[0].mxu0
      %v2589 = vadd.f32 %v475, %v2588
      %v2590 = vpop.f32.mrb[0].mxu0
      %2591 = vmatprep.mubr.bf16.mxu0 0
      %2592 = vmatmul.mubr.bf16.gmra.mrb[0].mxu0 %v745
      %v2593 = vpop.f32.mrb[0].mxu0
      %v2594 = vadd.f32 %v475, %v2593
      %v2595 = vpop.f32.mrb[0].mxu0
      %v2596 = vpop.f32.mrb[0].mxu0
      %v2597 = vadd.f32 %v475, %v2596
      %v2598 = vpop.f32.mrb[0].mxu0
      %2599 = vmatprep.mubr.bf16.mxu0 0
      %2600 = vmatmul.mubr.bf16.gmra.mrb[0].mxu0 %v746
      %v2601 = vpop.f32.mrb[0].mxu0
      %v2602 = vadd.f32 %v475, %v2601
      %v2603 = vpop.f32.mrb[0].mxu0
      %v2604 = vpop.f32.mrb[0].mxu0
      %v2605 = vadd.f32 %v475, %v2604
      %v2606 = vpop.f32.mrb[0].mxu0
      %2607 = vmatprep.mubr.bf16.mxu0 0
      %2608 = vmatmul.mubr.bf16.gmra.mrb[0].mxu0 %v747
      %v2609 = vpop.f32.mrb[0].mxu0
      %v2610 = vadd.f32 %v475, %v2609
      %v2611 = vpop.f32.mrb[0].mxu0
      %v2612 = vpop.f32.mrb[0].mxu0
      %v2613 = vadd.f32 %v475, %v2612
      %v2614 = vpop.f32.mrb[0].mxu0
      %2615 = vmatprep.mubr.bf16.mxu0 0
      %2616 = vmatmul.mubr.bf16.gmra.mrb[0].mxu0 %v748
      %v2617 = vpop.f32.mrb[0].mxu0
      %v2618 = vadd.f32 %v475, %v2617
      %v2619 = vpop.f32.mrb[0].mxu0
      %v2620 = vpop.f32.mrb[0].mxu0
      %v2621 = vadd.f32 %v475, %v2620
      %v2622 = vpop.f32.mrb[0].mxu0
      %2623 = vmatprep.mubr.bf16.mxu0 0
      %2624 = vmatmul.mubr.bf16.gmra.mrb[0].mxu0 %v749
      %v2625 = vpop.f32.mrb[0].mxu0
      %v2626 = vadd.f32 %v475, %v2625
      %v2627 = vpop.f32.mrb[0].mxu0
      %v2628 = vpop.f32.mrb[0].mxu0
      %v2629 = vadd.f32 %v475, %v2628
      %v2630 = vpop.f32.mrb[0].mxu0
      %2631 = vmatprep.mubr.bf16.mxu0 0
      %2632 = vmatmul.mubr.bf16.gmra.mrb[0].mxu0 %v750
      %v2633 = vpop.f32.mrb[0].mxu0
      %v2634 = vadd.f32 %v475, %v2633
      %v2635 = vpop.f32.mrb[0].mxu0
      %v2636 = vpop.f32.mrb[0].mxu0
      %v2637 = vadd.f32 %v475, %v2636
      %v2638 = vpop.f32.mrb[0].mxu0
      %2639 = vmatprep.mubr.bf16.mxu0 0
      %2640 = vmatmul.mubr.bf16.gmra.mrb[0].mxu0 %v751
      %v2641 = vpop.f32.mrb[0].mxu0
      %v2642 = vadd.f32 %v475, %v2641
      %v2643 = vpop.f32.mrb[0].mxu0
      %v2644 = vpop.f32.mrb[0].mxu0
      %v2645 = vadd.f32 %v475, %v2644
      %v2646 = vpop.f32.mrb[0].mxu0
      %2647 = vmatprep.mubr.bf16.mxu0 0
      %2648 = vmatmul.mubr.bf16.gmra.mrb[0].mxu0 %v752
      %v2649 = vpop.f32.mrb[0].mxu0
      %v2650 = vadd.f32 %v475, %v2649
      %v2651 = vpop.f32.mrb[0].mxu0
      %v2652 = vpop.f32.mrb[0].mxu0
      %v2653 = vadd.f32 %v475, %v2652
      %v2654 = vpop.f32.mrb[0].mxu0
      %2655 = vmatprep.mubr.bf16.mxu0 0
      %2656 = vmatmul.mubr.bf16.gmra.mrb[0].mxu0 %v753
      %v2657 = vpop.f32.mrb[0].mxu0
      %v2658 = vadd.f32 %v475, %v2657
      %v2659 = vpop.f32.mrb[0].mxu0
      %v2660 = vpop.f32.mrb[0].mxu0
      %v2661 = vadd.f32 %v475, %v2660
      %v2662 = vpop.f32.mrb[0].mxu0
      %2663 = vmatprep.mubr.bf16.mxu0 0
      %2664 = vmatmul.mubr.bf16.gmra.mrb[0].mxu0 %v754
      %v2665 = vpop.f32.mrb[0].mxu0
      %v2666 = vadd.f32 %v475, %v2665
      %v2667 = vpop.f32.mrb[0].mxu0
      %v2668 = vpop.f32.mrb[0].mxu0
      %v2669 = vadd.f32 %v475, %v2668
      %v2670 = vpop.f32.mrb[0].mxu0
      %2671 = vmatprep.mubr.bf16.mxu0 0
      %2672 = vmatmul.mubr.bf16.gmra.mrb[0].mxu0 %v755
      %v2673 = vpop.f32.mrb[0].mxu0
      %v2674 = vadd.f32 %v475, %v2673
      %v2675 = vpop.f32.mrb[0].mxu0
      %v2676 = vpop.f32.mrb[0].mxu0
      %v2677 = vadd.f32 %v475, %v2676
      %v2678 = vpop.f32.mrb[0].mxu0
      %2679 = vmatprep.mubr.bf16.mxu0 0
      %2680 = vmatmul.mubr.bf16.gmra.mrb[0].mxu0 %v756
      %v2681 = vpop.f32.mrb[0].mxu0
      %v2682 = vadd.f32 %v475, %v2681
      %v2683 = vpop.f32.mrb[0].mxu0
      %v2684 = vpop.f32.mrb[0].mxu0
      %v2685 = vadd.f32 %v475, %v2684
      %v2686 = vpop.f32.mrb[0].mxu0
      %2687 = vmatprep.mubr.bf16.mxu0 0
      %2688 = vmatmul.mubr.bf16.gmra.mrb[0].mxu0 %v757
      %v2689 = vpop.f32.mrb[0].mxu0
      %v2690 = vadd.f32 %v475, %v2689
      %v2691 = vpop.f32.mrb[0].mxu0
      %v2692 = vpop.f32.mrb[0].mxu0
      %v2693 = vadd.f32 %v475, %v2692
      %v2694 = vpop.f32.mrb[0].mxu0
      %2695 = vmatprep.mubr.bf16.mxu0 0
      %2696 = vmatmul.mubr.bf16.gmra.mrb[0].mxu0 %v758
      %v2697 = vpop.f32.mrb[0].mxu0
      %v2698 = vadd.f32 %v475, %v2697
      %v2699 = vpop.f32.mrb[0].mxu0
      %v2700 = vpop.f32.mrb[0].mxu0
      %v2701 = vadd.f32 %v475, %v2700
      %v2702 = vpop.f32.mrb[0].mxu0
      %2703 = vmatprep.mubr.bf16.mxu0 0
      %2704 = vmatmul.mubr.bf16.gmra.mrb[0].mxu0 %v759
      %v2705 = vpop.f32.mrb[0].mxu0
      %v2706 = vadd.f32 %v475, %v2705
      %v2707 = vpop.f32.mrb[0].mxu0
      %v2708 = vpop.f32.mrb[0].mxu0
      %v2709 = vadd.f32 %v475, %v2708
      %v2710 = vpop.f32.mrb[0].mxu0
      %2711 = vmatprep.mubr.bf16.mxu0 0
      %2712 = vmatmul.mubr.bf16.gmra.mrb[0].mxu0 %v760
      %v2713 = vpop.f32.mrb[0].mxu0
      %v2714 = vadd.f32 %v475, %v2713
      %v2715 = vpop.f32.mrb[0].mxu0
      %v2716 = vpop.f32.mrb[0].mxu0
      %v2717 = vadd.f32 %v475, %v2716
      %v2718 = vpop.f32.mrb[0].mxu0
      %2719 = vmatprep.mubr.bf16.mxu0 0
      %2720 = vmatmul.mubr.bf16.gmra.mrb[0].mxu0 %v761
      %v2721 = vpop.f32.mrb[0].mxu0
      %v2722 = vadd.f32 %v475, %v2721
      %v2723 = vpop.f32.mrb[0].mxu0
      %v2724 = vpop.f32.mrb[0].mxu0
      %v2725 = vadd.f32 %v475, %v2724
      %v2726 = vpop.f32.mrb[0].mxu0
      %2727 = vmatprep.mubr.bf16.mxu0 0
      %2728 = vmatmul.mubr.bf16.gmra.mrb[0].mxu0 %v762
      %v2729 = vpop.f32.mrb[0].mxu0
      %v2730 = vadd.f32 %v475, %v2729
      %v2731 = vpop.f32.mrb[0].mxu0
      %v2732 = vpop.f32.mrb[0].mxu0
      %v2733 = vadd.f32 %v475, %v2732
      %v2734 = vpop.f32.mrb[0].mxu0
      %2735 = vmatprep.mubr.bf16.mxu0 0
      %2736 = vmatmul.mubr.bf16.gmra.mrb[0].mxu0 %v763
      %v2737 = vpop.f32.mrb[0].mxu0
      %v2738 = vadd.f32 %v475, %v2737
      %v2739 = vpop.f32.mrb[0].mxu0
      %v2740 = vpop.f32.mrb[0].mxu0
      %v2741 = vadd.f32 %v475, %v2740
      %v2742 = vpop.f32.mrb[0].mxu0
      %2743 = vmatprep.mubr.bf16.mxu0 0
      %2744 = vmatmul.mubr.bf16.gmra.mrb[0].mxu0 %v764
      %v2745 = vpop.f32.mrb[0].mxu0
      %v2746 = vadd.f32 %v475, %v2745
      %v2747 = vpop.f32.mrb[0].mxu0
      %v2748 = vpop.f32.mrb[0].mxu0
      %v2749 = vadd.f32 %v475, %v2748
      %v2750 = vpop.f32.mrb[0].mxu0
      %2751 = vmatprep.mubr.bf16.mxu0 0
      %2752 = vmatmul.mubr.bf16.gmra.mrb[0].mxu0 %v765
      %v2753 = vpop.f32.mrb[0].mxu0
      %v2754 = vadd.f32 %v475, %v2753
      %v2755 = vpop.f32.mrb[0].mxu0
      %v2756 = vpop.f32.mrb[0].mxu0
      %v2757 = vadd.f32 %v475, %v2756
      %v2758 = vpop.f32.mrb[0].mxu0
      %2759 = vmatprep.mubr.bf16.mxu0 0
      %2760 = vmatmul.mubr.bf16.gmra.mrb[0].mxu0 %v766
      %v2761 = vpop.f32.mrb[0].mxu0
      %v2762 = vadd.f32 %v475, %v2761
      %v2763 = vpop.f32.mrb[0].mxu0
      %v2764 = vpop.f32.mrb[0].mxu0
      %v2765 = vadd.f32 %v475, %v2764
      %v2766 = vpop.f32.mrb[0].mxu0
      %2767 = vmatprep.mubr.bf16.mxu0 0
      %2768 = vmatmul.mubr.bf16.gmra.mrb[0].mxu0 %v767
      %v2769 = vpop.f32.mrb[0].mxu0
      %v2770 = vadd.f32 %v475, %v2769
      %v2771 = vpop.f32.mrb[0].mxu0
      %v2772 = vpop.f32.mrb[0].mxu0
      %v2773 = vadd.f32 %v475, %v2772
      %v2774 = vpop.f32.mrb[0].mxu0
      %2775 = vmatprep.mubr.bf16.mxu0 0
      %2776 = vmatmul.mubr.bf16.gmra.mrb[0].mxu0 %v768
      %v2777 = vpop.f32.mrb[0].mxu0
      %v2778 = vadd.f32 %v475, %v2777
      %v2779 = vpop.f32.mrb[0].mxu0
      %v2780 = vpop.f32.mrb[0].mxu0
      %v2781 = vadd.f32 %v475, %v2780
      %v2782 = vpop.f32.mrb[0].mxu0
      %2783 = vmatprep.mubr.bf16.mxu0 0
      %2784 = vmatmul.mubr.bf16.gmra.mrb[0].mxu0 %v769
      %v2785 = vpop.f32.mrb[0].mxu0
      %v2786 = vadd.f32 %v475, %v2785
      %v2787 = vpop.f32.mrb[0].mxu0
      %v2788 = vpop.f32.mrb[0].mxu0
      %v2789 = vadd.f32 %v475, %v2788
      %v2790 = vpop.f32.mrb[0].mxu0
      %2791 = vmatprep.mubr.bf16.mxu0 0
      %2792 = vmatmul.mubr.bf16.gmra.mrb[0].mxu0 %v770
      %v2793 = vpop.f32.mrb[0].mxu0
      %v2794 = vadd.f32 %v475, %v2793
      %v2795 = vpop.f32.mrb[0].mxu0
      %v2796 = vpop.f32.mrb[0].mxu0
      %v2797 = vadd.f32 %v475, %v2796
      %v2798 = vpop.f32.mrb[0].mxu0
      %2799 = vmatprep.mubr.bf16.mxu0 0
      %2800 = vmatmul.mubr.bf16.gmra.mrb[0].mxu0 %v771
      %v2801 = vpop.f32.mrb[0].mxu0
      %v2802 = vadd.f32 %v475, %v2801
      %v2803 = vpop.f32.mrb[0].mxu0
      %v2804 = vpop.f32.mrb[0].mxu0
      %v2805 = vadd.f32 %v475, %v2804
      %v2806 = vpop.f32.mrb[0].mxu0
      %2807 = vmatprep.mubr.bf16.mxu0 0
      %2808 = vmatmul.mubr.bf16.gmra.mrb[0].mxu0 %v772
      %v2809 = vpop.f32.mrb[0].mxu0
      %v2810 = vadd.f32 %v475, %v2809
      %v2811 = vpop.f32.mrb[0].mxu0
      %v2812 = vpop.f32.mrb[0].mxu0
      %v2813 = vadd.f32 %v475, %v2812
      %v2814 = vpop.f32.mrb[0].mxu0
      %2815 = vmatprep.mubr.bf16.mxu0 0
      %2816 = vmatmul.mubr.bf16.gmra.mrb[0].mxu0 %v773
      %v2817 = vpop.f32.mrb[0].mxu0
      %v2818 = vadd.f32 %v475, %v2817
      %v2819 = vpop.f32.mrb[0].mxu0
      %v2820 = vpop.f32.mrb[0].mxu0
      %v2821 = vadd.f32 %v475, %v2820
      %v2822 = vpop.f32.mrb[0].mxu0
      %2823 = vmatprep.mubr.bf16.mxu0 0
      %2824 = vmatmul.mubr.bf16.gmra.mrb[0].mxu0 %v774
      %v2825 = vpop.f32.mrb[0].mxu0
      %v2826 = vadd.f32 %v475, %v2825
      %v2827 = vpop.f32.mrb[0].mxu0
      %v2828 = vpop.f32.mrb[0].mxu0
      %v2829 = vadd.f32 %v475, %v2828
      %v2830 = vpop.f32.mrb[0].mxu0
      %2831 = vmatprep.mubr.bf16.mxu0 0
      %2832 = vmatmul.mubr.bf16.gmra.mrb[0].mxu0 %v775
      %v2833 = vpop.f32.mrb[0].mxu0
      %v2834 = vadd.f32 %v475, %v2833
      %v2835 = vpop.f32.mrb[0].mxu0
      %v2836 = vpop.f32.mrb[0].mxu0
      %v2837 = vadd.f32 %v475, %v2836
      %v2838 = vpop.f32.mrb[0].mxu0
      %2839 = vmatprep.mubr.bf16.mxu0 0
      %2840 = vmatmul.mubr.bf16.gmra.mrb[0].mxu0 %v776
      %v2841 = vpop.f32.mrb[0].mxu0
      %v2842 = vadd.f32 %v475, %v2841
      %v2843 = vpop.f32.mrb[0].mxu0
      %v2844 = vpop.f32.mrb[0].mxu0
      %v2845 = vadd.f32 %v475, %v2844
      %v2846 = vpop.f32.mrb[0].mxu0
      %2847 = vmatprep.mubr.bf16.mxu0 0
      %2848 = vmatmul.mubr.bf16.gmra.mrb[0].mxu0 %v777
      %v2849 = vpop.f32.mrb[0].mxu0
      %v2850 = vadd.f32 %v475, %v2849
      %v2851 = vpop.f32.mrb[0].mxu0
      %v2852 = vpop.f32.mrb[0].mxu0
      %v2853 = vadd.f32 %v475, %v2852
      %v2854 = vpop.f32.mrb[0].mxu0
      %2855 = vmatprep.mubr.bf16.mxu0 0
      %2856 = vmatmul.mubr.bf16.gmra.mrb[0].mxu0 %v778
      %v2857 = vpop.f32.mrb[0].mxu0
      %v2858 = vadd.f32 %v475, %v2857
      %v2859 = vpop.f32.mrb[0].mxu0
      %v2860 = vpop.f32.mrb[0].mxu0
      %v2861 = vadd.f32 %v475, %v2860
      %v2862 = vpop.f32.mrb[0].mxu0
      %2863 = vmatprep.mubr.bf16.mxu0 0
      %2864 = vmatmul.mubr.bf16.gmra.mrb[0].mxu0 %v779
      %v2865 = vpop.f32.mrb[0].mxu0
      %v2866 = vadd.f32 %v475, %v2865
      %v2867 = vpop.f32.mrb[0].mxu0
      %v2868 = vpop.f32.mrb[0].mxu0
      %v2869 = vadd.f32 %v475, %v2868
      %v2870 = vpop.f32.mrb[0].mxu0
      %2871 = vmatprep.mubr.bf16.mxu0 0
      %2872 = vmatmul.mubr.bf16.gmra.mrb[0].mxu0 %v780
      %v2873 = vpop.f32.mrb[0].mxu0
      %v2874 = vadd.f32 %v475, %v2873
      %v2875 = vpop.f32.mrb[0].mxu0
      %v2876 = vpop.f32.mrb[0].mxu0
      %v2877 = vadd.f32 %v475, %v2876
      %v2878 = vpop.f32.mrb[0].mxu0
      %2879 = vmatprep.mubr.bf16.mxu0 0
      %2880 = vmatmul.mubr.bf16.gmra.mrb[0].mxu0 %v781
      %v2881 = vpop.f32.mrb[0].mxu0
      %v2882 = vadd.f32 %v475, %v2881
      %v2883 = vpop.f32.mrb[0].mxu0
      %v2884 = vpop.f32.mrb[0].mxu0
      %v2885 = vadd.f32 %v475, %v2884
      %v2886 = vpop.f32.mrb[0].mxu0
      %2887 = vmatprep.mubr.bf16.mxu0 0
      %2888 = vmatmul.mubr.bf16.gmra.mrb[0].mxu0 %v782
      %v2889 = vpop.f32.mrb[0].mxu0
      %v2890 = vadd.f32 %v475, %v2889
      %v2891 = vpop.f32.mrb[0].mxu0
      %v2892 = vpop.f32.mrb[0].mxu0
      %v2893 = vadd.f32 %v475, %v2892
      %v2894 = vpop.f32.mrb[0].mxu0
      %2895 = vmatprep.mubr.bf16.mxu0 0
      %2896 = vmatmul.mubr.bf16.gmra.mrb[0].mxu0 %v783
      %v2897 = vpop.f32.mrb[0].mxu0
      %v2898 = vadd.f32 %v475, %v2897
      %v2899 = vpop.f32.mrb[0].mxu0
      %v2900 = vpop.f32.mrb[0].mxu0
      %v2901 = vadd.f32 %v475, %v2900
      %v2902 = vpop.f32.mrb[0].mxu0
      %2903 = vmatprep.mubr.bf16.mxu0 0
      %2904 = vmatmul.mubr.bf16.gmra.mrb[0].mxu0 %v784
      %v2905 = vpop.f32.mrb[0].mxu0
      %v2906 = vadd.f32 %v475, %v2905
      %v2907 = vpop.f32.mrb[0].mxu0
      %v2908 = vpop.f32.mrb[0].mxu0
      %v2909 = vadd.f32 %v475, %v2908
      %v2910 = vpop.f32.mrb[0].mxu0
      %2911 = vmatprep.mubr.bf16.mxu0 0
      %2912 = vmatmul.mubr.bf16.gmra.mrb[0].mxu0 %v785
      %v2913 = vpop.f32.mrb[0].mxu0
      %v2914 = vadd.f32 %v475, %v2913
      %v2915 = vpop.f32.mrb[0].mxu0
      %v2916 = vpop.f32.mrb[0].mxu0
      %v2917 = vadd.f32 %v475, %v2916
      %v2918 = vpop.f32.mrb[0].mxu0
      %2919 = vmatprep.mubr.bf16.mxu0 0
      %2920 = vmatmul.mubr.bf16.gmra.mrb[0].mxu0 %v786
      %v2921 = vpop.f32.mrb[0].mxu0
      %v2922 = vadd.f32 %v475, %v2921
      %v2923 = vpop.f32.mrb[0].mxu0
      %v2924 = vpop.f32.mrb[0].mxu0
      %v2925 = vadd.f32 %v475, %v2924
      %v2926 = vpop.f32.mrb[0].mxu0
      %2927 = vmatprep.mubr.bf16.mxu0 0
      %2928 = vmatmul.mubr.bf16.gmra.mrb[0].mxu0 %v787
      %v2929 = vpop.f32.mrb[0].mxu0
      %v2930 = vadd.f32 %v475, %v2929
      %v2931 = vpop.f32.mrb[0].mxu0
      %v2932 = vpop.f32.mrb[0].mxu0
      %v2933 = vadd.f32 %v475, %v2932
      %v2934 = vpop.f32.mrb[0].mxu0
      %2935 = vmatprep.mubr.bf16.mxu0 0
      %2936 = vmatmul.mubr.bf16.gmra.mrb[0].mxu0 %v788
      %v2937 = vpop.f32.mrb[0].mxu0
      %v2938 = vadd.f32 %v475, %v2937
      %v2939 = vpop.f32.mrb[0].mxu0
      %v2940 = vpop.f32.mrb[0].mxu0
      %v2941 = vadd.f32 %v475, %v2940
      %v2942 = vpop.f32.mrb[0].mxu0
      %2943 = vmatprep.mubr.bf16.mxu0 0
      %2944 = vmatmul.mubr.bf16.gmra.mrb[0].mxu0 %v789
      %v2945 = vpop.f32.mrb[0].mxu0
      %v2946 = vadd.f32 %v475, %v2945
      %v2947 = vpop.f32.mrb[0].mxu0
      %v2948 = vpop.f32.mrb[0].mxu0
      %v2949 = vadd.f32 %v475, %v2948
      %v2950 = vpop.f32.mrb[0].mxu0
      %2951 = vmatprep.mubr.bf16.mxu0 0
      %2952 = vmatmul.mubr.bf16.gmra.mrb[0].mxu0 %v790
      %v2953 = vpop.f32.mrb[0].mxu0
      %v2954 = vadd.f32 %v475, %v2953
      %v2955 = vpop.f32.mrb[0].mxu0
      %v2956 = vpop.f32.mrb[0].mxu0
      %v2957 = vadd.f32 %v475, %v2956
      %v2958 = vpop.f32.mrb[0].mxu0
      %2959 = vmatprep.mubr.bf16.mxu0 0
      %2960 = vmatmul.mubr.bf16.gmra.mrb[0].mxu0 %v791
      %v2961 = vpop.f32.mrb[0].mxu0
      %v2962 = vadd.f32 %v475, %v2961
      %v2963 = vpop.f32.mrb[0].mxu0
      %v2964 = vpop.f32.mrb[0].mxu0
      %v2965 = vadd.f32 %v475, %v2964
      %v2966 = vpop.f32.mrb[0].mxu0
      %2967 = vmatprep.mubr.bf16.mxu0 0
      %2968 = vmatmul.mubr.bf16.gmra.mrb[0].mxu0 %v792
      %v2969 = vpop.f32.mrb[0].mxu0
      %v2970 = vadd.f32 %v475, %v2969
      %v2971 = vpop.f32.mrb[0].mxu0
      %v2972 = vpop.f32.mrb[0].mxu0
      %v2973 = vadd.f32 %v475, %v2972
      %v2974 = vpop.f32.mrb[0].mxu0
      %2975 = vmatprep.mubr.bf16.mxu0 0
      %2976 = vmatmul.mubr.bf16.gmra.mrb[0].mxu0 %v793
      %v2977 = vpop.f32.mrb[0].mxu0
      %v2978 = vadd.f32 %v475, %v2977
      %v2979 = vpop.f32.mrb[0].mxu0
      %v2980 = vpop.f32.mrb[0].mxu0
      %v2981 = vadd.f32 %v475, %v2980
      %v2982 = vpop.f32.mrb[0].mxu0
      %2983 = vmatprep.mubr.bf16.mxu0 0
      %2984 = vmatmul.mubr.bf16.gmra.mrb[0].mxu0 %v794
      %v2985 = vpop.f32.mrb[0].mxu0
      %v2986 = vadd.f32 %v475, %v2985
      %v2987 = vpop.f32.mrb[0].mxu0
      %v2988 = vpop.f32.mrb[0].mxu0
      %v2989 = vadd.f32 %v475, %v2988
      %v2990 = vpop.f32.mrb[0].mxu0
      %2991 = vmatprep.mubr.bf16.mxu0 0
      %2992 = vmatmul.mubr.bf16.gmra.mrb[0].mxu0 %v795
      %v2993 = vpop.f32.mrb[0].mxu0
      %v2994 = vadd.f32 %v475, %v2993
      %v2995 = vpop.f32.mrb[0].mxu0
      %v2996 = vpop.f32.mrb[0].mxu0
      %v2997 = vadd.f32 %v475, %v2996
      %v2998 = vpop.f32.mrb[0].mxu0
      %2999 = vmatprep.mubr.bf16.mxu0 0
      %3000 = vmatmul.mubr.bf16.gmra.mrb[0].mxu0 %v796
      %v3001 = vpop.f32.mrb[0].mxu0
      %v3002 = vadd.f32 %v475, %v3001
      %v3003 = vpop.f32.mrb[0].mxu0
      %v3004 = vpop.f32.mrb[0].mxu0
      %v3005 = vadd.f32 %v475, %v3004
      %v3006 = vpop.f32.mrb[0].mxu0
      %3007 = vdwg.mxu0
      %v3008 = vmax.f32 %v2498, 0.0
      %v3009 = vmax.f32 %v2501, 0.0
      %v3010 = vmax.f32 %v2506, 0.0
      %v3011 = vmax.f32 %v2509, 0.0
      %v3012 = vmax.f32 %v2514, 0.0
      %v3013 = vmax.f32 %v2517, 0.0
      %v3014 = vmax.f32 %v2522, 0.0
      %v3015 = vmax.f32 %v2525, 0.0
      %v3016 = vmax.f32 %v2530, 0.0
      %v3017 = vmax.f32 %v2533, 0.0
      %v3018 = vmax.f32 %v2538, 0.0
      %v3019 = vmax.f32 %v2541, 0.0
      %v3020 = vmax.f32 %v2546, 0.0
      %v3021 = vmax.f32 %v2549, 0.0
      %v3022 = vmax.f32 %v2554, 0.0
      %v3023 = vmax.f32 %v2557, 0.0
      %v3024 = vmax.f32 %v2562, 0.0
      %v3025 = vmax.f32 %v2565, 0.0
      %v3026 = vmax.f32 %v2570, 0.0
      %v3027 = vmax.f32 %v2573, 0.0
      %v3028 = vmax.f32 %v2578, 0.0
      %v3029 = vmax.f32 %v2581, 0.0
      %v3030 = vmax.f32 %v2586, 0.0
      %v3031 = vmax.f32 %v2589, 0.0
      %v3032 = vmax.f32 %v2594, 0.0
      %v3033 = vmax.f32 %v2597, 0.0
      %v3034 = vmax.f32 %v2602, 0.0
      %v3035 = vmax.f32 %v2605, 0.0
      %v3036 = vmax.f32 %v2610, 0.0
      %v3037 = vmax.f32 %v2613, 0.0
      %v3038 = vmax.f32 %v2618, 0.0
      %v3039 = vmax.f32 %v2621, 0.0
      %v3040 = vmax.f32 %v2626, 0.0
      %v3041 = vmax.f32 %v2629, 0.0
      %v3042 = vmax.f32 %v2634, 0.0
      %v3043 = vmax.f32 %v2637, 0.0
      %v3044 = vmax.f32 %v2642, 0.0
      %v3045 = vmax.f32 %v2645, 0.0
      %v3046 = vmax.f32 %v2650, 0.0
      %v3047 = vmax.f32 %v2653, 0.0
      %v3048 = vmax.f32 %v2658, 0.0
      %v3049 = vmax.f32 %v2661, 0.0
      %v3050 = vmax.f32 %v2666, 0.0
      %v3051 = vmax.f32 %v2669, 0.0
      %v3052 = vmax.f32 %v2674, 0.0
      %v3053 = vmax.f32 %v2677, 0.0
      %v3054 = vmax.f32 %v2682, 0.0
      %v3055 = vmax.f32 %v2685, 0.0
      %v3056 = vmax.f32 %v2690, 0.0
      %v3057 = vmax.f32 %v2693, 0.0
      %v3058 = vmax.f32 %v2698, 0.0
      %v3059 = vmax.f32 %v2701, 0.0
      %v3060 = vmax.f32 %v2706, 0.0
      %v3061 = vmax.f32 %v2709, 0.0
      %v3062 = vmax.f32 %v2714, 0.0
      %v3063 = vmax.f32 %v2717, 0.0
      %v3064 = vmax.f32 %v2722, 0.0
      %v3065 = vmax.f32 %v2725, 0.0
      %v3066 = vmax.f32 %v2730, 0.0
      %v3067 = vmax.f32 %v2733, 0.0
      %v3068 = vmax.f32 %v2738, 0.0
      %v3069 = vmax.f32 %v2741, 0.0
      %v3070 = vmax.f32 %v2746, 0.0
      %v3071 = vmax.f32 %v2749, 0.0
      %v3072 = vmax.f32 %v2754, 0.0
      %v3073 = vmax.f32 %v2757, 0.0
      %v3074 = vmax.f32 %v2762, 0.0
      %v3075 = vmax.f32 %v2765, 0.0
      %v3076 = vmax.f32 %v2770, 0.0
      %v3077 = vmax.f32 %v2773, 0.0
      %v3078 = vmax.f32 %v2778, 0.0
      %v3079 = vmax.f32 %v2781, 0.0
      %v3080 = vmax.f32 %v2786, 0.0
      %v3081 = vmax.f32 %v2789, 0.0
      %v3082 = vmax.f32 %v2794, 0.0
      %v3083 = vmax.f32 %v2797, 0.0
      %v3084 = vmax.f32 %v2802, 0.0
      %v3085 = vmax.f32 %v2805, 0.0
      %v3086 = vmax.f32 %v2810, 0.0
      %v3087 = vmax.f32 %v2813, 0.0
      %v3088 = vmax.f32 %v2818, 0.0
      %v3089 = vmax.f32 %v2821, 0.0
      %v3090 = vmax.f32 %v2826, 0.0
      %v3091 = vmax.f32 %v2829, 0.0
      %v3092 = vmax.f32 %v2834, 0.0
      %v3093 = vmax.f32 %v2837, 0.0
      %v3094 = vmax.f32 %v2842, 0.0
      %v3095 = vmax.f32 %v2845, 0.0
      %v3096 = vmax.f32 %v2850, 0.0
      %v3097 = vmax.f32 %v2853, 0.0
      %v3098 = vmax.f32 %v2858, 0.0
      %v3099 = vmax.f32 %v2861, 0.0
      %v3100 = vmax.f32 %v2866, 0.0
      %v3101 = vmax.f32 %v2869, 0.0
      %v3102 = vmax.f32 %v2874, 0.0
      %v3103 = vmax.f32 %v2877, 0.0
      %v3104 = vmax.f32 %v2882, 0.0
      %v3105 = vmax.f32 %v2885, 0.0
      %v3106 = vmax.f32 %v2890, 0.0
      %v3107 = vmax.f32 %v2893, 0.0
      %v3108 = vmax.f32 %v2898, 0.0
      %v3109 = vmax.f32 %v2901, 0.0
      %v3110 = vmax.f32 %v2906, 0.0
      %v3111 = vmax.f32 %v2909, 0.0
      %v3112 = vmax.f32 %v2914, 0.0
      %v3113 = vmax.f32 %v2917, 0.0
      %v3114 = vmax.f32 %v2922, 0.0
      %v3115 = vmax.f32 %v2925, 0.0
      %v3116 = vmax.f32 %v2930, 0.0
      %v3117 = vmax.f32 %v2933, 0.0
      %v3118 = vmax.f32 %v2938, 0.0
      %v3119 = vmax.f32 %v2941, 0.0
      %v3120 = vmax.f32 %v2946, 0.0
      %v3121 = vmax.f32 %v2949, 0.0
      %v3122 = vmax.f32 %v2954, 0.0
      %v3123 = vmax.f32 %v2957, 0.0
      %v3124 = vmax.f32 %v2962, 0.0
      %v3125 = vmax.f32 %v2965, 0.0
      %v3126 = vmax.f32 %v2970, 0.0
      %v3127 = vmax.f32 %v2973, 0.0
      %v3128 = vmax.f32 %v2978, 0.0
      %v3129 = vmax.f32 %v2981, 0.0
      %v3130 = vmax.f32 %v2986, 0.0
      %v3131 = vmax.f32 %v2989, 0.0
      %v3132 = vmax.f32 %v2994, 0.0
      %v3133 = vmax.f32 %v2997, 0.0
      %v3134 = vmax.f32 %v3002, 0.0
      %v3135 = vmax.f32 %v3005, 0.0
      %v3136 = vmax.f32 %v2287, %v3008
      %v3137 = vmax.f32 %v2288, %v3009
      %v3138 = vmax.f32 %v2289, %v3010
      %v3139 = vmax.f32 %v2290, %v3011
      %v3140 = vmax.f32 %v2291, %v3012
      %v3141 = vmax.f32 %v2292, %v3013
      %v3142 = vmax.f32 %v2293, %v3014
      %v3143 = vmax.f32 %v2294, %v3015
      %v3144 = vmax.f32 %v2295, %v3016
      %v3145 = vmax.f32 %v2296, %v3017
      %v3146 = vmax.f32 %v2297, %v3018
      %v3147 = vmax.f32 %v2298, %v3019
      %v3148 = vmax.f32 %v2299, %v3020
      %v3149 = vmax.f32 %v2300, %v3021
      %v3150 = vmax.f32 %v2301, %v3022
      %v3151 = vmax.f32 %v2302, %v3023
      %v3152 = vmax.f32 %v2303, %v3024
      %v3153 = vmax.f32 %v2304, %v3025
      %v3154 = vmax.f32 %v2305, %v3026
      %v3155 = vmax.f32 %v2306, %v3027
      %v3156 = vmax.f32 %v2307, %v3028
      %v3157 = vmax.f32 %v2308, %v3029
      %v3158 = vmax.f32 %v2309, %v3030
      %v3159 = vmax.f32 %v2310, %v3031
      %v3160 = vmax.f32 %v2311, %v3032
      %v3161 = vmax.f32 %v2312, %v3033
      %v3162 = vmax.f32 %v2313, %v3034
      %v3163 = vmax.f32 %v2314, %v3035
      %v3164 = vmax.f32 %v2315, %v3036
      %v3165 = vmax.f32 %v2316, %v3037
      %v3166 = vmax.f32 %v2317, %v3038
      %v3167 = vmax.f32 %v2318, %v3039
      %v3168 = vmax.f32 %v2319, %v3040
      %v3169 = vmax.f32 %v2320, %v3041
      %v3170 = vmax.f32 %v2321, %v3042
      %v3171 = vmax.f32 %v2322, %v3043
      %v3172 = vmax.f32 %v2323, %v3044
      %v3173 = vmax.f32 %v2324, %v3045
      %v3174 = vmax.f32 %v2325, %v3046
      %v3175 = vmax.f32 %v2326, %v3047
      %v3176 = vmax.f32 %v2327, %v3048
      %v3177 = vmax.f32 %v2328, %v3049
      %v3178 = vmax.f32 %v2329, %v3050
      %v3179 = vmax.f32 %v2330, %v3051
      %v3180 = vmax.f32 %v2331, %v3052
      %v3181 = vmax.f32 %v2332, %v3053
      %v3182 = vmax.f32 %v2333, %v3054
      %v3183 = vmax.f32 %v2334, %v3055
      %v3184 = vmax.f32 %v2335, %v3056
      %v3185 = vmax.f32 %v2336, %v3057
      %v3186 = vmax.f32 %v2337, %v3058
      %v3187 = vmax.f32 %v2338, %v3059
      %v3188 = vmax.f32 %v2339, %v3060
      %v3189 = vmax.f32 %v2340, %v3061
      %v3190 = vmax.f32 %v2341, %v3062
      %v3191 = vmax.f32 %v2342, %v3063
      %v3192 = vmax.f32 %v2343, %v3064
      %v3193 = vmax.f32 %v2344, %v3065
      %v3194 = vmax.f32 %v2345, %v3066
      %v3195 = vmax.f32 %v2346, %v3067
      %v3196 = vmax.f32 %v2347, %v3068
      %v3197 = vmax.f32 %v2348, %v3069
      %v3198 = vmax.f32 %v2349, %v3070
      %v3199 = vmax.f32 %v2350, %v3071
      %v3200 = vmax.f32 %v2351, %v3072
      %v3201 = vmax.f32 %v2352, %v3073
      %v3202 = vmax.f32 %v2353, %v3074
      %v3203 = vmax.f32 %v2354, %v3075
      %v3204 = vmax.f32 %v2355, %v3076
      %v3205 = vmax.f32 %v2356, %v3077
      %v3206 = vmax.f32 %v2357, %v3078
      %v3207 = vmax.f32 %v2358, %v3079
      %v3208 = vmax.f32 %v2359, %v3080
      %v3209 = vmax.f32 %v2360, %v3081
      %v3210 = vmax.f32 %v2361, %v3082
      %v3211 = vmax.f32 %v2362, %v3083
      %v3212 = vmax.f32 %v2363, %v3084
      %v3213 = vmax.f32 %v2364, %v3085
      %v3214 = vmax.f32 %v2365, %v3086
      %v3215 = vmax.f32 %v2366, %v3087
      %v3216 = vmax.f32 %v2367, %v3088
      %v3217 = vmax.f32 %v2368, %v3089
      %v3218 = vmax.f32 %v2369, %v3090
      %v3219 = vmax.f32 %v2370, %v3091
      %v3220 = vmax.f32 %v2371, %v3092
      %v3221 = vmax.f32 %v2372, %v3093
      %v3222 = vmax.f32 %v2373, %v3094
      %v3223 = vmax.f32 %v2374, %v3095
      %v3224 = vmax.f32 %v2375, %v3096
      %v3225 = vmax.f32 %v2376, %v3097
      %v3226 = vmax.f32 %v2377, %v3098
      %v3227 = vmax.f32 %v2378, %v3099
      %v3228 = vmax.f32 %v2379, %v3100
      %v3229 = vmax.f32 %v2380, %v3101
      %v3230 = vmax.f32 %v2381, %v3102
      %v3231 = vmax.f32 %v2382, %v3103
      %v3232 = vmax.f32 %v2383, %v3104
      %v3233 = vmax.f32 %v2384, %v3105
      %v3234 = vmax.f32 %v2385, %v3106
      %v3235 = vmax.f32 %v2386, %v3107
      %v3236 = vmax.f32 %v2387, %v3108
      %v3237 = vmax.f32 %v2388, %v3109
      %v3238 = vmax.f32 %v2389, %v3110
      %v3239 = vmax.f32 %v2390, %v3111
      %v3240 = vmax.f32 %v2391, %v3112
      %v3241 = vmax.f32 %v2392, %v3113
      %v3242 = vmax.f32 %v2393, %v3114
      %v3243 = vmax.f32 %v2394, %v3115
      %v3244 = vmax.f32 %v2395, %v3116
      %v3245 = vmax.f32 %v2396, %v3117
      %v3246 = vmax.f32 %v2397, %v3118
      %v3247 = vmax.f32 %v2398, %v3119
      %v3248 = vmax.f32 %v2399, %v3120
      %v3249 = vmax.f32 %v2400, %v3121
      %v3250 = vmax.f32 %v2401, %v3122
      %v3251 = vmax.f32 %v2402, %v3123
      %v3252 = vmax.f32 %v2403, %v3124
      %v3253 = vmax.f32 %v2404, %v3125
      %v3254 = vmax.f32 %v2405, %v3126
      %v3255 = vmax.f32 %v2406, %v3127
      %v3256 = vmax.f32 %v2407, %v3128
      %v3257 = vmax.f32 %v2408, %v3129
      %v3258 = vmax.f32 %v2409, %v3130
      %v3259 = vmax.f32 %v2410, %v3131
      %v3260 = vmax.f32 %v2411, %v3132
      %v3261 = vmax.f32 %v2412, %v3133
      %v3262 = vmax.f32 %v2413, %v3134
      %v3263 = vmax.f32 %v2414, %v3135
      %v3264 = vunpack.c.h.b16 %v439
      %v3265 = vunpack.c.h.b16 %v441
      %v3266 = vunpack.c.h.b16 %v443
      %v3267 = vunpack.c.h.b16 %v445
      %v3268 = vunpack.c.h.b16 %v447
      %v3269 = vunpack.c.h.b16 %v449
      %v3270 = vunpack.c.h.b16 %v451
      %v3271 = vunpack.c.h.b16 %v453
      %v3272 = vunpack.c.h.b16 %v455
      %v3273 = vunpack.c.h.b16 %v457
      %v3274 = vunpack.c.h.b16 %v459
      %v3275 = vunpack.c.h.b16 %v461
      %v3276 = vunpack.c.h.b16 %v463
      %v3277 = vunpack.c.h.b16 %v465
      %v3278 = vunpack.c.h.b16 %v467
      %v3279 = vunpack.c.h.b16 %v469
      %v3280 = vpack.c.b16 %v3265, %v3264
      %v3281 = vpack.c.b16 %v3267, %v3266
      %v3282 = vpack.c.b16 %v3269, %v3268
      %v3283 = vpack.c.b16 %v3271, %v3270
      %v3284 = vpack.c.b16 %v3273, %v3272
      %v3285 = vpack.c.b16 %v3275, %v3274
      %v3286 = vpack.c.b16 %v3277, %v3276
      %v3287 = vpack.c.b16 %v3279, %v3278
      %3296 = vmatprep.subr.bf16.mxu0 0
      %3297 = vmatpush1.bf16.msra.mxu0 %v3280
      %3298 = vmatprep.subr.bf16.mxu0 0
      %3299 = vmatpush1.bf16.msra.mxu0 %v3281
      %3300 = vmatprep.subr.bf16.mxu0 0
      %3301 = vmatpush1.bf16.msra.mxu0 %v3282
      %3302 = vmatprep.subr.bf16.mxu0 0
      %3303 = vmatpush1.bf16.msra.mxu0 %v3283
      %3304 = vmatprep.subr.bf16.mxu0 0
      %3305 = vmatpush1.bf16.msra.mxu0 %v3284
      %3306 = vmatprep.subr.bf16.mxu0 0
      %3307 = vmatpush1.bf16.msra.mxu0 %v3285
      %3308 = vmatprep.subr.bf16.mxu0 0
      %3309 = vmatpush1.bf16.msra.mxu0 %v3286
      %3310 = vmatprep.subr.bf16.mxu0 0
      %3311 = vmatpush1.bf16.msra.mxu0 %v3287
      %3312 = vmatprep.subr.bf16.mxu0 0
      %3313 = vmatpush1.bf16.msra.mxu0 0
      %3314 = vmatprep.subr.bf16.mxu0 0
      %3315 = vmatpush1.bf16.msra.mxu0 0
      %3316 = vmatprep.subr.bf16.mxu0 0
      %3317 = vmatpush1.bf16.msra.mxu0 0
      %3318 = vmatprep.subr.bf16.mxu0 0
      %3319 = vmatpush1.bf16.msra.mxu0 0
      %3320 = vmatprep.subr.bf16.mxu0 0
      %3321 = vmatpush1.bf16.msra.mxu0 0
      %3322 = vmatprep.subr.bf16.mxu0 0
      %3323 = vmatpush1.bf16.msra.mxu0 0
      %3324 = vmatprep.subr.bf16.mxu0 0
      %3325 = vmatpush1.bf16.msra.mxu0 0
      %3326 = vmatprep.subr.bf16.mxu0 0
      %3327 = vmatpush1.bf16.msra.mxu0 0
      %3328 = vmatprep.mubr.bf16.mxu0 0
      %3329 = vmatmul.mubr.bf16.gmra.mrb[0].mxu0 %v733
      %v3330 = vpop.f32.mrb[0].mxu0
      %v3331 = vadd.f32 %v475, %v3330
      %v3332 = vpop.f32.mrb[0].mxu0
      %v3333 = vpop.f32.mrb[0].mxu0
      %v3334 = vadd.f32 %v475, %v3333
      %v3335 = vpop.f32.mrb[0].mxu0
      %3336 = vmatprep.mubr.bf16.mxu0 0
      %3337 = vmatmul.mubr.bf16.gmra.mrb[0].mxu0 %v734
      %v3338 = vpop.f32.mrb[0].mxu0
      %v3339 = vadd.f32 %v475, %v3338
      %v3340 = vpop.f32.mrb[0].mxu0
      %v3341 = vpop.f32.mrb[0].mxu0
      %v3342 = vadd.f32 %v475, %v3341
      %v3343 = vpop.f32.mrb[0].mxu0
      %3344 = vmatprep.mubr.bf16.mxu0 0
      %3345 = vmatmul.mubr.bf16.gmra.mrb[0].mxu0 %v735
      %v3346 = vpop.f32.mrb[0].mxu0
      %v3347 = vadd.f32 %v475, %v3346
      %v3348 = vpop.f32.mrb[0].mxu0
      %v3349 = vpop.f32.mrb[0].mxu0
      %v3350 = vadd.f32 %v475, %v3349
      %v3351 = vpop.f32.mrb[0].mxu0
      %3352 = vmatprep.mubr.bf16.mxu0 0
      %3353 = vmatmul.mubr.bf16.gmra.mrb[0].mxu0 %v736
      %v3354 = vpop.f32.mrb[0].mxu0
      %v3355 = vadd.f32 %v475, %v3354
      %v3356 = vpop.f32.mrb[0].mxu0
      %v3357 = vpop.f32.mrb[0].mxu0
      %v3358 = vadd.f32 %v475, %v3357
      %v3359 = vpop.f32.mrb[0].mxu0
      %3360 = vmatprep.mubr.bf16.mxu0 0
      %3361 = vmatmul.mubr.bf16.gmra.mrb[0].mxu0 %v737
      %v3362 = vpop.f32.mrb[0].mxu0
      %v3363 = vadd.f32 %v475, %v3362
      %v3364 = vpop.f32.mrb[0].mxu0
      %v3365 = vpop.f32.mrb[0].mxu0
      %v3366 = vadd.f32 %v475, %v3365
      %v3367 = vpop.f32.mrb[0].mxu0
      %3368 = vmatprep.mubr.bf16.mxu0 0
      %3369 = vmatmul.mubr.bf16.gmra.mrb[0].mxu0 %v738
      %v3370 = vpop.f32.mrb[0].mxu0
      %v3371 = vadd.f32 %v475, %v3370
      %v3372 = vpop.f32.mrb[0].mxu0
      %v3373 = vpop.f32.mrb[0].mxu0
      %v3374 = vadd.f32 %v475, %v3373
      %v3375 = vpop.f32.mrb[0].mxu0
      %3376 = vmatprep.mubr.bf16.mxu0 0
      %3377 = vmatmul.mubr.bf16.gmra.mrb[0].mxu0 %v739
      %v3378 = vpop.f32.mrb[0].mxu0
      %v3379 = vadd.f32 %v475, %v3378
      %v3380 = vpop.f32.mrb[0].mxu0
      %v3381 = vpop.f32.mrb[0].mxu0
      %v3382 = vadd.f32 %v475, %v3381
      %v3383 = vpop.f32.mrb[0].mxu0
      %3384 = vmatprep.mubr.bf16.mxu0 0
      %3385 = vmatmul.mubr.bf16.gmra.mrb[0].mxu0 %v740
      %v3386 = vpop.f32.mrb[0].mxu0
      %v3387 = vadd.f32 %v475, %v3386
      %v3388 = vpop.f32.mrb[0].mxu0
      %v3389 = vpop.f32.mrb[0].mxu0
      %v3390 = vadd.f32 %v475, %v3389
      %v3391 = vpop.f32.mrb[0].mxu0
      %3392 = vmatprep.mubr.bf16.mxu0 0
      %3393 = vmatmul.mubr.bf16.gmra.mrb[0].mxu0 %v741
      %v3394 = vpop.f32.mrb[0].mxu0
      %v3395 = vadd.f32 %v475, %v3394
      %v3396 = vpop.f32.mrb[0].mxu0
      %v3397 = vpop.f32.mrb[0].mxu0
      %v3398 = vadd.f32 %v475, %v3397
      %v3399 = vpop.f32.mrb[0].mxu0
      %3400 = vmatprep.mubr.bf16.mxu0 0
      %3401 = vmatmul.mubr.bf16.gmra.mrb[0].mxu0 %v742
      %v3402 = vpop.f32.mrb[0].mxu0
      %v3403 = vadd.f32 %v475, %v3402
      %v3404 = vpop.f32.mrb[0].mxu0
      %v3405 = vpop.f32.mrb[0].mxu0
      %v3406 = vadd.f32 %v475, %v3405
      %v3407 = vpop.f32.mrb[0].mxu0
      %3408 = vmatprep.mubr.bf16.mxu0 0
      %3409 = vmatmul.mubr.bf16.gmra.mrb[0].mxu0 %v743
      %v3410 = vpop.f32.mrb[0].mxu0
      %v3411 = vadd.f32 %v475, %v3410
      %v3412 = vpop.f32.mrb[0].mxu0
      %v3413 = vpop.f32.mrb[0].mxu0
      %v3414 = vadd.f32 %v475, %v3413
      %v3415 = vpop.f32.mrb[0].mxu0
      %3416 = vmatprep.mubr.bf16.mxu0 0
      %3417 = vmatmul.mubr.bf16.gmra.mrb[0].mxu0 %v744
      %v3418 = vpop.f32.mrb[0].mxu0
      %v3419 = vadd.f32 %v475, %v3418
      %v3420 = vpop.f32.mrb[0].mxu0
      %v3421 = vpop.f32.mrb[0].mxu0
      %v3422 = vadd.f32 %v475, %v3421
      %v3423 = vpop.f32.mrb[0].mxu0
      %3424 = vmatprep.mubr.bf16.mxu0 0
      %3425 = vmatmul.mubr.bf16.gmra.mrb[0].mxu0 %v745
      %v3426 = vpop.f32.mrb[0].mxu0
      %v3427 = vadd.f32 %v475, %v3426
      %v3428 = vpop.f32.mrb[0].mxu0
      %v3429 = vpop.f32.mrb[0].mxu0
      %v3430 = vadd.f32 %v475, %v3429
      %v3431 = vpop.f32.mrb[0].mxu0
      %3432 = vmatprep.mubr.bf16.mxu0 0
      %3433 = vmatmul.mubr.bf16.gmra.mrb[0].mxu0 %v746
      %v3434 = vpop.f32.mrb[0].mxu0
      %v3435 = vadd.f32 %v475, %v3434
      %v3436 = vpop.f32.mrb[0].mxu0
      %v3437 = vpop.f32.mrb[0].mxu0
      %v3438 = vadd.f32 %v475, %v3437
      %v3439 = vpop.f32.mrb[0].mxu0
      %3440 = vmatprep.mubr.bf16.mxu0 0
      %3441 = vmatmul.mubr.bf16.gmra.mrb[0].mxu0 %v747
      %v3442 = vpop.f32.mrb[0].mxu0
      %v3443 = vadd.f32 %v475, %v3442
      %v3444 = vpop.f32.mrb[0].mxu0
      %v3445 = vpop.f32.mrb[0].mxu0
      %v3446 = vadd.f32 %v475, %v3445
      %v3447 = vpop.f32.mrb[0].mxu0
      %3448 = vmatprep.mubr.bf16.mxu0 0
      %3449 = vmatmul.mubr.bf16.gmra.mrb[0].mxu0 %v748
      %v3450 = vpop.f32.mrb[0].mxu0
      %v3451 = vadd.f32 %v475, %v3450
      %v3452 = vpop.f32.mrb[0].mxu0
      %v3453 = vpop.f32.mrb[0].mxu0
      %v3454 = vadd.f32 %v475, %v3453
      %v3455 = vpop.f32.mrb[0].mxu0
      %3456 = vmatprep.mubr.bf16.mxu0 0
      %3457 = vmatmul.mubr.bf16.gmra.mrb[0].mxu0 %v749
      %v3458 = vpop.f32.mrb[0].mxu0
      %v3459 = vadd.f32 %v475, %v3458
      %v3460 = vpop.f32.mrb[0].mxu0
      %v3461 = vpop.f32.mrb[0].mxu0
      %v3462 = vadd.f32 %v475, %v3461
      %v3463 = vpop.f32.mrb[0].mxu0
      %3464 = vmatprep.mubr.bf16.mxu0 0
      %3465 = vmatmul.mubr.bf16.gmra.mrb[0].mxu0 %v750
      %v3466 = vpop.f32.mrb[0].mxu0
      %v3467 = vadd.f32 %v475, %v3466
      %v3468 = vpop.f32.mrb[0].mxu0
      %v3469 = vpop.f32.mrb[0].mxu0
      %v3470 = vadd.f32 %v475, %v3469
      %v3471 = vpop.f32.mrb[0].mxu0
      %3472 = vmatprep.mubr.bf16.mxu0 0
      %3473 = vmatmul.mubr.bf16.gmra.mrb[0].mxu0 %v751
      %v3474 = vpop.f32.mrb[0].mxu0
      %v3475 = vadd.f32 %v475, %v3474
      %v3476 = vpop.f32.mrb[0].mxu0
      %v3477 = vpop.f32.mrb[0].mxu0
      %v3478 = vadd.f32 %v475, %v3477
      %v3479 = vpop.f32.mrb[0].mxu0
      %3480 = vmatprep.mubr.bf16.mxu0 0
      %3481 = vmatmul.mubr.bf16.gmra.mrb[0].mxu0 %v752
      %v3482 = vpop.f32.mrb[0].mxu0
      %v3483 = vadd.f32 %v475, %v3482
      %v3484 = vpop.f32.mrb[0].mxu0
      %v3485 = vpop.f32.mrb[0].mxu0
      %v3486 = vadd.f32 %v475, %v3485
      %v3487 = vpop.f32.mrb[0].mxu0
      %3488 = vmatprep.mubr.bf16.mxu0 0
      %3489 = vmatmul.mubr.bf16.gmra.mrb[0].mxu0 %v753
      %v3490 = vpop.f32.mrb[0].mxu0
      %v3491 = vadd.f32 %v475, %v3490
      %v3492 = vpop.f32.mrb[0].mxu0
      %v3493 = vpop.f32.mrb[0].mxu0
      %v3494 = vadd.f32 %v475, %v3493
      %v3495 = vpop.f32.mrb[0].mxu0
      %3496 = vmatprep.mubr.bf16.mxu0 0
      %3497 = vmatmul.mubr.bf16.gmra.mrb[0].mxu0 %v754
      %v3498 = vpop.f32.mrb[0].mxu0
      %v3499 = vadd.f32 %v475, %v3498
      %v3500 = vpop.f32.mrb[0].mxu0
      %v3501 = vpop.f32.mrb[0].mxu0
      %v3502 = vadd.f32 %v475, %v3501
      %v3503 = vpop.f32.mrb[0].mxu0
      %3504 = vmatprep.mubr.bf16.mxu0 0
      %3505 = vmatmul.mubr.bf16.gmra.mrb[0].mxu0 %v755
      %v3506 = vpop.f32.mrb[0].mxu0
      %v3507 = vadd.f32 %v475, %v3506
      %v3508 = vpop.f32.mrb[0].mxu0
      %v3509 = vpop.f32.mrb[0].mxu0
      %v3510 = vadd.f32 %v475, %v3509
      %v3511 = vpop.f32.mrb[0].mxu0
      %3512 = vmatprep.mubr.bf16.mxu0 0
      %3513 = vmatmul.mubr.bf16.gmra.mrb[0].mxu0 %v756
      %v3514 = vpop.f32.mrb[0].mxu0
      %v3515 = vadd.f32 %v475, %v3514
      %v3516 = vpop.f32.mrb[0].mxu0
      %v3517 = vpop.f32.mrb[0].mxu0
      %v3518 = vadd.f32 %v475, %v3517
      %v3519 = vpop.f32.mrb[0].mxu0
      %3520 = vmatprep.mubr.bf16.mxu0 0
      %3521 = vmatmul.mubr.bf16.gmra.mrb[0].mxu0 %v757
      %v3522 = vpop.f32.mrb[0].mxu0
      %v3523 = vadd.f32 %v475, %v3522
      %v3524 = vpop.f32.mrb[0].mxu0
      %v3525 = vpop.f32.mrb[0].mxu0
      %v3526 = vadd.f32 %v475, %v3525
      %v3527 = vpop.f32.mrb[0].mxu0
      %3528 = vmatprep.mubr.bf16.mxu0 0
      %3529 = vmatmul.mubr.bf16.gmra.mrb[0].mxu0 %v758
      %v3530 = vpop.f32.mrb[0].mxu0
      %v3531 = vadd.f32 %v475, %v3530
      %v3532 = vpop.f32.mrb[0].mxu0
      %v3533 = vpop.f32.mrb[0].mxu0
      %v3534 = vadd.f32 %v475, %v3533
      %v3535 = vpop.f32.mrb[0].mxu0
      %3536 = vmatprep.mubr.bf16.mxu0 0
      %3537 = vmatmul.mubr.bf16.gmra.mrb[0].mxu0 %v759
      %v3538 = vpop.f32.mrb[0].mxu0
      %v3539 = vadd.f32 %v475, %v3538
      %v3540 = vpop.f32.mrb[0].mxu0
      %v3541 = vpop.f32.mrb[0].mxu0
      %v3542 = vadd.f32 %v475, %v3541
      %v3543 = vpop.f32.mrb[0].mxu0
      %3544 = vmatprep.mubr.bf16.mxu0 0
      %3545 = vmatmul.mubr.bf16.gmra.mrb[0].mxu0 %v760
      %v3546 = vpop.f32.mrb[0].mxu0
      %v3547 = vadd.f32 %v475, %v3546
      %v3548 = vpop.f32.mrb[0].mxu0
      %v3549 = vpop.f32.mrb[0].mxu0
      %v3550 = vadd.f32 %v475, %v3549
      %v3551 = vpop.f32.mrb[0].mxu0
      %3552 = vmatprep.mubr.bf16.mxu0 0
      %3553 = vmatmul.mubr.bf16.gmra.mrb[0].mxu0 %v761
      %v3554 = vpop.f32.mrb[0].mxu0
      %v3555 = vadd.f32 %v475, %v3554
      %v3556 = vpop.f32.mrb[0].mxu0
      %v3557 = vpop.f32.mrb[0].mxu0
      %v3558 = vadd.f32 %v475, %v3557
      %v3559 = vpop.f32.mrb[0].mxu0
      %3560 = vmatprep.mubr.bf16.mxu0 0
      %3561 = vmatmul.mubr.bf16.gmra.mrb[0].mxu0 %v762
      %v3562 = vpop.f32.mrb[0].mxu0
      %v3563 = vadd.f32 %v475, %v3562
      %v3564 = vpop.f32.mrb[0].mxu0
      %v3565 = vpop.f32.mrb[0].mxu0
      %v3566 = vadd.f32 %v475, %v3565
      %v3567 = vpop.f32.mrb[0].mxu0
      %3568 = vmatprep.mubr.bf16.mxu0 0
      %3569 = vmatmul.mubr.bf16.gmra.mrb[0].mxu0 %v763
      %v3570 = vpop.f32.mrb[0].mxu0
      %v3571 = vadd.f32 %v475, %v3570
      %v3572 = vpop.f32.mrb[0].mxu0
      %v3573 = vpop.f32.mrb[0].mxu0
      %v3574 = vadd.f32 %v475, %v3573
      %v3575 = vpop.f32.mrb[0].mxu0
      %3576 = vmatprep.mubr.bf16.mxu0 0
      %3577 = vmatmul.mubr.bf16.gmra.mrb[0].mxu0 %v764
      %v3578 = vpop.f32.mrb[0].mxu0
      %v3579 = vadd.f32 %v475, %v3578
      %v3580 = vpop.f32.mrb[0].mxu0
      %v3581 = vpop.f32.mrb[0].mxu0
      %v3582 = vadd.f32 %v475, %v3581
      %v3583 = vpop.f32.mrb[0].mxu0
      %3584 = vmatprep.mubr.bf16.mxu0 0
      %3585 = vmatmul.mubr.bf16.gmra.mrb[0].mxu0 %v765
      %v3586 = vpop.f32.mrb[0].mxu0
      %v3587 = vadd.f32 %v475, %v3586
      %v3588 = vpop.f32.mrb[0].mxu0
      %v3589 = vpop.f32.mrb[0].mxu0
      %v3590 = vadd.f32 %v475, %v3589
      %v3591 = vpop.f32.mrb[0].mxu0
      %3592 = vmatprep.mubr.bf16.mxu0 0
      %3593 = vmatmul.mubr.bf16.gmra.mrb[0].mxu0 %v766
      %v3594 = vpop.f32.mrb[0].mxu0
      %v3595 = vadd.f32 %v475, %v3594
      %v3596 = vpop.f32.mrb[0].mxu0
      %v3597 = vpop.f32.mrb[0].mxu0
      %v3598 = vadd.f32 %v475, %v3597
      %v3599 = vpop.f32.mrb[0].mxu0
      %3600 = vmatprep.mubr.bf16.mxu0 0
      %3601 = vmatmul.mubr.bf16.gmra.mrb[0].mxu0 %v767
      %v3602 = vpop.f32.mrb[0].mxu0
      %v3603 = vadd.f32 %v475, %v3602
      %v3604 = vpop.f32.mrb[0].mxu0
      %v3605 = vpop.f32.mrb[0].mxu0
      %v3606 = vadd.f32 %v475, %v3605
      %v3607 = vpop.f32.mrb[0].mxu0
      %3608 = vmatprep.mubr.bf16.mxu0 0
      %3609 = vmatmul.mubr.bf16.gmra.mrb[0].mxu0 %v768
      %v3610 = vpop.f32.mrb[0].mxu0
      %v3611 = vadd.f32 %v475, %v3610
      %v3612 = vpop.f32.mrb[0].mxu0
      %v3613 = vpop.f32.mrb[0].mxu0
      %v3614 = vadd.f32 %v475, %v3613
      %v3615 = vpop.f32.mrb[0].mxu0
      %3616 = vmatprep.mubr.bf16.mxu0 0
      %3617 = vmatmul.mubr.bf16.gmra.mrb[0].mxu0 %v769
      %v3618 = vpop.f32.mrb[0].mxu0
      %v3619 = vadd.f32 %v475, %v3618
      %v3620 = vpop.f32.mrb[0].mxu0
      %v3621 = vpop.f32.mrb[0].mxu0
      %v3622 = vadd.f32 %v475, %v3621
      %v3623 = vpop.f32.mrb[0].mxu0
      %3624 = vmatprep.mubr.bf16.mxu0 0
      %3625 = vmatmul.mubr.bf16.gmra.mrb[0].mxu0 %v770
      %v3626 = vpop.f32.mrb[0].mxu0
      %v3627 = vadd.f32 %v475, %v3626
      %v3628 = vpop.f32.mrb[0].mxu0
      %v3629 = vpop.f32.mrb[0].mxu0
      %v3630 = vadd.f32 %v475, %v3629
      %v3631 = vpop.f32.mrb[0].mxu0
      %3632 = vmatprep.mubr.bf16.mxu0 0
      %3633 = vmatmul.mubr.bf16.gmra.mrb[0].mxu0 %v771
      %v3634 = vpop.f32.mrb[0].mxu0
      %v3635 = vadd.f32 %v475, %v3634
      %v3636 = vpop.f32.mrb[0].mxu0
      %v3637 = vpop.f32.mrb[0].mxu0
      %v3638 = vadd.f32 %v475, %v3637
      %v3639 = vpop.f32.mrb[0].mxu0
      %3640 = vmatprep.mubr.bf16.mxu0 0
      %3641 = vmatmul.mubr.bf16.gmra.mrb[0].mxu0 %v772
      %v3642 = vpop.f32.mrb[0].mxu0
      %v3643 = vadd.f32 %v475, %v3642
      %v3644 = vpop.f32.mrb[0].mxu0
      %v3645 = vpop.f32.mrb[0].mxu0
      %v3646 = vadd.f32 %v475, %v3645
      %v3647 = vpop.f32.mrb[0].mxu0
      %3648 = vmatprep.mubr.bf16.mxu0 0
      %3649 = vmatmul.mubr.bf16.gmra.mrb[0].mxu0 %v773
      %v3650 = vpop.f32.mrb[0].mxu0
      %v3651 = vadd.f32 %v475, %v3650
      %v3652 = vpop.f32.mrb[0].mxu0
      %v3653 = vpop.f32.mrb[0].mxu0
      %v3654 = vadd.f32 %v475, %v3653
      %v3655 = vpop.f32.mrb[0].mxu0
      %3656 = vmatprep.mubr.bf16.mxu0 0
      %3657 = vmatmul.mubr.bf16.gmra.mrb[0].mxu0 %v774
      %v3658 = vpop.f32.mrb[0].mxu0
      %v3659 = vadd.f32 %v475, %v3658
      %v3660 = vpop.f32.mrb[0].mxu0
      %v3661 = vpop.f32.mrb[0].mxu0
      %v3662 = vadd.f32 %v475, %v3661
      %v3663 = vpop.f32.mrb[0].mxu0
      %3664 = vmatprep.mubr.bf16.mxu0 0
      %3665 = vmatmul.mubr.bf16.gmra.mrb[0].mxu0 %v775
      %v3666 = vpop.f32.mrb[0].mxu0
      %v3667 = vadd.f32 %v475, %v3666
      %v3668 = vpop.f32.mrb[0].mxu0
      %v3669 = vpop.f32.mrb[0].mxu0
      %v3670 = vadd.f32 %v475, %v3669
      %v3671 = vpop.f32.mrb[0].mxu0
      %3672 = vmatprep.mubr.bf16.mxu0 0
      %3673 = vmatmul.mubr.bf16.gmra.mrb[0].mxu0 %v776
      %v3674 = vpop.f32.mrb[0].mxu0
      %v3675 = vadd.f32 %v475, %v3674
      %v3676 = vpop.f32.mrb[0].mxu0
      %v3677 = vpop.f32.mrb[0].mxu0
      %v3678 = vadd.f32 %v475, %v3677
      %v3679 = vpop.f32.mrb[0].mxu0
      %3680 = vmatprep.mubr.bf16.mxu0 0
      %3681 = vmatmul.mubr.bf16.gmra.mrb[0].mxu0 %v777
      %v3682 = vpop.f32.mrb[0].mxu0
      %v3683 = vadd.f32 %v475, %v3682
      %v3684 = vpop.f32.mrb[0].mxu0
      %v3685 = vpop.f32.mrb[0].mxu0
      %v3686 = vadd.f32 %v475, %v3685
      %v3687 = vpop.f32.mrb[0].mxu0
      %3688 = vmatprep.mubr.bf16.mxu0 0
      %3689 = vmatmul.mubr.bf16.gmra.mrb[0].mxu0 %v778
      %v3690 = vpop.f32.mrb[0].mxu0
      %v3691 = vadd.f32 %v475, %v3690
      %v3692 = vpop.f32.mrb[0].mxu0
      %v3693 = vpop.f32.mrb[0].mxu0
      %v3694 = vadd.f32 %v475, %v3693
      %v3695 = vpop.f32.mrb[0].mxu0
      %3696 = vmatprep.mubr.bf16.mxu0 0
      %3697 = vmatmul.mubr.bf16.gmra.mrb[0].mxu0 %v779
      %v3698 = vpop.f32.mrb[0].mxu0
      %v3699 = vadd.f32 %v475, %v3698
      %v3700 = vpop.f32.mrb[0].mxu0
      %v3701 = vpop.f32.mrb[0].mxu0
      %v3702 = vadd.f32 %v475, %v3701
      %v3703 = vpop.f32.mrb[0].mxu0
      %3704 = vmatprep.mubr.bf16.mxu0 0
      %3705 = vmatmul.mubr.bf16.gmra.mrb[0].mxu0 %v780
      %v3706 = vpop.f32.mrb[0].mxu0
      %v3707 = vadd.f32 %v475, %v3706
      %v3708 = vpop.f32.mrb[0].mxu0
      %v3709 = vpop.f32.mrb[0].mxu0
      %v3710 = vadd.f32 %v475, %v3709
      %v3711 = vpop.f32.mrb[0].mxu0
      %3712 = vmatprep.mubr.bf16.mxu0 0
      %3713 = vmatmul.mubr.bf16.gmra.mrb[0].mxu0 %v781
      %v3714 = vpop.f32.mrb[0].mxu0
      %v3715 = vadd.f32 %v475, %v3714
      %v3716 = vpop.f32.mrb[0].mxu0
      %v3717 = vpop.f32.mrb[0].mxu0
      %v3718 = vadd.f32 %v475, %v3717
      %v3719 = vpop.f32.mrb[0].mxu0
      %3720 = vmatprep.mubr.bf16.mxu0 0
      %3721 = vmatmul.mubr.bf16.gmra.mrb[0].mxu0 %v782
      %v3722 = vpop.f32.mrb[0].mxu0
      %v3723 = vadd.f32 %v475, %v3722
      %v3724 = vpop.f32.mrb[0].mxu0
      %v3725 = vpop.f32.mrb[0].mxu0
      %v3726 = vadd.f32 %v475, %v3725
      %v3727 = vpop.f32.mrb[0].mxu0
      %3728 = vmatprep.mubr.bf16.mxu0 0
      %3729 = vmatmul.mubr.bf16.gmra.mrb[0].mxu0 %v783
      %v3730 = vpop.f32.mrb[0].mxu0
      %v3731 = vadd.f32 %v475, %v3730
      %v3732 = vpop.f32.mrb[0].mxu0
      %v3733 = vpop.f32.mrb[0].mxu0
      %v3734 = vadd.f32 %v475, %v3733
      %v3735 = vpop.f32.mrb[0].mxu0
      %3736 = vmatprep.mubr.bf16.mxu0 0
      %3737 = vmatmul.mubr.bf16.gmra.mrb[0].mxu0 %v784
      %v3738 = vpop.f32.mrb[0].mxu0
      %v3739 = vadd.f32 %v475, %v3738
      %v3740 = vpop.f32.mrb[0].mxu0
      %v3741 = vpop.f32.mrb[0].mxu0
      %v3742 = vadd.f32 %v475, %v3741
      %v3743 = vpop.f32.mrb[0].mxu0
      %3744 = vmatprep.mubr.bf16.mxu0 0
      %3745 = vmatmul.mubr.bf16.gmra.mrb[0].mxu0 %v785
      %v3746 = vpop.f32.mrb[0].mxu0
      %v3747 = vadd.f32 %v475, %v3746
      %v3748 = vpop.f32.mrb[0].mxu0
      %v3749 = vpop.f32.mrb[0].mxu0
      %v3750 = vadd.f32 %v475, %v3749
      %v3751 = vpop.f32.mrb[0].mxu0
      %3752 = vmatprep.mubr.bf16.mxu0 0
      %3753 = vmatmul.mubr.bf16.gmra.mrb[0].mxu0 %v786
      %v3754 = vpop.f32.mrb[0].mxu0
      %v3755 = vadd.f32 %v475, %v3754
      %v3756 = vpop.f32.mrb[0].mxu0
      %v3757 = vpop.f32.mrb[0].mxu0
      %v3758 = vadd.f32 %v475, %v3757
      %v3759 = vpop.f32.mrb[0].mxu0
      %3760 = vmatprep.mubr.bf16.mxu0 0
      %3761 = vmatmul.mubr.bf16.gmra.mrb[0].mxu0 %v787
      %v3762 = vpop.f32.mrb[0].mxu0
      %v3763 = vadd.f32 %v475, %v3762
      %v3764 = vpop.f32.mrb[0].mxu0
      %v3765 = vpop.f32.mrb[0].mxu0
      %v3766 = vadd.f32 %v475, %v3765
      %v3767 = vpop.f32.mrb[0].mxu0
      %3768 = vmatprep.mubr.bf16.mxu0 0
      %3769 = vmatmul.mubr.bf16.gmra.mrb[0].mxu0 %v788
      %v3770 = vpop.f32.mrb[0].mxu0
      %v3771 = vadd.f32 %v475, %v3770
      %v3772 = vpop.f32.mrb[0].mxu0
      %v3773 = vpop.f32.mrb[0].mxu0
      %v3774 = vadd.f32 %v475, %v3773
      %v3775 = vpop.f32.mrb[0].mxu0
      %3776 = vmatprep.mubr.bf16.mxu0 0
      %3777 = vmatmul.mubr.bf16.gmra.mrb[0].mxu0 %v789
      %v3778 = vpop.f32.mrb[0].mxu0
      %v3779 = vadd.f32 %v475, %v3778
      %v3780 = vpop.f32.mrb[0].mxu0
      %v3781 = vpop.f32.mrb[0].mxu0
      %v3782 = vadd.f32 %v475, %v3781
      %v3783 = vpop.f32.mrb[0].mxu0
      %3784 = vmatprep.mubr.bf16.mxu0 0
      %3785 = vmatmul.mubr.bf16.gmra.mrb[0].mxu0 %v790
      %v3786 = vpop.f32.mrb[0].mxu0
      %v3787 = vadd.f32 %v475, %v3786
      %v3788 = vpop.f32.mrb[0].mxu0
      %v3789 = vpop.f32.mrb[0].mxu0
      %v3790 = vadd.f32 %v475, %v3789
      %v3791 = vpop.f32.mrb[0].mxu0
      %3792 = vmatprep.mubr.bf16.mxu0 0
      %3793 = vmatmul.mubr.bf16.gmra.mrb[0].mxu0 %v791
      %v3794 = vpop.f32.mrb[0].mxu0
      %v3795 = vadd.f32 %v475, %v3794
      %v3796 = vpop.f32.mrb[0].mxu0
      %v3797 = vpop.f32.mrb[0].mxu0
      %v3798 = vadd.f32 %v475, %v3797
      %v3799 = vpop.f32.mrb[0].mxu0
      %3800 = vmatprep.mubr.bf16.mxu0 0
      %3801 = vmatmul.mubr.bf16.gmra.mrb[0].mxu0 %v792
      %v3802 = vpop.f32.mrb[0].mxu0
      %v3803 = vadd.f32 %v475, %v3802
      %v3804 = vpop.f32.mrb[0].mxu0
      %v3805 = vpop.f32.mrb[0].mxu0
      %v3806 = vadd.f32 %v475, %v3805
      %v3807 = vpop.f32.mrb[0].mxu0
      %3808 = vmatprep.mubr.bf16.mxu0 0
      %3809 = vmatmul.mubr.bf16.gmra.mrb[0].mxu0 %v793
      %v3810 = vpop.f32.mrb[0].mxu0
      %v3811 = vadd.f32 %v475, %v3810
      %v3812 = vpop.f32.mrb[0].mxu0
      %v3813 = vpop.f32.mrb[0].mxu0
      %v3814 = vadd.f32 %v475, %v3813
      %v3815 = vpop.f32.mrb[0].mxu0
      %3816 = vmatprep.mubr.bf16.mxu0 0
      %3817 = vmatmul.mubr.bf16.gmra.mrb[0].mxu0 %v794
      %v3818 = vpop.f32.mrb[0].mxu0
      %v3819 = vadd.f32 %v475, %v3818
      %v3820 = vpop.f32.mrb[0].mxu0
      %v3821 = vpop.f32.mrb[0].mxu0
      %v3822 = vadd.f32 %v475, %v3821
      %v3823 = vpop.f32.mrb[0].mxu0
      %3824 = vmatprep.mubr.bf16.mxu0 0
      %3825 = vmatmul.mubr.bf16.gmra.mrb[0].mxu0 %v795
      %v3826 = vpop.f32.mrb[0].mxu0
      %v3827 = vadd.f32 %v475, %v3826
      %v3828 = vpop.f32.mrb[0].mxu0
      %v3829 = vpop.f32.mrb[0].mxu0
      %v3830 = vadd.f32 %v475, %v3829
      %v3831 = vpop.f32.mrb[0].mxu0
      %3832 = vmatprep.mubr.bf16.mxu0 0
      %3833 = vmatmul.mubr.bf16.gmra.mrb[0].mxu0 %v796
      %v3834 = vpop.f32.mrb[0].mxu0
      %v3835 = vadd.f32 %v475, %v3834
      %v3836 = vpop.f32.mrb[0].mxu0
      %v3837 = vpop.f32.mrb[0].mxu0
      %v3838 = vadd.f32 %v475, %v3837
      %v3839 = vpop.f32.mrb[0].mxu0
      %3840 = vdwg.mxu0
      %v3841 = vmax.f32 %v3331, 0.0
      %v3842 = vmax.f32 %v3334, 0.0
      %v3843 = vmax.f32 %v3339, 0.0
      %v3844 = vmax.f32 %v3342, 0.0
      %v3845 = vmax.f32 %v3347, 0.0
      %v3846 = vmax.f32 %v3350, 0.0
      %v3847 = vmax.f32 %v3355, 0.0
      %v3848 = vmax.f32 %v3358, 0.0
      %v3849 = vmax.f32 %v3363, 0.0
      %v3850 = vmax.f32 %v3366, 0.0
      %v3851 = vmax.f32 %v3371, 0.0
      %v3852 = vmax.f32 %v3374, 0.0
      %v3853 = vmax.f32 %v3379, 0.0
      %v3854 = vmax.f32 %v3382, 0.0
      %v3855 = vmax.f32 %v3387, 0.0
      %v3856 = vmax.f32 %v3390, 0.0
      %v3857 = vmax.f32 %v3395, 0.0
      %v3858 = vmax.f32 %v3398, 0.0
      %v3859 = vmax.f32 %v3403, 0.0
      %v3860 = vmax.f32 %v3406, 0.0
      %v3861 = vmax.f32 %v3411, 0.0
      %v3862 = vmax.f32 %v3414, 0.0
      %v3863 = vmax.f32 %v3419, 0.0
      %v3864 = vmax.f32 %v3422, 0.0
      %v3865 = vmax.f32 %v3427, 0.0
      %v3866 = vmax.f32 %v3430, 0.0
      %v3867 = vmax.f32 %v3435, 0.0
      %v3868 = vmax.f32 %v3438, 0.0
      %v3869 = vmax.f32 %v3443, 0.0
      %v3870 = vmax.f32 %v3446, 0.0
      %v3871 = vmax.f32 %v3451, 0.0
      %v3872 = vmax.f32 %v3454, 0.0
      %v3873 = vmax.f32 %v3459, 0.0
      %v3874 = vmax.f32 %v3462, 0.0
      %v3875 = vmax.f32 %v3467, 0.0
      %v3876 = vmax.f32 %v3470, 0.0
      %v3877 = vmax.f32 %v3475, 0.0
      %v3878 = vmax.f32 %v3478, 0.0
      %v3879 = vmax.f32 %v3483, 0.0
      %v3880 = vmax.f32 %v3486, 0.0
      %v3881 = vmax.f32 %v3491, 0.0
      %v3882 = vmax.f32 %v3494, 0.0
      %v3883 = vmax.f32 %v3499, 0.0
      %v3884 = vmax.f32 %v3502, 0.0
      %v3885 = vmax.f32 %v3507, 0.0
      %v3886 = vmax.f32 %v3510, 0.0
      %v3887 = vmax.f32 %v3515, 0.0
      %v3888 = vmax.f32 %v3518, 0.0
      %v3889 = vmax.f32 %v3523, 0.0
      %v3890 = vmax.f32 %v3526, 0.0
      %v3891 = vmax.f32 %v3531, 0.0
      %v3892 = vmax.f32 %v3534, 0.0
      %v3893 = vmax.f32 %v3539, 0.0
      %v3894 = vmax.f32 %v3542, 0.0
      %v3895 = vmax.f32 %v3547, 0.0
      %v3896 = vmax.f32 %v3550, 0.0
      %v3897 = vmax.f32 %v3555, 0.0
      %v3898 = vmax.f32 %v3558, 0.0
      %v3899 = vmax.f32 %v3563, 0.0
      %v3900 = vmax.f32 %v3566, 0.0
      %v3901 = vmax.f32 %v3571, 0.0
      %v3902 = vmax.f32 %v3574, 0.0
      %v3903 = vmax.f32 %v3579, 0.0
      %v3904 = vmax.f32 %v3582, 0.0
      %v3905 = vmax.f32 %v3587, 0.0
      %v3906 = vmax.f32 %v3590, 0.0
      %v3907 = vmax.f32 %v3595, 0.0
      %v3908 = vmax.f32 %v3598, 0.0
      %v3909 = vmax.f32 %v3603, 0.0
      %v3910 = vmax.f32 %v3606, 0.0
      %v3911 = vmax.f32 %v3611, 0.0
      %v3912 = vmax.f32 %v3614, 0.0
      %v3913 = vmax.f32 %v3619, 0.0
      %v3914 = vmax.f32 %v3622, 0.0
      %v3915 = vmax.f32 %v3627, 0.0
      %v3916 = vmax.f32 %v3630, 0.0
      %v3917 = vmax.f32 %v3635, 0.0
      %v3918 = vmax.f32 %v3638, 0.0
      %v3919 = vmax.f32 %v3643, 0.0
      %v3920 = vmax.f32 %v3646, 0.0
      %v3921 = vmax.f32 %v3651, 0.0
      %v3922 = vmax.f32 %v3654, 0.0
      %v3923 = vmax.f32 %v3659, 0.0
      %v3924 = vmax.f32 %v3662, 0.0
      %v3925 = vmax.f32 %v3667, 0.0
      %v3926 = vmax.f32 %v3670, 0.0
      %v3927 = vmax.f32 %v3675, 0.0
      %v3928 = vmax.f32 %v3678, 0.0
      %v3929 = vmax.f32 %v3683, 0.0
      %v3930 = vmax.f32 %v3686, 0.0
      %v3931 = vmax.f32 %v3691, 0.0
      %v3932 = vmax.f32 %v3694, 0.0
      %v3933 = vmax.f32 %v3699, 0.0
      %v3934 = vmax.f32 %v3702, 0.0
      %v3935 = vmax.f32 %v3707, 0.0
      %v3936 = vmax.f32 %v3710, 0.0
      %v3937 = vmax.f32 %v3715, 0.0
      %v3938 = vmax.f32 %v3718, 0.0
      %v3939 = vmax.f32 %v3723, 0.0
      %v3940 = vmax.f32 %v3726, 0.0
      %v3941 = vmax.f32 %v3731, 0.0
      %v3942 = vmax.f32 %v3734, 0.0
      %v3943 = vmax.f32 %v3739, 0.0
      %v3944 = vmax.f32 %v3742, 0.0
      %v3945 = vmax.f32 %v3747, 0.0
      %v3946 = vmax.f32 %v3750, 0.0
      %v3947 = vmax.f32 %v3755, 0.0
      %v3948 = vmax.f32 %v3758, 0.0
      %v3949 = vmax.f32 %v3763, 0.0
      %v3950 = vmax.f32 %v3766, 0.0
      %v3951 = vmax.f32 %v3771, 0.0
      %v3952 = vmax.f32 %v3774, 0.0
      %v3953 = vmax.f32 %v3779, 0.0
      %v3954 = vmax.f32 %v3782, 0.0
      %v3955 = vmax.f32 %v3787, 0.0
      %v3956 = vmax.f32 %v3790, 0.0
      %v3957 = vmax.f32 %v3795, 0.0
      %v3958 = vmax.f32 %v3798, 0.0
      %v3959 = vmax.f32 %v3803, 0.0
      %v3960 = vmax.f32 %v3806, 0.0
      %v3961 = vmax.f32 %v3811, 0.0
      %v3962 = vmax.f32 %v3814, 0.0
      %v3963 = vmax.f32 %v3819, 0.0
      %v3964 = vmax.f32 %v3822, 0.0
      %v3965 = vmax.f32 %v3827, 0.0
      %v3966 = vmax.f32 %v3830, 0.0
      %v3967 = vmax.f32 %v3835, 0.0
      %v3968 = vmax.f32 %v3838, 0.0
      %v3969 = vmax.f32 %v3136, %v3841
      %v3970 = vmax.f32 %v3137, %v3842
      %v3971 = vmax.f32 %v3138, %v3843
      %v3972 = vmax.f32 %v3139, %v3844
      %v3973 = vmax.f32 %v3140, %v3845
      %v3974 = vmax.f32 %v3141, %v3846
      %v3975 = vmax.f32 %v3142, %v3847
      %v3976 = vmax.f32 %v3143, %v3848
      %v3977 = vmax.f32 %v3144, %v3849
      %v3978 = vmax.f32 %v3145, %v3850
      %v3979 = vmax.f32 %v3146, %v3851
      %v3980 = vmax.f32 %v3147, %v3852
      %v3981 = vmax.f32 %v3148, %v3853
      %v3982 = vmax.f32 %v3149, %v3854
      %v3983 = vmax.f32 %v3150, %v3855
      %v3984 = vmax.f32 %v3151, %v3856
      %v3985 = vmax.f32 %v3152, %v3857
      %v3986 = vmax.f32 %v3153, %v3858
      %v3987 = vmax.f32 %v3154, %v3859
      %v3988 = vmax.f32 %v3155, %v3860
      %v3989 = vmax.f32 %v3156, %v3861
      %v3990 = vmax.f32 %v3157, %v3862
      %v3991 = vmax.f32 %v3158, %v3863
      %v3992 = vmax.f32 %v3159, %v3864
      %v3993 = vmax.f32 %v3160, %v3865
      %v3994 = vmax.f32 %v3161, %v3866
      %v3995 = vmax.f32 %v3162, %v3867
      %v3996 = vmax.f32 %v3163, %v3868
      %v3997 = vmax.f32 %v3164, %v3869
      %v3998 = vmax.f32 %v3165, %v3870
      %v3999 = vmax.f32 %v3166, %v3871
      %v4000 = vmax.f32 %v3167, %v3872
      %v4001 = vmax.f32 %v3168, %v3873
      %v4002 = vmax.f32 %v3169, %v3874
      %v4003 = vmax.f32 %v3170, %v3875
      %v4004 = vmax.f32 %v3171, %v3876
      %v4005 = vmax.f32 %v3172, %v3877
      %v4006 = vmax.f32 %v3173, %v3878
      %v4007 = vmax.f32 %v3174, %v3879
      %v4008 = vmax.f32 %v3175, %v3880
      %v4009 = vmax.f32 %v3176, %v3881
      %v4010 = vmax.f32 %v3177, %v3882
      %v4011 = vmax.f32 %v3178, %v3883
      %v4012 = vmax.f32 %v3179, %v3884
      %v4013 = vmax.f32 %v3180, %v3885
      %v4014 = vmax.f32 %v3181, %v3886
      %v4015 = vmax.f32 %v3182, %v3887
      %v4016 = vmax.f32 %v3183, %v3888
      %v4017 = vmax.f32 %v3184, %v3889
      %v4018 = vmax.f32 %v3185, %v3890
      %v4019 = vmax.f32 %v3186, %v3891
      %v4020 = vmax.f32 %v3187, %v3892
      %v4021 = vmax.f32 %v3188, %v3893
      %v4022 = vmax.f32 %v3189, %v3894
      %v4023 = vmax.f32 %v3190, %v3895
      %v4024 = vmax.f32 %v3191, %v3896
      %v4025 = vmax.f32 %v3192, %v3897
      %v4026 = vmax.f32 %v3193, %v3898
      %v4027 = vmax.f32 %v3194, %v3899
      %v4028 = vmax.f32 %v3195, %v3900
      %v4029 = vmax.f32 %v3196, %v3901
      %v4030 = vmax.f32 %v3197, %v3902
      %v4031 = vmax.f32 %v3198, %v3903
      %v4032 = vmax.f32 %v3199, %v3904
      %v4033 = vmax.f32 %v3200, %v3905
      %v4034 = vmax.f32 %v3201, %v3906
      %v4035 = vmax.f32 %v3202, %v3907
      %v4036 = vmax.f32 %v3203, %v3908
      %v4037 = vmax.f32 %v3204, %v3909
      %v4038 = vmax.f32 %v3205, %v3910
      %v4039 = vmax.f32 %v3206, %v3911
      %v4040 = vmax.f32 %v3207, %v3912
      %v4041 = vmax.f32 %v3208, %v3913
      %v4042 = vmax.f32 %v3209, %v3914
      %v4043 = vmax.f32 %v3210, %v3915
      %v4044 = vmax.f32 %v3211, %v3916
      %v4045 = vmax.f32 %v3212, %v3917
      %v4046 = vmax.f32 %v3213, %v3918
      %v4047 = vmax.f32 %v3214, %v3919
      %v4048 = vmax.f32 %v3215, %v3920
      %v4049 = vmax.f32 %v3216, %v3921
      %v4050 = vmax.f32 %v3217, %v3922
      %v4051 = vmax.f32 %v3218, %v3923
      %v4052 = vmax.f32 %v3219, %v3924
      %v4053 = vmax.f32 %v3220, %v3925
      %v4054 = vmax.f32 %v3221, %v3926
      %v4055 = vmax.f32 %v3222, %v3927
      %v4056 = vmax.f32 %v3223, %v3928
      %v4057 = vmax.f32 %v3224, %v3929
      %v4058 = vmax.f32 %v3225, %v3930
      %v4059 = vmax.f32 %v3226, %v3931
      %v4060 = vmax.f32 %v3227, %v3932
      %v4061 = vmax.f32 %v3228, %v3933
      %v4062 = vmax.f32 %v3229, %v3934
      %v4063 = vmax.f32 %v3230, %v3935
      %v4064 = vmax.f32 %v3231, %v3936
      %v4065 = vmax.f32 %v3232, %v3937
      %v4066 = vmax.f32 %v3233, %v3938
      %v4067 = vmax.f32 %v3234, %v3939
      %v4068 = vmax.f32 %v3235, %v3940
      %v4069 = vmax.f32 %v3236, %v3941
      %v4070 = vmax.f32 %v3237, %v3942
      %v4071 = vmax.f32 %v3238, %v3943
      %v4072 = vmax.f32 %v3239, %v3944
      %v4073 = vmax.f32 %v3240, %v3945
      %v4074 = vmax.f32 %v3241, %v3946
      %v4075 = vmax.f32 %v3242, %v3947
      %v4076 = vmax.f32 %v3243, %v3948
      %v4077 = vmax.f32 %v3244, %v3949
      %v4078 = vmax.f32 %v3245, %v3950
      %v4079 = vmax.f32 %v3246, %v3951
      %v4080 = vmax.f32 %v3247, %v3952
      %v4081 = vmax.f32 %v3248, %v3953
      %v4082 = vmax.f32 %v3249, %v3954
      %v4083 = vmax.f32 %v3250, %v3955
      %v4084 = vmax.f32 %v3251, %v3956
      %v4085 = vmax.f32 %v3252, %v3957
      %v4086 = vmax.f32 %v3253, %v3958
      %v4087 = vmax.f32 %v3254, %v3959
      %v4088 = vmax.f32 %v3255, %v3960
      %v4089 = vmax.f32 %v3256, %v3961
      %v4090 = vmax.f32 %v3257, %v3962
      %v4091 = vmax.f32 %v3258, %v3963
      %v4092 = vmax.f32 %v3259, %v3964
      %v4093 = vmax.f32 %v3260, %v3965
      %v4094 = vmax.f32 %v3261, %v3966
      %v4095 = vmax.f32 %v3262, %v3967
      %v4096 = vmax.f32 %v3263, %v3968
      %v4097 = vld [vmem:[%s5] sm:$0xff]
      %v4098 = vld [vmem:[%s5 + $0x8] sm:$0xff]
      %v4099 = vld [vmem:[%s5 + $0x10] sm:$0xff]
      %v4100 = vld [vmem:[%s5 + $0x18] sm:$0xff]
      %v4101 = vld [vmem:[%s5 + $0x20] sm:$0xff]
      %v4102 = vld [vmem:[%s5 + $0x28] sm:$0xff]
      %v4103 = vld [vmem:[%s5 + $0x30] sm:$0xff]
      %v4104 = vld [vmem:[%s5 + $0x38] sm:$0xff]
      %v4105 = vld [vmem:[%s5 + $0x40] sm:$0xff]
      %v4106 = vld [vmem:[%s5 + $0x48] sm:$0xff]
      %v4107 = vld [vmem:[%s5 + $0x50] sm:$0xff]
      %v4108 = vld [vmem:[%s5 + $0x58] sm:$0xff]
      %v4109 = vld [vmem:[%s5 + $0x60] sm:$0xff]
      %v4110 = vld [vmem:[%s5 + $0x68] sm:$0xff]
      %v4111 = vld [vmem:[%s5 + $0x70] sm:$0xff]
      %v4112 = vld [vmem:[%s5 + $0x78] sm:$0xff]
      %v4113 = vmul.f32 %v3969, %v4097
      %v4114 = vmul.f32 %v3970, %v4098
      %v4115 = vmul.f32 %v3971, %v4099
      %v4116 = vmul.f32 %v3972, %v4100
      %v4117 = vmul.f32 %v3973, %v4101
      %v4118 = vmul.f32 %v3974, %v4102
      %v4119 = vmul.f32 %v3975, %v4103
      %v4120 = vmul.f32 %v3976, %v4104
      %v4121 = vmul.f32 %v3977, %v4105
      %v4122 = vmul.f32 %v3978, %v4106
      %v4123 = vmul.f32 %v3979, %v4107
      %v4124 = vmul.f32 %v3980, %v4108
      %v4125 = vmul.f32 %v3981, %v4109
      %v4126 = vmul.f32 %v3982, %v4110
      %v4127 = vmul.f32 %v3983, %v4111
      %v4128 = vmul.f32 %v3984, %v4112
      %v4129 = vmul.f32 %v3985, %v4097
      %v4130 = vmul.f32 %v3986, %v4098
      %v4131 = vmul.f32 %v3987, %v4099
      %v4132 = vmul.f32 %v3988, %v4100
      %v4133 = vmul.f32 %v3989, %v4101
      %v4134 = vmul.f32 %v3990, %v4102
      %v4135 = vmul.f32 %v3991, %v4103
      %v4136 = vmul.f32 %v3992, %v4104
      %v4137 = vmul.f32 %v3993, %v4105
      %v4138 = vmul.f32 %v3994, %v4106
      %v4139 = vmul.f32 %v3995, %v4107
      %v4140 = vmul.f32 %v3996, %v4108
      %v4141 = vmul.f32 %v3997, %v4109
      %v4142 = vmul.f32 %v3998, %v4110
      %v4143 = vmul.f32 %v3999, %v4111
      %v4144 = vmul.f32 %v4000, %v4112
      %v4145 = vmul.f32 %v4001, %v4097
      %v4146 = vmul.f32 %v4002, %v4098
      %v4147 = vmul.f32 %v4003, %v4099
      %v4148 = vmul.f32 %v4004, %v4100
      %v4149 = vmul.f32 %v4005, %v4101
      %v4150 = vmul.f32 %v4006, %v4102
      %v4151 = vmul.f32 %v4007, %v4103
      %v4152 = vmul.f32 %v4008, %v4104
      %v4153 = vmul.f32 %v4009, %v4105
      %v4154 = vmul.f32 %v4010, %v4106
      %v4155 = vmul.f32 %v4011, %v4107
      %v4156 = vmul.f32 %v4012, %v4108
      %v4157 = vmul.f32 %v4013, %v4109
      %v4158 = vmul.f32 %v4014, %v4110
      %v4159 = vmul.f32 %v4015, %v4111
      %v4160 = vmul.f32 %v4016, %v4112
      %v4161 = vmul.f32 %v4017, %v4097
      %v4162 = vmul.f32 %v4018, %v4098
      %v4163 = vmul.f32 %v4019, %v4099
      %v4164 = vmul.f32 %v4020, %v4100
      %v4165 = vmul.f32 %v4021, %v4101
      %v4166 = vmul.f32 %v4022, %v4102
      %v4167 = vmul.f32 %v4023, %v4103
      %v4168 = vmul.f32 %v4024, %v4104
      %v4169 = vmul.f32 %v4025, %v4105
      %v4170 = vmul.f32 %v4026, %v4106
      %v4171 = vmul.f32 %v4027, %v4107
      %v4172 = vmul.f32 %v4028, %v4108
      %v4173 = vmul.f32 %v4029, %v4109
      %v4174 = vmul.f32 %v4030, %v4110
      %v4175 = vmul.f32 %v4031, %v4111
      %v4176 = vmul.f32 %v4032, %v4112
      %v4177 = vmul.f32 %v4033, %v4097
      %v4178 = vmul.f32 %v4034, %v4098
      %v4179 = vmul.f32 %v4035, %v4099
      %v4180 = vmul.f32 %v4036, %v4100
      %v4181 = vmul.f32 %v4037, %v4101
      %v4182 = vmul.f32 %v4038, %v4102
      %v4183 = vmul.f32 %v4039, %v4103
      %v4184 = vmul.f32 %v4040, %v4104
      %v4185 = vmul.f32 %v4041, %v4105
      %v4186 = vmul.f32 %v4042, %v4106
      %v4187 = vmul.f32 %v4043, %v4107
      %v4188 = vmul.f32 %v4044, %v4108
      %v4189 = vmul.f32 %v4045, %v4109
      %v4190 = vmul.f32 %v4046, %v4110
      %v4191 = vmul.f32 %v4047, %v4111
      %v4192 = vmul.f32 %v4048, %v4112
      %v4193 = vmul.f32 %v4049, %v4097
      %v4194 = vmul.f32 %v4050, %v4098
      %v4195 = vmul.f32 %v4051, %v4099
      %v4196 = vmul.f32 %v4052, %v4100
      %v4197 = vmul.f32 %v4053, %v4101
      %v4198 = vmul.f32 %v4054, %v4102
      %v4199 = vmul.f32 %v4055, %v4103
      %v4200 = vmul.f32 %v4056, %v4104
      %v4201 = vmul.f32 %v4057, %v4105
      %v4202 = vmul.f32 %v4058, %v4106
      %v4203 = vmul.f32 %v4059, %v4107
      %v4204 = vmul.f32 %v4060, %v4108
      %v4205 = vmul.f32 %v4061, %v4109
      %v4206 = vmul.f32 %v4062, %v4110
      %v4207 = vmul.f32 %v4063, %v4111
      %v4208 = vmul.f32 %v4064, %v4112
      %v4209 = vmul.f32 %v4065, %v4097
      %v4210 = vmul.f32 %v4066, %v4098
      %v4211 = vmul.f32 %v4067, %v4099
      %v4212 = vmul.f32 %v4068, %v4100
      %v4213 = vmul.f32 %v4069, %v4101
      %v4214 = vmul.f32 %v4070, %v4102
      %v4215 = vmul.f32 %v4071, %v4103
      %v4216 = vmul.f32 %v4072, %v4104
      %v4217 = vmul.f32 %v4073, %v4105
      %v4218 = vmul.f32 %v4074, %v4106
      %v4219 = vmul.f32 %v4075, %v4107
      %v4220 = vmul.f32 %v4076, %v4108
      %v4221 = vmul.f32 %v4077, %v4109
      %v4222 = vmul.f32 %v4078, %v4110
      %v4223 = vmul.f32 %v4079, %v4111
      %v4224 = vmul.f32 %v4080, %v4112
      %v4225 = vmul.f32 %v4081, %v4097
      %v4226 = vmul.f32 %v4082, %v4098
      %v4227 = vmul.f32 %v4083, %v4099
      %v4228 = vmul.f32 %v4084, %v4100
      %v4229 = vmul.f32 %v4085, %v4101
      %v4230 = vmul.f32 %v4086, %v4102
      %v4231 = vmul.f32 %v4087, %v4103
      %v4232 = vmul.f32 %v4088, %v4104
      %v4233 = vmul.f32 %v4089, %v4105
      %v4234 = vmul.f32 %v4090, %v4106
      %v4235 = vmul.f32 %v4091, %v4107
      %v4236 = vmul.f32 %v4092, %v4108
      %v4237 = vmul.f32 %v4093, %v4109
      %v4238 = vmul.f32 %v4094, %v4110
      %v4239 = vmul.f32 %v4095, %v4111
      %v4240 = vmul.f32 %v4096, %v4112
      %v4241 = vpack.c.bf16 %v4114, %v4113
      %v4242 = vpack.c.bf16 %v4116, %v4115
      %v4243 = vpack.c.bf16 %v4118, %v4117
      %v4244 = vpack.c.bf16 %v4120, %v4119
      %v4245 = vpack.c.bf16 %v4122, %v4121
      %v4246 = vpack.c.bf16 %v4124, %v4123
      %v4247 = vpack.c.bf16 %v4126, %v4125
      %v4248 = vpack.c.bf16 %v4128, %v4127
      %v4249 = vpack.c.bf16 %v4130, %v4129
      %v4250 = vpack.c.bf16 %v4132, %v4131
      %v4251 = vpack.c.bf16 %v4134, %v4133
      %v4252 = vpack.c.bf16 %v4136, %v4135
      %v4253 = vpack.c.bf16 %v4138, %v4137
      %v4254 = vpack.c.bf16 %v4140, %v4139
      %v4255 = vpack.c.bf16 %v4142, %v4141
      %v4256 = vpack.c.bf16 %v4144, %v4143
      %v4257 = vpack.c.bf16 %v4146, %v4145
      %v4258 = vpack.c.bf16 %v4148, %v4147
      %v4259 = vpack.c.bf16 %v4150, %v4149
      %v4260 = vpack.c.bf16 %v4152, %v4151
      %v4261 = vpack.c.bf16 %v4154, %v4153
      %v4262 = vpack.c.bf16 %v4156, %v4155
      %v4263 = vpack.c.bf16 %v4158, %v4157
      %v4264 = vpack.c.bf16 %v4160, %v4159
      %v4265 = vpack.c.bf16 %v4162, %v4161
      %v4266 = vpack.c.bf16 %v4164, %v4163
      %v4267 = vpack.c.bf16 %v4166, %v4165
      %v4268 = vpack.c.bf16 %v4168, %v4167
      %v4269 = vpack.c.bf16 %v4170, %v4169
      %v4270 = vpack.c.bf16 %v4172, %v4171
      %v4271 = vpack.c.bf16 %v4174, %v4173
      %v4272 = vpack.c.bf16 %v4176, %v4175
      %v4273 = vpack.c.bf16 %v4178, %v4177
      %v4274 = vpack.c.bf16 %v4180, %v4179
      %v4275 = vpack.c.bf16 %v4182, %v4181
      %v4276 = vpack.c.bf16 %v4184, %v4183
      %v4277 = vpack.c.bf16 %v4186, %v4185
      %v4278 = vpack.c.bf16 %v4188, %v4187
      %v4279 = vpack.c.bf16 %v4190, %v4189
      %v4280 = vpack.c.bf16 %v4192, %v4191
      %v4281 = vpack.c.bf16 %v4194, %v4193
      %v4282 = vpack.c.bf16 %v4196, %v4195
      %v4283 = vpack.c.bf16 %v4198, %v4197
      %v4284 = vpack.c.bf16 %v4200, %v4199
      %v4285 = vpack.c.bf16 %v4202, %v4201
      %v4286 = vpack.c.bf16 %v4204, %v4203
      %v4287 = vpack.c.bf16 %v4206, %v4205
      %v4288 = vpack.c.bf16 %v4208, %v4207
      %v4289 = vpack.c.bf16 %v4210, %v4209
      %v4290 = vpack.c.bf16 %v4212, %v4211
      %v4291 = vpack.c.bf16 %v4214, %v4213
      %v4292 = vpack.c.bf16 %v4216, %v4215
      %v4293 = vpack.c.bf16 %v4218, %v4217
      %v4294 = vpack.c.bf16 %v4220, %v4219
      %v4295 = vpack.c.bf16 %v4222, %v4221
      %v4296 = vpack.c.bf16 %v4224, %v4223
      %v4297 = vpack.c.bf16 %v4226, %v4225
      %v4298 = vpack.c.bf16 %v4228, %v4227
      %v4299 = vpack.c.bf16 %v4230, %v4229
      %v4300 = vpack.c.bf16 %v4232, %v4231
      %v4301 = vpack.c.bf16 %v4234, %v4233
      %v4302 = vpack.c.bf16 %v4236, %v4235
      %v4303 = vpack.c.bf16 %v4238, %v4237
      %v4304 = vpack.c.bf16 %v4240, %v4239
      %v4305 = vld [vmem:[%s3] sm:$0xf]
      %v4306 = vld [vmem:[%s3 + $0x4] sm:$0xf]
      %v4307 = vld [vmem:[%s3 + $0x8] sm:$0xf]
      %v4308 = vld [vmem:[%s3 + $0xc] sm:$0xf]
      %v4309 = vld [vmem:[%s3 + $0x10] sm:$0xf]
      %v4310 = vld [vmem:[%s3 + $0x14] sm:$0xf]
      %v4311 = vld [vmem:[%s3 + $0x18] sm:$0xf]
      %v4312 = vld [vmem:[%s3 + $0x1c] sm:$0xf]
      %v4313 = vld [vmem:[%s3 + $0x20] sm:$0xf]
      %v4314 = vld [vmem:[%s3 + $0x24] sm:$0xf]
      %v4315 = vld [vmem:[%s3 + $0x28] sm:$0xf]
      %v4316 = vld [vmem:[%s3 + $0x2c] sm:$0xf]
      %v4317 = vld [vmem:[%s3 + $0x30] sm:$0xf]
      %v4318 = vld [vmem:[%s3 + $0x34] sm:$0xf]
      %v4319 = vld [vmem:[%s3 + $0x38] sm:$0xf]
      %v4320 = vld [vmem:[%s3 + $0x3c] sm:$0xf]
      %v4321 = vld [vmem:[%s4] sm:$0x1]
      %v4323 = vlaneseq
      %v4324 = vshrl.u32 %v4323, 7
      %v4325 = vsub.s32 0, %v4324
      %v4326 = vrot.slane %v4321, %v4325
      %v4344 = vunpack.c.l.b16 %v4305
      %v4345 = vunpack.c.l.b16 %v4306
      %v4346 = vunpack.c.l.b16 %v4307
      %v4347 = vunpack.c.l.b16 %v4308
      %v4348 = vunpack.c.l.b16 %v4309
      %v4349 = vunpack.c.l.b16 %v4310
      %v4350 = vunpack.c.l.b16 %v4311
      %v4351 = vunpack.c.l.b16 %v4312
      %v4352 = vunpack.c.l.b16 %v4313
      %v4353 = vunpack.c.l.b16 %v4314
      %v4354 = vunpack.c.l.b16 %v4315
      %v4355 = vunpack.c.l.b16 %v4316
      %v4356 = vunpack.c.l.b16 %v4317
      %v4357 = vunpack.c.l.b16 %v4318
      %v4358 = vunpack.c.l.b16 %v4319
      %v4359 = vunpack.c.l.b16 %v4320
      %v4360 = vpack.c.b16 %v4345, %v4344
      %v4361 = vpack.c.b16 %v4347, %v4346
      %v4362 = vpack.c.b16 %v4349, %v4348
      %v4363 = vpack.c.b16 %v4351, %v4350
      %v4364 = vpack.c.b16 %v4353, %v4352
      %v4365 = vpack.c.b16 %v4355, %v4354
      %v4366 = vpack.c.b16 %v4357, %v4356
      %v4367 = vpack.c.b16 %v4359, %v4358
      %4376 = vmatprep.subr.bf16.mxu0 0
      %4377 = vmatpush1.bf16.msra.mxu0 %v4360
      %4378 = vmatprep.subr.bf16.mxu0 0
      %4379 = vmatpush1.bf16.msra.mxu0 %v4361
      %4380 = vmatprep.subr.bf16.mxu0 0
      %4381 = vmatpush1.bf16.msra.mxu0 %v4362
      %4382 = vmatprep.subr.bf16.mxu0 0
      %4383 = vmatpush1.bf16.msra.mxu0 %v4363
      %4384 = vmatprep.subr.bf16.mxu0 0
      %4385 = vmatpush1.bf16.msra.mxu0 %v4364
      %4386 = vmatprep.subr.bf16.mxu0 0
      %4387 = vmatpush1.bf16.msra.mxu0 %v4365
      %4388 = vmatprep.subr.bf16.mxu0 0
      %4389 = vmatpush1.bf16.msra.mxu0 %v4366
      %4390 = vmatprep.subr.bf16.mxu0 0
      %4391 = vmatpush1.bf16.msra.mxu0 %v4367
      %4392 = vmatprep.subr.bf16.mxu0 0
      %4393 = vmatpush1.bf16.msra.mxu0 0
      %4394 = vmatprep.subr.bf16.mxu0 0
      %4395 = vmatpush1.bf16.msra.mxu0 0
      %4396 = vmatprep.subr.bf16.mxu0 0
      %4397 = vmatpush1.bf16.msra.mxu0 0
      %4398 = vmatprep.subr.bf16.mxu0 0
      %4399 = vmatpush1.bf16.msra.mxu0 0
      %4400 = vmatprep.subr.bf16.mxu0 0
      %4401 = vmatpush1.bf16.msra.mxu0 0
      %4402 = vmatprep.subr.bf16.mxu0 0
      %4403 = vmatpush1.bf16.msra.mxu0 0
      %4404 = vmatprep.subr.bf16.mxu0 0
      %4405 = vmatpush1.bf16.msra.mxu0 0
      %4406 = vmatprep.subr.bf16.mxu0 0
      %4407 = vmatpush1.bf16.msra.mxu0 0
      %4408 = vmatprep.mubr.bf16.mxu0 0
      %4409 = vmatmul.mubr.bf16.gmra.mrb[0].mxu0 %v4241
      %v4410 = vpop.f32.mrb[0].mxu0
      %v4411 = vadd.f32 %v4326, %v4410
      %v4412 = vpop.f32.mrb[0].mxu0
      %v4413 = vpop.f32.mrb[0].mxu0
      %v4414 = vadd.f32 %v4326, %v4413
      %v4415 = vpop.f32.mrb[0].mxu0
      %4416 = vmatprep.mubr.bf16.mxu0 0
      %4417 = vmatmul.mubr.bf16.gmra.mrb[0].mxu0 %v4242
      %v4418 = vpop.f32.mrb[0].mxu0
      %v4419 = vadd.f32 %v4326, %v4418
      %v4420 = vpop.f32.mrb[0].mxu0
      %v4421 = vpop.f32.mrb[0].mxu0
      %v4422 = vadd.f32 %v4326, %v4421
      %v4423 = vpop.f32.mrb[0].mxu0
      %4424 = vmatprep.mubr.bf16.mxu0 0
      %4425 = vmatmul.mubr.bf16.gmra.mrb[0].mxu0 %v4243
      %v4426 = vpop.f32.mrb[0].mxu0
      %v4427 = vadd.f32 %v4326, %v4426
      %v4428 = vpop.f32.mrb[0].mxu0
      %v4429 = vpop.f32.mrb[0].mxu0
      %v4430 = vadd.f32 %v4326, %v4429
      %v4431 = vpop.f32.mrb[0].mxu0
      %4432 = vmatprep.mubr.bf16.mxu0 0
      %4433 = vmatmul.mubr.bf16.gmra.mrb[0].mxu0 %v4244
      %v4434 = vpop.f32.mrb[0].mxu0
      %v4435 = vadd.f32 %v4326, %v4434
      %v4436 = vpop.f32.mrb[0].mxu0
      %v4437 = vpop.f32.mrb[0].mxu0
      %v4438 = vadd.f32 %v4326, %v4437
      %v4439 = vpop.f32.mrb[0].mxu0
      %4440 = vmatprep.mubr.bf16.mxu0 0
      %4441 = vmatmul.mubr.bf16.gmra.mrb[0].mxu0 %v4245
      %v4442 = vpop.f32.mrb[0].mxu0
      %v4443 = vadd.f32 %v4326, %v4442
      %v4444 = vpop.f32.mrb[0].mxu0
      %v4445 = vpop.f32.mrb[0].mxu0
      %v4446 = vadd.f32 %v4326, %v4445
      %v4447 = vpop.f32.mrb[0].mxu0
      %4448 = vmatprep.mubr.bf16.mxu0 0
      %4449 = vmatmul.mubr.bf16.gmra.mrb[0].mxu0 %v4246
      %v4450 = vpop.f32.mrb[0].mxu0
      %v4451 = vadd.f32 %v4326, %v4450
      %v4452 = vpop.f32.mrb[0].mxu0
      %v4453 = vpop.f32.mrb[0].mxu0
      %v4454 = vadd.f32 %v4326, %v4453
      %v4455 = vpop.f32.mrb[0].mxu0
      %4456 = vmatprep.mubr.bf16.mxu0 0
      %4457 = vmatmul.mubr.bf16.gmra.mrb[0].mxu0 %v4247
      %v4458 = vpop.f32.mrb[0].mxu0
      %v4459 = vadd.f32 %v4326, %v4458
      %v4460 = vpop.f32.mrb[0].mxu0
      %v4461 = vpop.f32.mrb[0].mxu0
      %v4462 = vadd.f32 %v4326, %v4461
      %v4463 = vpop.f32.mrb[0].mxu0
      %4464 = vmatprep.mubr.bf16.mxu0 0
      %4465 = vmatmul.mubr.bf16.gmra.mrb[0].mxu0 %v4248
      %v4466 = vpop.f32.mrb[0].mxu0
      %v4467 = vadd.f32 %v4326, %v4466
      %v4468 = vpop.f32.mrb[0].mxu0
      %v4469 = vpop.f32.mrb[0].mxu0
      %v4470 = vadd.f32 %v4326, %v4469
      %v4471 = vpop.f32.mrb[0].mxu0
      %4472 = vmatprep.mubr.bf16.mxu0 0
      %4473 = vmatmul.mubr.bf16.gmra.mrb[0].mxu0 %v4249
      %v4474 = vpop.f32.mrb[0].mxu0
      %v4475 = vadd.f32 %v4326, %v4474
      %v4476 = vpop.f32.mrb[0].mxu0
      %v4477 = vpop.f32.mrb[0].mxu0
      %v4478 = vadd.f32 %v4326, %v4477
      %v4479 = vpop.f32.mrb[0].mxu0
      %4480 = vmatprep.mubr.bf16.mxu0 0
      %4481 = vmatmul.mubr.bf16.gmra.mrb[0].mxu0 %v4250
      %v4482 = vpop.f32.mrb[0].mxu0
      %v4483 = vadd.f32 %v4326, %v4482
      %v4484 = vpop.f32.mrb[0].mxu0
      %v4485 = vpop.f32.mrb[0].mxu0
      %v4486 = vadd.f32 %v4326, %v4485
      %v4487 = vpop.f32.mrb[0].mxu0
      %4488 = vmatprep.mubr.bf16.mxu0 0
      %4489 = vmatmul.mubr.bf16.gmra.mrb[0].mxu0 %v4251
      %v4490 = vpop.f32.mrb[0].mxu0
      %v4491 = vadd.f32 %v4326, %v4490
      %v4492 = vpop.f32.mrb[0].mxu0
      %v4493 = vpop.f32.mrb[0].mxu0
      %v4494 = vadd.f32 %v4326, %v4493
      %v4495 = vpop.f32.mrb[0].mxu0
      %4496 = vmatprep.mubr.bf16.mxu0 0
      %4497 = vmatmul.mubr.bf16.gmra.mrb[0].mxu0 %v4252
      %v4498 = vpop.f32.mrb[0].mxu0
      %v4499 = vadd.f32 %v4326, %v4498
      %v4500 = vpop.f32.mrb[0].mxu0
      %v4501 = vpop.f32.mrb[0].mxu0
      %v4502 = vadd.f32 %v4326, %v4501
      %v4503 = vpop.f32.mrb[0].mxu0
      %4504 = vmatprep.mubr.bf16.mxu0 0
      %4505 = vmatmul.mubr.bf16.gmra.mrb[0].mxu0 %v4253
      %v4506 = vpop.f32.mrb[0].mxu0
      %v4507 = vadd.f32 %v4326, %v4506
      %v4508 = vpop.f32.mrb[0].mxu0
      %v4509 = vpop.f32.mrb[0].mxu0
      %v4510 = vadd.f32 %v4326, %v4509
      %v4511 = vpop.f32.mrb[0].mxu0
      %4512 = vmatprep.mubr.bf16.mxu0 0
      %4513 = vmatmul.mubr.bf16.gmra.mrb[0].mxu0 %v4254
      %v4514 = vpop.f32.mrb[0].mxu0
      %v4515 = vadd.f32 %v4326, %v4514
      %v4516 = vpop.f32.mrb[0].mxu0
      %v4517 = vpop.f32.mrb[0].mxu0
      %v4518 = vadd.f32 %v4326, %v4517
      %v4519 = vpop.f32.mrb[0].mxu0
      %4520 = vmatprep.mubr.bf16.mxu0 0
      %4521 = vmatmul.mubr.bf16.gmra.mrb[0].mxu0 %v4255
      %v4522 = vpop.f32.mrb[0].mxu0
      %v4523 = vadd.f32 %v4326, %v4522
      %v4524 = vpop.f32.mrb[0].mxu0
      %v4525 = vpop.f32.mrb[0].mxu0
      %v4526 = vadd.f32 %v4326, %v4525
      %v4527 = vpop.f32.mrb[0].mxu0
      %4528 = vmatprep.mubr.bf16.mxu0 0
      %4529 = vmatmul.mubr.bf16.gmra.mrb[0].mxu0 %v4256
      %v4530 = vpop.f32.mrb[0].mxu0
      %v4531 = vadd.f32 %v4326, %v4530
      %v4532 = vpop.f32.mrb[0].mxu0
      %v4533 = vpop.f32.mrb[0].mxu0
      %v4534 = vadd.f32 %v4326, %v4533
      %v4535 = vpop.f32.mrb[0].mxu0
      %4536 = vmatprep.mubr.bf16.mxu0 0
      %4537 = vmatmul.mubr.bf16.gmra.mrb[0].mxu0 %v4257
      %v4538 = vpop.f32.mrb[0].mxu0
      %v4539 = vadd.f32 %v4326, %v4538
      %v4540 = vpop.f32.mrb[0].mxu0
      %v4541 = vpop.f32.mrb[0].mxu0
      %v4542 = vadd.f32 %v4326, %v4541
      %v4543 = vpop.f32.mrb[0].mxu0
      %4544 = vmatprep.mubr.bf16.mxu0 0
      %4545 = vmatmul.mubr.bf16.gmra.mrb[0].mxu0 %v4258
      %v4546 = vpop.f32.mrb[0].mxu0
      %v4547 = vadd.f32 %v4326, %v4546
      %v4548 = vpop.f32.mrb[0].mxu0
      %v4549 = vpop.f32.mrb[0].mxu0
      %v4550 = vadd.f32 %v4326, %v4549
      %v4551 = vpop.f32.mrb[0].mxu0
      %4552 = vmatprep.mubr.bf16.mxu0 0
      %4553 = vmatmul.mubr.bf16.gmra.mrb[0].mxu0 %v4259
      %v4554 = vpop.f32.mrb[0].mxu0
      %v4555 = vadd.f32 %v4326, %v4554
      %v4556 = vpop.f32.mrb[0].mxu0
      %v4557 = vpop.f32.mrb[0].mxu0
      %v4558 = vadd.f32 %v4326, %v4557
      %v4559 = vpop.f32.mrb[0].mxu0
      %4560 = vmatprep.mubr.bf16.mxu0 0
      %4561 = vmatmul.mubr.bf16.gmra.mrb[0].mxu0 %v4260
      %v4562 = vpop.f32.mrb[0].mxu0
      %v4563 = vadd.f32 %v4326, %v4562
      %v4564 = vpop.f32.mrb[0].mxu0
      %v4565 = vpop.f32.mrb[0].mxu0
      %v4566 = vadd.f32 %v4326, %v4565
      %v4567 = vpop.f32.mrb[0].mxu0
      %4568 = vmatprep.mubr.bf16.mxu0 0
      %4569 = vmatmul.mubr.bf16.gmra.mrb[0].mxu0 %v4261
      %v4570 = vpop.f32.mrb[0].mxu0
      %v4571 = vadd.f32 %v4326, %v4570
      %v4572 = vpop.f32.mrb[0].mxu0
      %v4573 = vpop.f32.mrb[0].mxu0
      %v4574 = vadd.f32 %v4326, %v4573
      %v4575 = vpop.f32.mrb[0].mxu0
      %4576 = vmatprep.mubr.bf16.mxu0 0
      %4577 = vmatmul.mubr.bf16.gmra.mrb[0].mxu0 %v4262
      %v4578 = vpop.f32.mrb[0].mxu0
      %v4579 = vadd.f32 %v4326, %v4578
      %v4580 = vpop.f32.mrb[0].mxu0
      %v4581 = vpop.f32.mrb[0].mxu0
      %v4582 = vadd.f32 %v4326, %v4581
      %v4583 = vpop.f32.mrb[0].mxu0
      %4584 = vmatprep.mubr.bf16.mxu0 0
      %4585 = vmatmul.mubr.bf16.gmra.mrb[0].mxu0 %v4263
      %v4586 = vpop.f32.mrb[0].mxu0
      %v4587 = vadd.f32 %v4326, %v4586
      %v4588 = vpop.f32.mrb[0].mxu0
      %v4589 = vpop.f32.mrb[0].mxu0
      %v4590 = vadd.f32 %v4326, %v4589
      %v4591 = vpop.f32.mrb[0].mxu0
      %4592 = vmatprep.mubr.bf16.mxu0 0
      %4593 = vmatmul.mubr.bf16.gmra.mrb[0].mxu0 %v4264
      %v4594 = vpop.f32.mrb[0].mxu0
      %v4595 = vadd.f32 %v4326, %v4594
      %v4596 = vpop.f32.mrb[0].mxu0
      %v4597 = vpop.f32.mrb[0].mxu0
      %v4598 = vadd.f32 %v4326, %v4597
      %v4599 = vpop.f32.mrb[0].mxu0
      %4600 = vmatprep.mubr.bf16.mxu0 0
      %4601 = vmatmul.mubr.bf16.gmra.mrb[0].mxu0 %v4265
      %v4602 = vpop.f32.mrb[0].mxu0
      %v4603 = vadd.f32 %v4326, %v4602
      %v4604 = vpop.f32.mrb[0].mxu0
      %v4605 = vpop.f32.mrb[0].mxu0
      %v4606 = vadd.f32 %v4326, %v4605
      %v4607 = vpop.f32.mrb[0].mxu0
      %4608 = vmatprep.mubr.bf16.mxu0 0
      %4609 = vmatmul.mubr.bf16.gmra.mrb[0].mxu0 %v4266
      %v4610 = vpop.f32.mrb[0].mxu0
      %v4611 = vadd.f32 %v4326, %v4610
      %v4612 = vpop.f32.mrb[0].mxu0
      %v4613 = vpop.f32.mrb[0].mxu0
      %v4614 = vadd.f32 %v4326, %v4613
      %v4615 = vpop.f32.mrb[0].mxu0
      %4616 = vmatprep.mubr.bf16.mxu0 0
      %4617 = vmatmul.mubr.bf16.gmra.mrb[0].mxu0 %v4267
      %v4618 = vpop.f32.mrb[0].mxu0
      %v4619 = vadd.f32 %v4326, %v4618
      %v4620 = vpop.f32.mrb[0].mxu0
      %v4621 = vpop.f32.mrb[0].mxu0
      %v4622 = vadd.f32 %v4326, %v4621
      %v4623 = vpop.f32.mrb[0].mxu0
      %4624 = vmatprep.mubr.bf16.mxu0 0
      %4625 = vmatmul.mubr.bf16.gmra.mrb[0].mxu0 %v4268
      %v4626 = vpop.f32.mrb[0].mxu0
      %v4627 = vadd.f32 %v4326, %v4626
      %v4628 = vpop.f32.mrb[0].mxu0
      %v4629 = vpop.f32.mrb[0].mxu0
      %v4630 = vadd.f32 %v4326, %v4629
      %v4631 = vpop.f32.mrb[0].mxu0
      %4632 = vmatprep.mubr.bf16.mxu0 0
      %4633 = vmatmul.mubr.bf16.gmra.mrb[0].mxu0 %v4269
      %v4634 = vpop.f32.mrb[0].mxu0
      %v4635 = vadd.f32 %v4326, %v4634
      %v4636 = vpop.f32.mrb[0].mxu0
      %v4637 = vpop.f32.mrb[0].mxu0
      %v4638 = vadd.f32 %v4326, %v4637
      %v4639 = vpop.f32.mrb[0].mxu0
      %4640 = vmatprep.mubr.bf16.mxu0 0
      %4641 = vmatmul.mubr.bf16.gmra.mrb[0].mxu0 %v4270
      %v4642 = vpop.f32.mrb[0].mxu0
      %v4643 = vadd.f32 %v4326, %v4642
      %v4644 = vpop.f32.mrb[0].mxu0
      %v4645 = vpop.f32.mrb[0].mxu0
      %v4646 = vadd.f32 %v4326, %v4645
      %v4647 = vpop.f32.mrb[0].mxu0
      %4648 = vmatprep.mubr.bf16.mxu0 0
      %4649 = vmatmul.mubr.bf16.gmra.mrb[0].mxu0 %v4271
      %v4650 = vpop.f32.mrb[0].mxu0
      %v4651 = vadd.f32 %v4326, %v4650
      %v4652 = vpop.f32.mrb[0].mxu0
      %v4653 = vpop.f32.mrb[0].mxu0
      %v4654 = vadd.f32 %v4326, %v4653
      %v4655 = vpop.f32.mrb[0].mxu0
      %4656 = vmatprep.mubr.bf16.mxu0 0
      %4657 = vmatmul.mubr.bf16.gmra.mrb[0].mxu0 %v4272
      %v4658 = vpop.f32.mrb[0].mxu0
      %v4659 = vadd.f32 %v4326, %v4658
      %v4660 = vpop.f32.mrb[0].mxu0
      %v4661 = vpop.f32.mrb[0].mxu0
      %v4662 = vadd.f32 %v4326, %v4661
      %v4663 = vpop.f32.mrb[0].mxu0
      %4664 = vmatprep.mubr.bf16.mxu0 0
      %4665 = vmatmul.mubr.bf16.gmra.mrb[0].mxu0 %v4273
      %v4666 = vpop.f32.mrb[0].mxu0
      %v4667 = vadd.f32 %v4326, %v4666
      %v4668 = vpop.f32.mrb[0].mxu0
      %v4669 = vpop.f32.mrb[0].mxu0
      %v4670 = vadd.f32 %v4326, %v4669
      %v4671 = vpop.f32.mrb[0].mxu0
      %4672 = vmatprep.mubr.bf16.mxu0 0
      %4673 = vmatmul.mubr.bf16.gmra.mrb[0].mxu0 %v4274
      %v4674 = vpop.f32.mrb[0].mxu0
      %v4675 = vadd.f32 %v4326, %v4674
      %v4676 = vpop.f32.mrb[0].mxu0
      %v4677 = vpop.f32.mrb[0].mxu0
      %v4678 = vadd.f32 %v4326, %v4677
      %v4679 = vpop.f32.mrb[0].mxu0
      %4680 = vmatprep.mubr.bf16.mxu0 0
      %4681 = vmatmul.mubr.bf16.gmra.mrb[0].mxu0 %v4275
      %v4682 = vpop.f32.mrb[0].mxu0
      %v4683 = vadd.f32 %v4326, %v4682
      %v4684 = vpop.f32.mrb[0].mxu0
      %v4685 = vpop.f32.mrb[0].mxu0
      %v4686 = vadd.f32 %v4326, %v4685
      %v4687 = vpop.f32.mrb[0].mxu0
      %4688 = vmatprep.mubr.bf16.mxu0 0
      %4689 = vmatmul.mubr.bf16.gmra.mrb[0].mxu0 %v4276
      %v4690 = vpop.f32.mrb[0].mxu0
      %v4691 = vadd.f32 %v4326, %v4690
      %v4692 = vpop.f32.mrb[0].mxu0
      %v4693 = vpop.f32.mrb[0].mxu0
      %v4694 = vadd.f32 %v4326, %v4693
      %v4695 = vpop.f32.mrb[0].mxu0
      %4696 = vmatprep.mubr.bf16.mxu0 0
      %4697 = vmatmul.mubr.bf16.gmra.mrb[0].mxu0 %v4277
      %v4698 = vpop.f32.mrb[0].mxu0
      %v4699 = vadd.f32 %v4326, %v4698
      %v4700 = vpop.f32.mrb[0].mxu0
      %v4701 = vpop.f32.mrb[0].mxu0
      %v4702 = vadd.f32 %v4326, %v4701
      %v4703 = vpop.f32.mrb[0].mxu0
      %4704 = vmatprep.mubr.bf16.mxu0 0
      %4705 = vmatmul.mubr.bf16.gmra.mrb[0].mxu0 %v4278
      %v4706 = vpop.f32.mrb[0].mxu0
      %v4707 = vadd.f32 %v4326, %v4706
      %v4708 = vpop.f32.mrb[0].mxu0
      %v4709 = vpop.f32.mrb[0].mxu0
      %v4710 = vadd.f32 %v4326, %v4709
      %v4711 = vpop.f32.mrb[0].mxu0
      %4712 = vmatprep.mubr.bf16.mxu0 0
      %4713 = vmatmul.mubr.bf16.gmra.mrb[0].mxu0 %v4279
      %v4714 = vpop.f32.mrb[0].mxu0
      %v4715 = vadd.f32 %v4326, %v4714
      %v4716 = vpop.f32.mrb[0].mxu0
      %v4717 = vpop.f32.mrb[0].mxu0
      %v4718 = vadd.f32 %v4326, %v4717
      %v4719 = vpop.f32.mrb[0].mxu0
      %4720 = vmatprep.mubr.bf16.mxu0 0
      %4721 = vmatmul.mubr.bf16.gmra.mrb[0].mxu0 %v4280
      %v4722 = vpop.f32.mrb[0].mxu0
      %v4723 = vadd.f32 %v4326, %v4722
      %v4724 = vpop.f32.mrb[0].mxu0
      %v4725 = vpop.f32.mrb[0].mxu0
      %v4726 = vadd.f32 %v4326, %v4725
      %v4727 = vpop.f32.mrb[0].mxu0
      %4728 = vmatprep.mubr.bf16.mxu0 0
      %4729 = vmatmul.mubr.bf16.gmra.mrb[0].mxu0 %v4281
      %v4730 = vpop.f32.mrb[0].mxu0
      %v4731 = vadd.f32 %v4326, %v4730
      %v4732 = vpop.f32.mrb[0].mxu0
      %v4733 = vpop.f32.mrb[0].mxu0
      %v4734 = vadd.f32 %v4326, %v4733
      %v4735 = vpop.f32.mrb[0].mxu0
      %4736 = vmatprep.mubr.bf16.mxu0 0
      %4737 = vmatmul.mubr.bf16.gmra.mrb[0].mxu0 %v4282
      %v4738 = vpop.f32.mrb[0].mxu0
      %v4739 = vadd.f32 %v4326, %v4738
      %v4740 = vpop.f32.mrb[0].mxu0
      %v4741 = vpop.f32.mrb[0].mxu0
      %v4742 = vadd.f32 %v4326, %v4741
      %v4743 = vpop.f32.mrb[0].mxu0
      %4744 = vmatprep.mubr.bf16.mxu0 0
      %4745 = vmatmul.mubr.bf16.gmra.mrb[0].mxu0 %v4283
      %v4746 = vpop.f32.mrb[0].mxu0
      %v4747 = vadd.f32 %v4326, %v4746
      %v4748 = vpop.f32.mrb[0].mxu0
      %v4749 = vpop.f32.mrb[0].mxu0
      %v4750 = vadd.f32 %v4326, %v4749
      %v4751 = vpop.f32.mrb[0].mxu0
      %4752 = vmatprep.mubr.bf16.mxu0 0
      %4753 = vmatmul.mubr.bf16.gmra.mrb[0].mxu0 %v4284
      %v4754 = vpop.f32.mrb[0].mxu0
      %v4755 = vadd.f32 %v4326, %v4754
      %v4756 = vpop.f32.mrb[0].mxu0
      %v4757 = vpop.f32.mrb[0].mxu0
      %v4758 = vadd.f32 %v4326, %v4757
      %v4759 = vpop.f32.mrb[0].mxu0
      %4760 = vmatprep.mubr.bf16.mxu0 0
      %4761 = vmatmul.mubr.bf16.gmra.mrb[0].mxu0 %v4285
      %v4762 = vpop.f32.mrb[0].mxu0
      %v4763 = vadd.f32 %v4326, %v4762
      %v4764 = vpop.f32.mrb[0].mxu0
      %v4765 = vpop.f32.mrb[0].mxu0
      %v4766 = vadd.f32 %v4326, %v4765
      %v4767 = vpop.f32.mrb[0].mxu0
      %4768 = vmatprep.mubr.bf16.mxu0 0
      %4769 = vmatmul.mubr.bf16.gmra.mrb[0].mxu0 %v4286
      %v4770 = vpop.f32.mrb[0].mxu0
      %v4771 = vadd.f32 %v4326, %v4770
      %v4772 = vpop.f32.mrb[0].mxu0
      %v4773 = vpop.f32.mrb[0].mxu0
      %v4774 = vadd.f32 %v4326, %v4773
      %v4775 = vpop.f32.mrb[0].mxu0
      %4776 = vmatprep.mubr.bf16.mxu0 0
      %4777 = vmatmul.mubr.bf16.gmra.mrb[0].mxu0 %v4287
      %v4778 = vpop.f32.mrb[0].mxu0
      %v4779 = vadd.f32 %v4326, %v4778
      %v4780 = vpop.f32.mrb[0].mxu0
      %v4781 = vpop.f32.mrb[0].mxu0
      %v4782 = vadd.f32 %v4326, %v4781
      %v4783 = vpop.f32.mrb[0].mxu0
      %4784 = vmatprep.mubr.bf16.mxu0 0
      %4785 = vmatmul.mubr.bf16.gmra.mrb[0].mxu0 %v4288
      %v4786 = vpop.f32.mrb[0].mxu0
      %v4787 = vadd.f32 %v4326, %v4786
      %v4788 = vpop.f32.mrb[0].mxu0
      %v4789 = vpop.f32.mrb[0].mxu0
      %v4790 = vadd.f32 %v4326, %v4789
      %v4791 = vpop.f32.mrb[0].mxu0
      %4792 = vmatprep.mubr.bf16.mxu0 0
      %4793 = vmatmul.mubr.bf16.gmra.mrb[0].mxu0 %v4289
      %v4794 = vpop.f32.mrb[0].mxu0
      %v4795 = vadd.f32 %v4326, %v4794
      %v4796 = vpop.f32.mrb[0].mxu0
      %v4797 = vpop.f32.mrb[0].mxu0
      %v4798 = vadd.f32 %v4326, %v4797
      %v4799 = vpop.f32.mrb[0].mxu0
      %4800 = vmatprep.mubr.bf16.mxu0 0
      %4801 = vmatmul.mubr.bf16.gmra.mrb[0].mxu0 %v4290
      %v4802 = vpop.f32.mrb[0].mxu0
      %v4803 = vadd.f32 %v4326, %v4802
      %v4804 = vpop.f32.mrb[0].mxu0
      %v4805 = vpop.f32.mrb[0].mxu0
      %v4806 = vadd.f32 %v4326, %v4805
      %v4807 = vpop.f32.mrb[0].mxu0
      %4808 = vmatprep.mubr.bf16.mxu0 0
      %4809 = vmatmul.mubr.bf16.gmra.mrb[0].mxu0 %v4291
      %v4810 = vpop.f32.mrb[0].mxu0
      %v4811 = vadd.f32 %v4326, %v4810
      %v4812 = vpop.f32.mrb[0].mxu0
      %v4813 = vpop.f32.mrb[0].mxu0
      %v4814 = vadd.f32 %v4326, %v4813
      %v4815 = vpop.f32.mrb[0].mxu0
      %4816 = vmatprep.mubr.bf16.mxu0 0
      %4817 = vmatmul.mubr.bf16.gmra.mrb[0].mxu0 %v4292
      %v4818 = vpop.f32.mrb[0].mxu0
      %v4819 = vadd.f32 %v4326, %v4818
      %v4820 = vpop.f32.mrb[0].mxu0
      %v4821 = vpop.f32.mrb[0].mxu0
      %v4822 = vadd.f32 %v4326, %v4821
      %v4823 = vpop.f32.mrb[0].mxu0
      %4824 = vmatprep.mubr.bf16.mxu0 0
      %4825 = vmatmul.mubr.bf16.gmra.mrb[0].mxu0 %v4293
      %v4826 = vpop.f32.mrb[0].mxu0
      %v4827 = vadd.f32 %v4326, %v4826
      %v4828 = vpop.f32.mrb[0].mxu0
      %v4829 = vpop.f32.mrb[0].mxu0
      %v4830 = vadd.f32 %v4326, %v4829
      %v4831 = vpop.f32.mrb[0].mxu0
      %4832 = vmatprep.mubr.bf16.mxu0 0
      %4833 = vmatmul.mubr.bf16.gmra.mrb[0].mxu0 %v4294
      %v4834 = vpop.f32.mrb[0].mxu0
      %v4835 = vadd.f32 %v4326, %v4834
      %v4836 = vpop.f32.mrb[0].mxu0
      %v4837 = vpop.f32.mrb[0].mxu0
      %v4838 = vadd.f32 %v4326, %v4837
      %v4839 = vpop.f32.mrb[0].mxu0
      %4840 = vmatprep.mubr.bf16.mxu0 0
      %4841 = vmatmul.mubr.bf16.gmra.mrb[0].mxu0 %v4295
      %v4842 = vpop.f32.mrb[0].mxu0
      %v4843 = vadd.f32 %v4326, %v4842
      %v4844 = vpop.f32.mrb[0].mxu0
      %v4845 = vpop.f32.mrb[0].mxu0
      %v4846 = vadd.f32 %v4326, %v4845
      %v4847 = vpop.f32.mrb[0].mxu0
      %4848 = vmatprep.mubr.bf16.mxu0 0
      %4849 = vmatmul.mubr.bf16.gmra.mrb[0].mxu0 %v4296
      %v4850 = vpop.f32.mrb[0].mxu0
      %v4851 = vadd.f32 %v4326, %v4850
      %v4852 = vpop.f32.mrb[0].mxu0
      %v4853 = vpop.f32.mrb[0].mxu0
      %v4854 = vadd.f32 %v4326, %v4853
      %v4855 = vpop.f32.mrb[0].mxu0
      %4856 = vmatprep.mubr.bf16.mxu0 0
      %4857 = vmatmul.mubr.bf16.gmra.mrb[0].mxu0 %v4297
      %v4858 = vpop.f32.mrb[0].mxu0
      %v4859 = vadd.f32 %v4326, %v4858
      %v4860 = vpop.f32.mrb[0].mxu0
      %v4861 = vpop.f32.mrb[0].mxu0
      %v4862 = vadd.f32 %v4326, %v4861
      %v4863 = vpop.f32.mrb[0].mxu0
      %4864 = vmatprep.mubr.bf16.mxu0 0
      %4865 = vmatmul.mubr.bf16.gmra.mrb[0].mxu0 %v4298
      %v4866 = vpop.f32.mrb[0].mxu0
      %v4867 = vadd.f32 %v4326, %v4866
      %v4868 = vpop.f32.mrb[0].mxu0
      %v4869 = vpop.f32.mrb[0].mxu0
      %v4870 = vadd.f32 %v4326, %v4869
      %v4871 = vpop.f32.mrb[0].mxu0
      %4872 = vmatprep.mubr.bf16.mxu0 0
      %4873 = vmatmul.mubr.bf16.gmra.mrb[0].mxu0 %v4299
      %v4874 = vpop.f32.mrb[0].mxu0
      %v4875 = vadd.f32 %v4326, %v4874
      %v4876 = vpop.f32.mrb[0].mxu0
      %v4877 = vpop.f32.mrb[0].mxu0
      %v4878 = vadd.f32 %v4326, %v4877
      %v4879 = vpop.f32.mrb[0].mxu0
      %4880 = vmatprep.mubr.bf16.mxu0 0
      %4881 = vmatmul.mubr.bf16.gmra.mrb[0].mxu0 %v4300
      %v4882 = vpop.f32.mrb[0].mxu0
      %v4883 = vadd.f32 %v4326, %v4882
      %v4884 = vpop.f32.mrb[0].mxu0
      %v4885 = vpop.f32.mrb[0].mxu0
      %v4886 = vadd.f32 %v4326, %v4885
      %v4887 = vpop.f32.mrb[0].mxu0
      %4888 = vmatprep.mubr.bf16.mxu0 0
      %4889 = vmatmul.mubr.bf16.gmra.mrb[0].mxu0 %v4301
      %v4890 = vpop.f32.mrb[0].mxu0
      %v4891 = vadd.f32 %v4326, %v4890
      %v4892 = vpop.f32.mrb[0].mxu0
      %v4893 = vpop.f32.mrb[0].mxu0
      %v4894 = vadd.f32 %v4326, %v4893
      %v4895 = vpop.f32.mrb[0].mxu0
      %4896 = vmatprep.mubr.bf16.mxu0 0
      %4897 = vmatmul.mubr.bf16.gmra.mrb[0].mxu0 %v4302
      %v4898 = vpop.f32.mrb[0].mxu0
      %v4899 = vadd.f32 %v4326, %v4898
      %v4900 = vpop.f32.mrb[0].mxu0
      %v4901 = vpop.f32.mrb[0].mxu0
      %v4902 = vadd.f32 %v4326, %v4901
      %v4903 = vpop.f32.mrb[0].mxu0
      %4904 = vmatprep.mubr.bf16.mxu0 0
      %4905 = vmatmul.mubr.bf16.gmra.mrb[0].mxu0 %v4303
      %v4906 = vpop.f32.mrb[0].mxu0
      %v4907 = vadd.f32 %v4326, %v4906
      %v4908 = vpop.f32.mrb[0].mxu0
      %v4909 = vpop.f32.mrb[0].mxu0
      %v4910 = vadd.f32 %v4326, %v4909
      %v4911 = vpop.f32.mrb[0].mxu0
      %4912 = vmatprep.mubr.bf16.mxu0 0
      %4913 = vmatmul.mubr.bf16.gmra.mrb[0].mxu0 %v4304
      %v4914 = vpop.f32.mrb[0].mxu0
      %v4915 = vadd.f32 %v4326, %v4914
      %v4916 = vpop.f32.mrb[0].mxu0
      %v4917 = vpop.f32.mrb[0].mxu0
      %v4918 = vadd.f32 %v4326, %v4917
      %v4919 = vpop.f32.mrb[0].mxu0
      %4920 = vdwg.mxu0
      %v4921 = vmax.f32 %v4411, 0.0
      %v4922 = vmax.f32 %v4414, 0.0
      %v4923 = vmax.f32 %v4419, 0.0
      %v4924 = vmax.f32 %v4422, 0.0
      %v4925 = vmax.f32 %v4427, 0.0
      %v4926 = vmax.f32 %v4430, 0.0
      %v4927 = vmax.f32 %v4435, 0.0
      %v4928 = vmax.f32 %v4438, 0.0
      %v4929 = vmax.f32 %v4443, 0.0
      %v4930 = vmax.f32 %v4446, 0.0
      %v4931 = vmax.f32 %v4451, 0.0
      %v4932 = vmax.f32 %v4454, 0.0
      %v4933 = vmax.f32 %v4459, 0.0
      %v4934 = vmax.f32 %v4462, 0.0
      %v4935 = vmax.f32 %v4467, 0.0
      %v4936 = vmax.f32 %v4470, 0.0
      %v4937 = vmax.f32 %v4475, 0.0
      %v4938 = vmax.f32 %v4478, 0.0
      %v4939 = vmax.f32 %v4483, 0.0
      %v4940 = vmax.f32 %v4486, 0.0
      %v4941 = vmax.f32 %v4491, 0.0
      %v4942 = vmax.f32 %v4494, 0.0
      %v4943 = vmax.f32 %v4499, 0.0
      %v4944 = vmax.f32 %v4502, 0.0
      %v4945 = vmax.f32 %v4507, 0.0
      %v4946 = vmax.f32 %v4510, 0.0
      %v4947 = vmax.f32 %v4515, 0.0
      %v4948 = vmax.f32 %v4518, 0.0
      %v4949 = vmax.f32 %v4523, 0.0
      %v4950 = vmax.f32 %v4526, 0.0
      %v4951 = vmax.f32 %v4531, 0.0
      %v4952 = vmax.f32 %v4534, 0.0
      %v4953 = vmax.f32 %v4539, 0.0
      %v4954 = vmax.f32 %v4542, 0.0
      %v4955 = vmax.f32 %v4547, 0.0
      %v4956 = vmax.f32 %v4550, 0.0
      %v4957 = vmax.f32 %v4555, 0.0
      %v4958 = vmax.f32 %v4558, 0.0
      %v4959 = vmax.f32 %v4563, 0.0
      %v4960 = vmax.f32 %v4566, 0.0
      %v4961 = vmax.f32 %v4571, 0.0
      %v4962 = vmax.f32 %v4574, 0.0
      %v4963 = vmax.f32 %v4579, 0.0
      %v4964 = vmax.f32 %v4582, 0.0
      %v4965 = vmax.f32 %v4587, 0.0
      %v4966 = vmax.f32 %v4590, 0.0
      %v4967 = vmax.f32 %v4595, 0.0
      %v4968 = vmax.f32 %v4598, 0.0
      %v4969 = vmax.f32 %v4603, 0.0
      %v4970 = vmax.f32 %v4606, 0.0
      %v4971 = vmax.f32 %v4611, 0.0
      %v4972 = vmax.f32 %v4614, 0.0
      %v4973 = vmax.f32 %v4619, 0.0
      %v4974 = vmax.f32 %v4622, 0.0
      %v4975 = vmax.f32 %v4627, 0.0
      %v4976 = vmax.f32 %v4630, 0.0
      %v4977 = vmax.f32 %v4635, 0.0
      %v4978 = vmax.f32 %v4638, 0.0
      %v4979 = vmax.f32 %v4643, 0.0
      %v4980 = vmax.f32 %v4646, 0.0
      %v4981 = vmax.f32 %v4651, 0.0
      %v4982 = vmax.f32 %v4654, 0.0
      %v4983 = vmax.f32 %v4659, 0.0
      %v4984 = vmax.f32 %v4662, 0.0
      %v4985 = vmax.f32 %v4667, 0.0
      %v4986 = vmax.f32 %v4670, 0.0
      %v4987 = vmax.f32 %v4675, 0.0
      %v4988 = vmax.f32 %v4678, 0.0
      %v4989 = vmax.f32 %v4683, 0.0
      %v4990 = vmax.f32 %v4686, 0.0
      %v4991 = vmax.f32 %v4691, 0.0
      %v4992 = vmax.f32 %v4694, 0.0
      %v4993 = vmax.f32 %v4699, 0.0
      %v4994 = vmax.f32 %v4702, 0.0
      %v4995 = vmax.f32 %v4707, 0.0
      %v4996 = vmax.f32 %v4710, 0.0
      %v4997 = vmax.f32 %v4715, 0.0
      %v4998 = vmax.f32 %v4718, 0.0
      %v4999 = vmax.f32 %v4723, 0.0
      %v5000 = vmax.f32 %v4726, 0.0
      %v5001 = vmax.f32 %v4731, 0.0
      %v5002 = vmax.f32 %v4734, 0.0
      %v5003 = vmax.f32 %v4739, 0.0
      %v5004 = vmax.f32 %v4742, 0.0
      %v5005 = vmax.f32 %v4747, 0.0
      %v5006 = vmax.f32 %v4750, 0.0
      %v5007 = vmax.f32 %v4755, 0.0
      %v5008 = vmax.f32 %v4758, 0.0
      %v5009 = vmax.f32 %v4763, 0.0
      %v5010 = vmax.f32 %v4766, 0.0
      %v5011 = vmax.f32 %v4771, 0.0
      %v5012 = vmax.f32 %v4774, 0.0
      %v5013 = vmax.f32 %v4779, 0.0
      %v5014 = vmax.f32 %v4782, 0.0
      %v5015 = vmax.f32 %v4787, 0.0
      %v5016 = vmax.f32 %v4790, 0.0
      %v5017 = vmax.f32 %v4795, 0.0
      %v5018 = vmax.f32 %v4798, 0.0
      %v5019 = vmax.f32 %v4803, 0.0
      %v5020 = vmax.f32 %v4806, 0.0
      %v5021 = vmax.f32 %v4811, 0.0
      %v5022 = vmax.f32 %v4814, 0.0
      %v5023 = vmax.f32 %v4819, 0.0
      %v5024 = vmax.f32 %v4822, 0.0
      %v5025 = vmax.f32 %v4827, 0.0
      %v5026 = vmax.f32 %v4830, 0.0
      %v5027 = vmax.f32 %v4835, 0.0
      %v5028 = vmax.f32 %v4838, 0.0
      %v5029 = vmax.f32 %v4843, 0.0
      %v5030 = vmax.f32 %v4846, 0.0
      %v5031 = vmax.f32 %v4851, 0.0
      %v5032 = vmax.f32 %v4854, 0.0
      %v5033 = vmax.f32 %v4859, 0.0
      %v5034 = vmax.f32 %v4862, 0.0
      %v5035 = vmax.f32 %v4867, 0.0
      %v5036 = vmax.f32 %v4870, 0.0
      %v5037 = vmax.f32 %v4875, 0.0
      %v5038 = vmax.f32 %v4878, 0.0
      %v5039 = vmax.f32 %v4883, 0.0
      %v5040 = vmax.f32 %v4886, 0.0
      %v5041 = vmax.f32 %v4891, 0.0
      %v5042 = vmax.f32 %v4894, 0.0
      %v5043 = vmax.f32 %v4899, 0.0
      %v5044 = vmax.f32 %v4902, 0.0
      %v5045 = vmax.f32 %v4907, 0.0
      %v5046 = vmax.f32 %v4910, 0.0
      %v5047 = vmax.f32 %v4915, 0.0
      %v5048 = vmax.f32 %v4918, 0.0
      %v5049 = vmax.f32 %v4921, %v4925
      %v5050 = vmax.f32 %v4922, %v4926
      %v5051 = vmax.f32 %v4923, %v4927
      %v5052 = vmax.f32 %v4924, %v4928
      %v5053 = vmax.f32 %v4937, %v4941
      %v5054 = vmax.f32 %v4938, %v4942
      %v5055 = vmax.f32 %v4939, %v4943
      %v5056 = vmax.f32 %v4940, %v4944
      %v5057 = vmax.f32 %v4953, %v4957
      %v5058 = vmax.f32 %v4954, %v4958
      %v5059 = vmax.f32 %v4955, %v4959
      %v5060 = vmax.f32 %v4956, %v4960
      %v5061 = vmax.f32 %v4969, %v4973
      %v5062 = vmax.f32 %v4970, %v4974
      %v5063 = vmax.f32 %v4971, %v4975
      %v5064 = vmax.f32 %v4972, %v4976
      %v5065 = vmax.f32 %v4985, %v4989
      %v5066 = vmax.f32 %v4986, %v4990
      %v5067 = vmax.f32 %v4987, %v4991
      %v5068 = vmax.f32 %v4988, %v4992
      %v5069 = vmax.f32 %v5001, %v5005
      %v5070 = vmax.f32 %v5002, %v5006
      %v5071 = vmax.f32 %v5003, %v5007
      %v5072 = vmax.f32 %v5004, %v5008
      %v5073 = vmax.f32 %v5017, %v5021
      %v5074 = vmax.f32 %v5018, %v5022
      %v5075 = vmax.f32 %v5019, %v5023
      %v5076 = vmax.f32 %v5020, %v5024
      %v5077 = vmax.f32 %v5033, %v5037
      %v5078 = vmax.f32 %v5034, %v5038
      %v5079 = vmax.f32 %v5035, %v5039
      %v5080 = vmax.f32 %v5036, %v5040
      %v5081 = vmax.f32 %v4929, %v4933
      %v5082 = vmax.f32 %v4930, %v4934
      %v5083 = vmax.f32 %v4931, %v4935
      %v5084 = vmax.f32 %v4932, %v4936
      %v5085 = vmax.f32 %v4945, %v4949
      %v5086 = vmax.f32 %v4946, %v4950
      %v5087 = vmax.f32 %v4947, %v4951
      %v5088 = vmax.f32 %v4948, %v4952
      %v5089 = vmax.f32 %v4961, %v4965
      %v5090 = vmax.f32 %v4962, %v4966
      %v5091 = vmax.f32 %v4963, %v4967
      %v5092 = vmax.f32 %v4964, %v4968
      %v5093 = vmax.f32 %v4977, %v4981
      %v5094 = vmax.f32 %v4978, %v4982
      %v5095 = vmax.f32 %v4979, %v4983
      %v5096 = vmax.f32 %v4980, %v4984
      %v5097 = vmax.f32 %v4993, %v4997
      %v5098 = vmax.f32 %v4994, %v4998
      %v5099 = vmax.f32 %v4995, %v4999
      %v5100 = vmax.f32 %v4996, %v5000
      %v5101 = vmax.f32 %v5009, %v5013
      %v5102 = vmax.f32 %v5010, %v5014
      %v5103 = vmax.f32 %v5011, %v5015
      %v5104 = vmax.f32 %v5012, %v5016
      %v5105 = vmax.f32 %v5025, %v5029
      %v5106 = vmax.f32 %v5026, %v5030
      %v5107 = vmax.f32 %v5027, %v5031
      %v5108 = vmax.f32 %v5028, %v5032
      %v5109 = vmax.f32 %v5041, %v5045
      %v5110 = vmax.f32 %v5042, %v5046
      %v5111 = vmax.f32 %v5043, %v5047
      %v5112 = vmax.f32 %v5044, %v5048
      %v5113 = vmax.f32 %v5049, %v5081
      %v5114 = vmax.f32 %v5050, %v5082
      %v5115 = vmax.f32 %v5051, %v5083
      %v5116 = vmax.f32 %v5052, %v5084
      %v5117 = vmax.f32 %v5053, %v5085
      %v5118 = vmax.f32 %v5054, %v5086
      %v5119 = vmax.f32 %v5055, %v5087
      %v5120 = vmax.f32 %v5056, %v5088
      %v5121 = vmax.f32 %v5057, %v5089
      %v5122 = vmax.f32 %v5058, %v5090
      %v5123 = vmax.f32 %v5059, %v5091
      %v5124 = vmax.f32 %v5060, %v5092
      %v5125 = vmax.f32 %v5061, %v5093
      %v5126 = vmax.f32 %v5062, %v5094
      %v5127 = vmax.f32 %v5063, %v5095
      %v5128 = vmax.f32 %v5064, %v5096
      %v5129 = vmax.f32 %v5065, %v5097
      %v5130 = vmax.f32 %v5066, %v5098
      %v5131 = vmax.f32 %v5067, %v5099
      %v5132 = vmax.f32 %v5068, %v5100
      %v5133 = vmax.f32 %v5069, %v5101
      %v5134 = vmax.f32 %v5070, %v5102
      %v5135 = vmax.f32 %v5071, %v5103
      %v5136 = vmax.f32 %v5072, %v5104
      %v5137 = vmax.f32 %v5073, %v5105
      %v5138 = vmax.f32 %v5074, %v5106
      %v5139 = vmax.f32 %v5075, %v5107
      %v5140 = vmax.f32 %v5076, %v5108
      %v5141 = vmax.f32 %v5077, %v5109
      %v5142 = vmax.f32 %v5078, %v5110
      %v5143 = vmax.f32 %v5079, %v5111
      %v5144 = vmax.f32 %v5080, %v5112
      %v5145 = vld [vmem:[%s6] sm:$0xff]
      %v5146 = vld [vmem:[%s6 + $0x8] sm:$0xff]
      %v5147 = vld [vmem:[%s6 + $0x10] sm:$0xff]
      %v5148 = vld [vmem:[%s6 + $0x18] sm:$0xff]
      %v5149 = vld [vmem:[%s6 + $0x20] sm:$0xff]
      %v5150 = vld [vmem:[%s6 + $0x28] sm:$0xff]
      %v5151 = vld [vmem:[%s6 + $0x30] sm:$0xff]
      %v5152 = vld [vmem:[%s6 + $0x38] sm:$0xff]
      %v5153 = vmul.f32 %v5113, %v5145
      %v5154 = vmul.f32 %v5114, %v5146
      %v5155 = vmul.f32 %v5115, %v5147
      %v5156 = vmul.f32 %v5116, %v5148
      %v5157 = vmul.f32 %v5117, %v5145
      %v5158 = vmul.f32 %v5118, %v5146
      %v5159 = vmul.f32 %v5119, %v5147
      %v5160 = vmul.f32 %v5120, %v5148
      %v5161 = vmul.f32 %v5121, %v5145
      %v5162 = vmul.f32 %v5122, %v5146
      %v5163 = vmul.f32 %v5123, %v5147
      %v5164 = vmul.f32 %v5124, %v5148
      %v5165 = vmul.f32 %v5125, %v5145
      %v5166 = vmul.f32 %v5126, %v5146
      %v5167 = vmul.f32 %v5127, %v5147
      %v5168 = vmul.f32 %v5128, %v5148
      %v5169 = vmul.f32 %v5129, %v5145
      %v5170 = vmul.f32 %v5130, %v5146
      %v5171 = vmul.f32 %v5131, %v5147
      %v5172 = vmul.f32 %v5132, %v5148
      %v5173 = vmul.f32 %v5133, %v5145
      %v5174 = vmul.f32 %v5134, %v5146
      %v5175 = vmul.f32 %v5135, %v5147
      %v5176 = vmul.f32 %v5136, %v5148
      %v5177 = vmul.f32 %v5137, %v5145
      %v5178 = vmul.f32 %v5138, %v5146
      %v5179 = vmul.f32 %v5139, %v5147
      %v5180 = vmul.f32 %v5140, %v5148
      %v5181 = vmul.f32 %v5141, %v5145
      %v5182 = vmul.f32 %v5142, %v5146
      %v5183 = vmul.f32 %v5143, %v5147
      %v5184 = vmul.f32 %v5144, %v5148
      %vm5185 = vcmask 523264
      %v5186 = vsel %vm5185, %v5153, 0.0
      %5187 = vadd.xlane.f32.xlu0 %v5186
      %v5188 = vpop.xlane.xlu0 %5187
      %v5189 = vsel %vm5185, %v5154, 0.0
      %5190 = vadd.xlane.f32.xlu0 %v5189
      %v5191 = vpop.xlane.xlu0 %5190
      %v5192 = vsel %vm5185, %v5155, 0.0
      %5193 = vadd.xlane.f32.xlu0 %v5192
      %v5194 = vpop.xlane.xlu0 %5193
      %v5195 = vsel %vm5185, %v5156, 0.0
      %5196 = vadd.xlane.f32.xlu0 %v5195
      %v5197 = vpop.xlane.xlu0 %5196
      %v5198 = vsel %vm5185, %v5157, 0.0
      %5199 = vadd.xlane.f32.xlu0 %v5198
      %v5200 = vpop.xlane.xlu0 %5199
      %v5201 = vsel %vm5185, %v5158, 0.0
      %5202 = vadd.xlane.f32.xlu0 %v5201
      %v5203 = vpop.xlane.xlu0 %5202
      %v5204 = vsel %vm5185, %v5159, 0.0
      %5205 = vadd.xlane.f32.xlu0 %v5204
      %v5206 = vpop.xlane.xlu0 %5205
      %v5207 = vsel %vm5185, %v5160, 0.0
      %5208 = vadd.xlane.f32.xlu0 %v5207
      %v5209 = vpop.xlane.xlu0 %5208
      %v5210 = vsel %vm5185, %v5161, 0.0
      %5211 = vadd.xlane.f32.xlu0 %v5210
      %v5212 = vpop.xlane.xlu0 %5211
      %v5213 = vsel %vm5185, %v5162, 0.0
      %5214 = vadd.xlane.f32.xlu0 %v5213
      %v5215 = vpop.xlane.xlu0 %5214
      %v5216 = vsel %vm5185, %v5163, 0.0
      %5217 = vadd.xlane.f32.xlu0 %v5216
      %v5218 = vpop.xlane.xlu0 %5217
      %v5219 = vsel %vm5185, %v5164, 0.0
      %5220 = vadd.xlane.f32.xlu0 %v5219
      %v5221 = vpop.xlane.xlu0 %5220
      %v5222 = vsel %vm5185, %v5165, 0.0
      %5223 = vadd.xlane.f32.xlu0 %v5222
      %v5224 = vpop.xlane.xlu0 %5223
      %v5225 = vsel %vm5185, %v5166, 0.0
      %5226 = vadd.xlane.f32.xlu0 %v5225
      %v5227 = vpop.xlane.xlu0 %5226
      %v5228 = vsel %vm5185, %v5167, 0.0
      %5229 = vadd.xlane.f32.xlu0 %v5228
      %v5230 = vpop.xlane.xlu0 %5229
      %v5231 = vsel %vm5185, %v5168, 0.0
      %5232 = vadd.xlane.f32.xlu0 %v5231
      %v5233 = vpop.xlane.xlu0 %5232
      %v5234 = vsel %vm5185, %v5169, 0.0
      %5235 = vadd.xlane.f32.xlu0 %v5234
      %v5236 = vpop.xlane.xlu0 %5235
      %v5237 = vsel %vm5185, %v5170, 0.0
      %5238 = vadd.xlane.f32.xlu0 %v5237
      %v5239 = vpop.xlane.xlu0 %5238
      %v5240 = vsel %vm5185, %v5171, 0.0
      %5241 = vadd.xlane.f32.xlu0 %v5240
      %v5242 = vpop.xlane.xlu0 %5241
      %v5243 = vsel %vm5185, %v5172, 0.0
      %5244 = vadd.xlane.f32.xlu0 %v5243
      %v5245 = vpop.xlane.xlu0 %5244
      %v5246 = vsel %vm5185, %v5173, 0.0
      %5247 = vadd.xlane.f32.xlu0 %v5246
      %v5248 = vpop.xlane.xlu0 %5247
      %v5249 = vsel %vm5185, %v5174, 0.0
      %5250 = vadd.xlane.f32.xlu0 %v5249
      %v5251 = vpop.xlane.xlu0 %5250
      %v5252 = vsel %vm5185, %v5175, 0.0
      %5253 = vadd.xlane.f32.xlu0 %v5252
      %v5254 = vpop.xlane.xlu0 %5253
      %v5255 = vsel %vm5185, %v5176, 0.0
      %5256 = vadd.xlane.f32.xlu0 %v5255
      %v5257 = vpop.xlane.xlu0 %5256
      %v5258 = vsel %vm5185, %v5177, 0.0
      %5259 = vadd.xlane.f32.xlu0 %v5258
      %v5260 = vpop.xlane.xlu0 %5259
      %v5261 = vsel %vm5185, %v5178, 0.0
      %5262 = vadd.xlane.f32.xlu0 %v5261
      %v5263 = vpop.xlane.xlu0 %5262
      %v5264 = vsel %vm5185, %v5179, 0.0
      %5265 = vadd.xlane.f32.xlu0 %v5264
      %v5266 = vpop.xlane.xlu0 %5265
      %v5267 = vsel %vm5185, %v5180, 0.0
      %5268 = vadd.xlane.f32.xlu0 %v5267
      %v5269 = vpop.xlane.xlu0 %5268
      %v5270 = vsel %vm5185, %v5181, 0.0
      %5271 = vadd.xlane.f32.xlu0 %v5270
      %v5272 = vpop.xlane.xlu0 %5271
      %v5273 = vsel %vm5185, %v5182, 0.0
      %5274 = vadd.xlane.f32.xlu0 %v5273
      %v5275 = vpop.xlane.xlu0 %5274
      %v5276 = vsel %vm5185, %v5183, 0.0
      %5277 = vadd.xlane.f32.xlu0 %v5276
      %v5278 = vpop.xlane.xlu0 %5277
      %v5279 = vsel %vm5185, %v5184, 0.0
      %5280 = vadd.xlane.f32.xlu0 %v5279
      %v5281 = vpop.xlane.xlu0 %5280
      %v5314 = vlaneseq
      %v5315 = vand.u32 %v5314, 127
      %v5316 = vlaneseq
      %v5317 = vshrl.u32 %v5316, 7
      %v5318 = vsub.s32 %v5315, %v5317
      %v5319 = vrot.slane %v5188, %v5318
      %v5320 = vadd.s32 %v5315, 4294967288
      %v5321 = vlaneseq
      %v5322 = vshrl.u32 %v5321, 7
      %v5323 = vsub.s32 %v5320, %v5322
      %v5324 = vrot.slane %v5191, %v5323
      %vm5325 = vcmask 130112
      %v5326 = vsel %vm5325, %v5324, %v5319
      %v5327 = vadd.s32 %v5315, 4294967280
      %v5328 = vlaneseq
      %v5329 = vshrl.u32 %v5328, 7
      %v5330 = vsub.s32 %v5327, %v5329
      %v5331 = vrot.slane %v5194, %v5330
      %vm5332 = vcmask 195712
      %v5333 = vsel %vm5332, %v5331, %v5326
      %v5334 = vadd.s32 %v5315, 4294967272
      %v5335 = vlaneseq
      %v5336 = vshrl.u32 %v5335, 7
      %v5337 = vsub.s32 %v5334, %v5336
      %v5338 = vrot.slane %v5197, %v5337
      %vm5339 = vcmask 261312
      %v5340 = vsel %vm5339, %v5338, %v5333
      %v5341 = vlaneseq
      %v5342 = vshrl.u32 %v5341, 7
      %v5343 = vsub.s32 %v5315, %v5342
      %v5344 = vrot.slane %v5200, %v5343
      %v5345 = vlaneseq
      %v5346 = vshrl.u32 %v5345, 7
      %v5347 = vsub.s32 %v5320, %v5346
      %v5348 = vrot.slane %v5203, %v5347
      %v5349 = vsel %vm5325, %v5348, %v5344
      %v5350 = vlaneseq
      %v5351 = vshrl.u32 %v5350, 7
      %v5352 = vsub.s32 %v5327, %v5351
      %v5353 = vrot.slane %v5206, %v5352
      %v5354 = vsel %vm5332, %v5353, %v5349
      %v5355 = vlaneseq
      %v5356 = vshrl.u32 %v5355, 7
      %v5357 = vsub.s32 %v5334, %v5356
      %v5358 = vrot.slane %v5209, %v5357
      %v5359 = vsel %vm5339, %v5358, %v5354
      %v5360 = vlaneseq
      %v5361 = vshrl.u32 %v5360, 7
      %v5362 = vsub.s32 %v5315, %v5361
      %v5363 = vrot.slane %v5212, %v5362
      %v5364 = vlaneseq
      %v5365 = vshrl.u32 %v5364, 7
      %v5366 = vsub.s32 %v5320, %v5365
      %v5367 = vrot.slane %v5215, %v5366
      %v5368 = vsel %vm5325, %v5367, %v5363
      %v5369 = vlaneseq
      %v5370 = vshrl.u32 %v5369, 7
      %v5371 = vsub.s32 %v5327, %v5370
      %v5372 = vrot.slane %v5218, %v5371
      %v5373 = vsel %vm5332, %v5372, %v5368
      %v5374 = vlaneseq
      %v5375 = vshrl.u32 %v5374, 7
      %v5376 = vsub.s32 %v5334, %v5375
      %v5377 = vrot.slane %v5221, %v5376
      %v5378 = vsel %vm5339, %v5377, %v5373
      %v5379 = vlaneseq
      %v5380 = vshrl.u32 %v5379, 7
      %v5381 = vsub.s32 %v5315, %v5380
      %v5382 = vrot.slane %v5224, %v5381
      %v5383 = vlaneseq
      %v5384 = vshrl.u32 %v5383, 7
      %v5385 = vsub.s32 %v5320, %v5384
      %v5386 = vrot.slane %v5227, %v5385
      %v5387 = vsel %vm5325, %v5386, %v5382
      %v5388 = vlaneseq
      %v5389 = vshrl.u32 %v5388, 7
      %v5390 = vsub.s32 %v5327, %v5389
      %v5391 = vrot.slane %v5230, %v5390
      %v5392 = vsel %vm5332, %v5391, %v5387
      %v5393 = vlaneseq
      %v5394 = vshrl.u32 %v5393, 7
      %v5395 = vsub.s32 %v5334, %v5394
      %v5396 = vrot.slane %v5233, %v5395
      %v5397 = vsel %vm5339, %v5396, %v5392
      %v5398 = vlaneseq
      %v5399 = vshrl.u32 %v5398, 7
      %v5400 = vsub.s32 %v5315, %v5399
      %v5401 = vrot.slane %v5236, %v5400
      %v5402 = vlaneseq
      %v5403 = vshrl.u32 %v5402, 7
      %v5404 = vsub.s32 %v5320, %v5403
      %v5405 = vrot.slane %v5239, %v5404
      %v5406 = vsel %vm5325, %v5405, %v5401
      %v5407 = vlaneseq
      %v5408 = vshrl.u32 %v5407, 7
      %v5409 = vsub.s32 %v5327, %v5408
      %v5410 = vrot.slane %v5242, %v5409
      %v5411 = vsel %vm5332, %v5410, %v5406
      %v5412 = vlaneseq
      %v5413 = vshrl.u32 %v5412, 7
      %v5414 = vsub.s32 %v5334, %v5413
      %v5415 = vrot.slane %v5245, %v5414
      %v5416 = vsel %vm5339, %v5415, %v5411
      %v5417 = vlaneseq
      %v5418 = vshrl.u32 %v5417, 7
      %v5419 = vsub.s32 %v5315, %v5418
      %v5420 = vrot.slane %v5248, %v5419
      %v5421 = vlaneseq
      %v5422 = vshrl.u32 %v5421, 7
      %v5423 = vsub.s32 %v5320, %v5422
      %v5424 = vrot.slane %v5251, %v5423
      %v5425 = vsel %vm5325, %v5424, %v5420
      %v5426 = vlaneseq
      %v5427 = vshrl.u32 %v5426, 7
      %v5428 = vsub.s32 %v5327, %v5427
      %v5429 = vrot.slane %v5254, %v5428
      %v5430 = vsel %vm5332, %v5429, %v5425
      %v5431 = vlaneseq
      %v5432 = vshrl.u32 %v5431, 7
      %v5433 = vsub.s32 %v5334, %v5432
      %v5434 = vrot.slane %v5257, %v5433
      %v5435 = vsel %vm5339, %v5434, %v5430
      %v5436 = vlaneseq
      %v5437 = vshrl.u32 %v5436, 7
      %v5438 = vsub.s32 %v5315, %v5437
      %v5439 = vrot.slane %v5260, %v5438
      %v5440 = vlaneseq
      %v5441 = vshrl.u32 %v5440, 7
      %v5442 = vsub.s32 %v5320, %v5441
      %v5443 = vrot.slane %v5263, %v5442
      %v5444 = vsel %vm5325, %v5443, %v5439
      %v5445 = vlaneseq
      %v5446 = vshrl.u32 %v5445, 7
      %v5447 = vsub.s32 %v5327, %v5446
      %v5448 = vrot.slane %v5266, %v5447
      %v5449 = vsel %vm5332, %v5448, %v5444
      %v5450 = vlaneseq
      %v5451 = vshrl.u32 %v5450, 7
      %v5452 = vsub.s32 %v5334, %v5451
      %v5453 = vrot.slane %v5269, %v5452
      %v5454 = vsel %vm5339, %v5453, %v5449
      %v5455 = vlaneseq
      %v5456 = vshrl.u32 %v5455, 7
      %v5457 = vsub.s32 %v5315, %v5456
      %v5458 = vrot.slane %v5272, %v5457
      %v5459 = vlaneseq
      %v5460 = vshrl.u32 %v5459, 7
      %v5461 = vsub.s32 %v5320, %v5460
      %v5462 = vrot.slane %v5275, %v5461
      %v5463 = vsel %vm5325, %v5462, %v5458
      %v5464 = vlaneseq
      %v5465 = vshrl.u32 %v5464, 7
      %v5466 = vsub.s32 %v5327, %v5465
      %v5467 = vrot.slane %v5278, %v5466
      %v5468 = vsel %vm5332, %v5467, %v5463
      %v5469 = vlaneseq
      %v5470 = vshrl.u32 %v5469, 7
      %v5471 = vsub.s32 %v5334, %v5470
      %v5472 = vrot.slane %v5281, %v5471
      %v5473 = vsel %vm5339, %v5472, %v5468
      %vm5474 = vcmask 1041409
      %v5475 = vsel %vm5474, %v5359, %v5340
      %vm5476 = vcmask 1042434
      %v5477 = vsel %vm5476, %v5378, %v5475
      %vm5478 = vcmask 1043459
      %v5479 = vsel %vm5478, %v5397, %v5477
      %vm5480 = vcmask 1044484
      %v5481 = vsel %vm5480, %v5416, %v5479
      %vm5482 = vcmask 1045509
      %v5483 = vsel %vm5482, %v5435, %v5481
      %vm5484 = vcmask 1046534
      %v5485 = vsel %vm5484, %v5454, %v5483
      %vm5486 = vcmask 1047559
      %v5487 = vsel %vm5486, %v5473, %v5485
      %vm5489 = vcmask 261120
      %v5490 = vsel %vm5489, %v5487, 0.0
      %5491 = vadd.xlane.f32.xlu0 %v5490
      %v5492 = vpop.xlane.xlu0 %5491
      %v5493 = vmul.f32 %v5113, %v5149
      %v5494 = vmul.f32 %v5114, %v5150
      %v5495 = vmul.f32 %v5115, %v5151
      %v5496 = vmul.f32 %v5116, %v5152
      %v5497 = vmul.f32 %v5117, %v5149
      %v5498 = vmul.f32 %v5118, %v5150
      %v5499 = vmul.f32 %v5119, %v5151
      %v5500 = vmul.f32 %v5120, %v5152
      %v5501 = vmul.f32 %v5121, %v5149
      %v5502 = vmul.f32 %v5122, %v5150
      %v5503 = vmul.f32 %v5123, %v5151
      %v5504 = vmul.f32 %v5124, %v5152
      %v5505 = vmul.f32 %v5125, %v5149
      %v5506 = vmul.f32 %v5126, %v5150
      %v5507 = vmul.f32 %v5127, %v5151
      %v5508 = vmul.f32 %v5128, %v5152
      %v5509 = vmul.f32 %v5129, %v5149
      %v5510 = vmul.f32 %v5130, %v5150
      %v5511 = vmul.f32 %v5131, %v5151
      %v5512 = vmul.f32 %v5132, %v5152
      %v5513 = vmul.f32 %v5133, %v5149
      %v5514 = vmul.f32 %v5134, %v5150
      %v5515 = vmul.f32 %v5135, %v5151
      %v5516 = vmul.f32 %v5136, %v5152
      %v5517 = vmul.f32 %v5137, %v5149
      %v5518 = vmul.f32 %v5138, %v5150
      %v5519 = vmul.f32 %v5139, %v5151
      %v5520 = vmul.f32 %v5140, %v5152
      %v5521 = vmul.f32 %v5141, %v5149
      %v5522 = vmul.f32 %v5142, %v5150
      %v5523 = vmul.f32 %v5143, %v5151
      %v5524 = vmul.f32 %v5144, %v5152
      %v5525 = vsel %vm5185, %v5493, 0.0
      %5526 = vadd.xlane.f32.xlu0 %v5525
      %v5527 = vpop.xlane.xlu0 %5526
      %v5528 = vsel %vm5185, %v5494, 0.0
      %5529 = vadd.xlane.f32.xlu0 %v5528
      %v5530 = vpop.xlane.xlu0 %5529
      %v5531 = vsel %vm5185, %v5495, 0.0
      %5532 = vadd.xlane.f32.xlu0 %v5531
      %v5533 = vpop.xlane.xlu0 %5532
      %v5534 = vsel %vm5185, %v5496, 0.0
      %5535 = vadd.xlane.f32.xlu0 %v5534
      %v5536 = vpop.xlane.xlu0 %5535
      %v5537 = vsel %vm5185, %v5497, 0.0
      %5538 = vadd.xlane.f32.xlu0 %v5537
      %v5539 = vpop.xlane.xlu0 %5538
      %v5540 = vsel %vm5185, %v5498, 0.0
      %5541 = vadd.xlane.f32.xlu0 %v5540
      %v5542 = vpop.xlane.xlu0 %5541
      %v5543 = vsel %vm5185, %v5499, 0.0
      %5544 = vadd.xlane.f32.xlu0 %v5543
      %v5545 = vpop.xlane.xlu0 %5544
      %v5546 = vsel %vm5185, %v5500, 0.0
      %5547 = vadd.xlane.f32.xlu0 %v5546
      %v5548 = vpop.xlane.xlu0 %5547
      %v5549 = vsel %vm5185, %v5501, 0.0
      %5550 = vadd.xlane.f32.xlu0 %v5549
      %v5551 = vpop.xlane.xlu0 %5550
      %v5552 = vsel %vm5185, %v5502, 0.0
      %5553 = vadd.xlane.f32.xlu0 %v5552
      %v5554 = vpop.xlane.xlu0 %5553
      %v5555 = vsel %vm5185, %v5503, 0.0
      %5556 = vadd.xlane.f32.xlu0 %v5555
      %v5557 = vpop.xlane.xlu0 %5556
      %v5558 = vsel %vm5185, %v5504, 0.0
      %5559 = vadd.xlane.f32.xlu0 %v5558
      %v5560 = vpop.xlane.xlu0 %5559
      %v5561 = vsel %vm5185, %v5505, 0.0
      %5562 = vadd.xlane.f32.xlu0 %v5561
      %v5563 = vpop.xlane.xlu0 %5562
      %v5564 = vsel %vm5185, %v5506, 0.0
      %5565 = vadd.xlane.f32.xlu0 %v5564
      %v5566 = vpop.xlane.xlu0 %5565
      %v5567 = vsel %vm5185, %v5507, 0.0
      %5568 = vadd.xlane.f32.xlu0 %v5567
      %v5569 = vpop.xlane.xlu0 %5568
      %v5570 = vsel %vm5185, %v5508, 0.0
      %5571 = vadd.xlane.f32.xlu0 %v5570
      %v5572 = vpop.xlane.xlu0 %5571
      %v5573 = vsel %vm5185, %v5509, 0.0
      %5574 = vadd.xlane.f32.xlu0 %v5573
      %v5575 = vpop.xlane.xlu0 %5574
      %v5576 = vsel %vm5185, %v5510, 0.0
      %5577 = vadd.xlane.f32.xlu0 %v5576
      %v5578 = vpop.xlane.xlu0 %5577
      %v5579 = vsel %vm5185, %v5511, 0.0
      %5580 = vadd.xlane.f32.xlu0 %v5579
      %v5581 = vpop.xlane.xlu0 %5580
      %v5582 = vsel %vm5185, %v5512, 0.0
      %5583 = vadd.xlane.f32.xlu0 %v5582
      %v5584 = vpop.xlane.xlu0 %5583
      %v5585 = vsel %vm5185, %v5513, 0.0
      %5586 = vadd.xlane.f32.xlu0 %v5585
      %v5587 = vpop.xlane.xlu0 %5586
      %v5588 = vsel %vm5185, %v5514, 0.0
      %5589 = vadd.xlane.f32.xlu0 %v5588
      %v5590 = vpop.xlane.xlu0 %5589
      %v5591 = vsel %vm5185, %v5515, 0.0
      %5592 = vadd.xlane.f32.xlu0 %v5591
      %v5593 = vpop.xlane.xlu0 %5592
      %v5594 = vsel %vm5185, %v5516, 0.0
      %5595 = vadd.xlane.f32.xlu0 %v5594
      %v5596 = vpop.xlane.xlu0 %5595
      %v5597 = vsel %vm5185, %v5517, 0.0
      %5598 = vadd.xlane.f32.xlu0 %v5597
      %v5599 = vpop.xlane.xlu0 %5598
      %v5600 = vsel %vm5185, %v5518, 0.0
      %5601 = vadd.xlane.f32.xlu0 %v5600
      %v5602 = vpop.xlane.xlu0 %5601
      %v5603 = vsel %vm5185, %v5519, 0.0
      %5604 = vadd.xlane.f32.xlu0 %v5603
      %v5605 = vpop.xlane.xlu0 %5604
      %v5606 = vsel %vm5185, %v5520, 0.0
      %5607 = vadd.xlane.f32.xlu0 %v5606
      %v5608 = vpop.xlane.xlu0 %5607
      %v5609 = vsel %vm5185, %v5521, 0.0
      %5610 = vadd.xlane.f32.xlu0 %v5609
      %v5611 = vpop.xlane.xlu0 %5610
      %v5612 = vsel %vm5185, %v5522, 0.0
      %5613 = vadd.xlane.f32.xlu0 %v5612
      %v5614 = vpop.xlane.xlu0 %5613
      %v5615 = vsel %vm5185, %v5523, 0.0
      %5616 = vadd.xlane.f32.xlu0 %v5615
      %v5617 = vpop.xlane.xlu0 %5616
      %v5618 = vsel %vm5185, %v5524, 0.0
      %5619 = vadd.xlane.f32.xlu0 %v5618
      %v5620 = vpop.xlane.xlu0 %5619
      %v5653 = vlaneseq
      %v5654 = vshrl.u32 %v5653, 7
      %v5655 = vsub.s32 %v5315, %v5654
      %v5656 = vrot.slane %v5527, %v5655
      %v5657 = vlaneseq
      %v5658 = vshrl.u32 %v5657, 7
      %v5659 = vsub.s32 %v5320, %v5658
      %v5660 = vrot.slane %v5530, %v5659
      %v5661 = vsel %vm5325, %v5660, %v5656
      %v5662 = vlaneseq
      %v5663 = vshrl.u32 %v5662, 7
      %v5664 = vsub.s32 %v5327, %v5663
      %v5665 = vrot.slane %v5533, %v5664
      %v5666 = vsel %vm5332, %v5665, %v5661
      %v5667 = vlaneseq
      %v5668 = vshrl.u32 %v5667, 7
      %v5669 = vsub.s32 %v5334, %v5668
      %v5670 = vrot.slane %v5536, %v5669
      %v5671 = vsel %vm5339, %v5670, %v5666
      %v5672 = vlaneseq
      %v5673 = vshrl.u32 %v5672, 7
      %v5674 = vsub.s32 %v5315, %v5673
      %v5675 = vrot.slane %v5539, %v5674
      %v5676 = vlaneseq
      %v5677 = vshrl.u32 %v5676, 7
      %v5678 = vsub.s32 %v5320, %v5677
      %v5679 = vrot.slane %v5542, %v5678
      %v5680 = vsel %vm5325, %v5679, %v5675
      %v5681 = vlaneseq
      %v5682 = vshrl.u32 %v5681, 7
      %v5683 = vsub.s32 %v5327, %v5682
      %v5684 = vrot.slane %v5545, %v5683
      %v5685 = vsel %vm5332, %v5684, %v5680
      %v5686 = vlaneseq
      %v5687 = vshrl.u32 %v5686, 7
      %v5688 = vsub.s32 %v5334, %v5687
      %v5689 = vrot.slane %v5548, %v5688
      %v5690 = vsel %vm5339, %v5689, %v5685
      %v5691 = vlaneseq
      %v5692 = vshrl.u32 %v5691, 7
      %v5693 = vsub.s32 %v5315, %v5692
      %v5694 = vrot.slane %v5551, %v5693
      %v5695 = vlaneseq
      %v5696 = vshrl.u32 %v5695, 7
      %v5697 = vsub.s32 %v5320, %v5696
      %v5698 = vrot.slane %v5554, %v5697
      %v5699 = vsel %vm5325, %v5698, %v5694
      %v5700 = vlaneseq
      %v5701 = vshrl.u32 %v5700, 7
      %v5702 = vsub.s32 %v5327, %v5701
      %v5703 = vrot.slane %v5557, %v5702
      %v5704 = vsel %vm5332, %v5703, %v5699
      %v5705 = vlaneseq
      %v5706 = vshrl.u32 %v5705, 7
      %v5707 = vsub.s32 %v5334, %v5706
      %v5708 = vrot.slane %v5560, %v5707
      %v5709 = vsel %vm5339, %v5708, %v5704
      %v5710 = vlaneseq
      %v5711 = vshrl.u32 %v5710, 7
      %v5712 = vsub.s32 %v5315, %v5711
      %v5713 = vrot.slane %v5563, %v5712
      %v5714 = vlaneseq
      %v5715 = vshrl.u32 %v5714, 7
      %v5716 = vsub.s32 %v5320, %v5715
      %v5717 = vrot.slane %v5566, %v5716
      %v5718 = vsel %vm5325, %v5717, %v5713
      %v5719 = vlaneseq
      %v5720 = vshrl.u32 %v5719, 7
      %v5721 = vsub.s32 %v5327, %v5720
      %v5722 = vrot.slane %v5569, %v5721
      %v5723 = vsel %vm5332, %v5722, %v5718
      %v5724 = vlaneseq
      %v5725 = vshrl.u32 %v5724, 7
      %v5726 = vsub.s32 %v5334, %v5725
      %v5727 = vrot.slane %v5572, %v5726
      %v5728 = vsel %vm5339, %v5727, %v5723
      %v5729 = vlaneseq
      %v5730 = vshrl.u32 %v5729, 7
      %v5731 = vsub.s32 %v5315, %v5730
      %v5732 = vrot.slane %v5575, %v5731
      %v5733 = vlaneseq
      %v5734 = vshrl.u32 %v5733, 7
      %v5735 = vsub.s32 %v5320, %v5734
      %v5736 = vrot.slane %v5578, %v5735
      %v5737 = vsel %vm5325, %v5736, %v5732
      %v5738 = vlaneseq
      %v5739 = vshrl.u32 %v5738, 7
      %v5740 = vsub.s32 %v5327, %v5739
      %v5741 = vrot.slane %v5581, %v5740
      %v5742 = vsel %vm5332, %v5741, %v5737
      %v5743 = vlaneseq
      %v5744 = vshrl.u32 %v5743, 7
      %v5745 = vsub.s32 %v5334, %v5744
      %v5746 = vrot.slane %v5584, %v5745
      %v5747 = vsel %vm5339, %v5746, %v5742
      %v5748 = vlaneseq
      %v5749 = vshrl.u32 %v5748, 7
      %v5750 = vsub.s32 %v5315, %v5749
      %v5751 = vrot.slane %v5587, %v5750
      %v5752 = vlaneseq
      %v5753 = vshrl.u32 %v5752, 7
      %v5754 = vsub.s32 %v5320, %v5753
      %v5755 = vrot.slane %v5590, %v5754
      %v5756 = vsel %vm5325, %v5755, %v5751
      %v5757 = vlaneseq
      %v5758 = vshrl.u32 %v5757, 7
      %v5759 = vsub.s32 %v5327, %v5758
      %v5760 = vrot.slane %v5593, %v5759
      %v5761 = vsel %vm5332, %v5760, %v5756
      %v5762 = vlaneseq
      %v5763 = vshrl.u32 %v5762, 7
      %v5764 = vsub.s32 %v5334, %v5763
      %v5765 = vrot.slane %v5596, %v5764
      %v5766 = vsel %vm5339, %v5765, %v5761
      %v5767 = vlaneseq
      %v5768 = vshrl.u32 %v5767, 7
      %v5769 = vsub.s32 %v5315, %v5768
      %v5770 = vrot.slane %v5599, %v5769
      %v5771 = vlaneseq
      %v5772 = vshrl.u32 %v5771, 7
      %v5773 = vsub.s32 %v5320, %v5772
      %v5774 = vrot.slane %v5602, %v5773
      %v5775 = vsel %vm5325, %v5774, %v5770
      %v5776 = vlaneseq
      %v5777 = vshrl.u32 %v5776, 7
      %v5778 = vsub.s32 %v5327, %v5777
      %v5779 = vrot.slane %v5605, %v5778
      %v5780 = vsel %vm5332, %v5779, %v5775
      %v5781 = vlaneseq
      %v5782 = vshrl.u32 %v5781, 7
      %v5783 = vsub.s32 %v5334, %v5782
      %v5784 = vrot.slane %v5608, %v5783
      %v5785 = vsel %vm5339, %v5784, %v5780
      %v5786 = vlaneseq
      %v5787 = vshrl.u32 %v5786, 7
      %v5788 = vsub.s32 %v5315, %v5787
      %v5789 = vrot.slane %v5611, %v5788
      %v5790 = vlaneseq
      %v5791 = vshrl.u32 %v5790, 7
      %v5792 = vsub.s32 %v5320, %v5791
      %v5793 = vrot.slane %v5614, %v5792
      %v5794 = vsel %vm5325, %v5793, %v5789
      %v5795 = vlaneseq
      %v5796 = vshrl.u32 %v5795, 7
      %v5797 = vsub.s32 %v5327, %v5796
      %v5798 = vrot.slane %v5617, %v5797
      %v5799 = vsel %vm5332, %v5798, %v5794
      %v5800 = vlaneseq
      %v5801 = vshrl.u32 %v5800, 7
      %v5802 = vsub.s32 %v5334, %v5801
      %v5803 = vrot.slane %v5620, %v5802
      %v5804 = vsel %vm5339, %v5803, %v5799
      %v5805 = vsel %vm5474, %v5690, %v5671
      %v5806 = vsel %vm5476, %v5709, %v5805
      %v5807 = vsel %vm5478, %v5728, %v5806
      %v5808 = vsel %vm5480, %v5747, %v5807
      %v5809 = vsel %vm5482, %v5766, %v5808
      %v5810 = vsel %vm5484, %v5785, %v5809
      %v5811 = vsel %vm5486, %v5804, %v5810
      %v5813 = vsel %vm5489, %v5811, 0.0
      %5814 = vadd.xlane.f32.xlu0 %v5813
      %v5815 = vpop.xlane.xlu0 %5814
      %vm5816 = vcmp.eq.s32.totalorder %v5315, 0
      %vm5817 = vcmp.eq.s32.totalorder %v5315, 1
      %v5818 = vsel %vm5817, %v5815, 0.0
      %v5819 = vsel %vm5816, %v5492, %v5818
      %v5820 = vld [vmem:[%s7] sm:$0x1]
      %v5822 = vlaneseq
      %v5823 = vshrl.u32 %v5822, 7
      %v5824 = vsub.s32 0, %v5823
      %v5825 = vrot.slane %v5820, %v5824
      %v5827 = vadd.f32 %v5819, %v5825
      %5828 = vst [vmem:[%s308] sm:$0xff] %v5827
      %p5829 = scmp.lt.s32.totalorder %s19, 1
      %s5830 = scalar_select %p5829, %s19, 1
      %s5831 = smul.addr %s5830, 8
      %s5832 = scalar_lea.vmem %s8, %s5831
      // Predicated region
      $region53: #{bentes_forward.1} parent=51 // pred_check
        %p5833 = pneg %p210
      $region54: #{bentes_forward.1} parent=51 // pred_check_branch
        %5835 = sbr.rel (%p5833) target = $region56
      $region55: #{bentes_forward.1} parent=51 // pred_region
        _
      $region56: #{bentes_forward.1} parent=51 // pred_fallthru
        _
    $region52: #{bentes_forward.1} parent=5 // pred_fallthru
      _
    %p5836 = scmp.le.s32.totalorder 2, %s14
    // Predicated region
    $region57: #{bentes_forward.1} parent=5 // pred_check
      %p5837 = pneg %p5836
    $region58: #{bentes_forward.1} parent=5 // pred_check_branch
      %5839 = sbr.rel (%p5837) target = $region60
    $region59: #{bentes_forward.1} parent=5 // pred_region
      %s5840 = ssub.s32 %s14, 2
      // Predicated region
      $region61: #{bentes_forward.1} parent=59 // pred_check
        %p5841 = pneg %p216
      $region62: #{bentes_forward.1} parent=59 // pred_check_branch
        %5843 = sbr.rel (%p5841) target = $region64
      $region63: #{bentes_forward.1} parent=59 // pred_region
        %p5844 = scmp.lt.s32.totalorder %s20, 1
        %s5845 = scalar_select %p5844, %s20, 1
        %s5846 = smul.addr %s5845, 8
        %s5847 = scalar_lea.vmem %s8, %s5846
      $region64: #{bentes_forward.1} parent=59 // pred_fallthru
        _
    $region60: #{bentes_forward.1} parent=5 // pred_fallthru
      _
  $region6: #{bentes_forward.1} parent=0 // loop_footer
    %s18 = sadd.s32 1, %s14
  $region7: #{bentes_forward.1} parent=0 // loop_footer_branch
    %13 = sbr.rel target = $region3
  $region8: #{bentes_forward.1} parent=0 // loop_exit
    _

</llo_original>
